<compile_context>
chip_gen: v7x
topology: tpu7x:2x2x1
jax: 0.10.0
libtpu: 0.0.40
codegen_flags: <defaults>
</compile_context>

<pallas_src>
import jax
import jax.numpy as jnp
import numpy as np
from jax import lax
from jax.experimental import pallas as pl
from jax.experimental.pallas import tpu as pltpu


# ----------------------------------------------------------------------------
# Fused kernel: one grid step == Bt batch elements, both branches end-to-end.
# ----------------------------------------------------------------------------
def _common_model_kernel(smi_x_ref, fas_x_ref, region_w_ref, bias_nf_ref,
                         conv_w3_ref, mlp_w1_ref, mlp_b1_ref, mlp_w2_ref,
                         mlp_b2_ref, out_ref):
    f32 = jnp.float32
    Bt = smi_x_ref.shape[0]
    NF = conv_w3_ref.shape[1]

    conv_w3 = conv_w3_ref[...]              # [3*NF, NF] taps [r-1 | r | r+1] on K
    conv_w_mid = conv_w3[NF:2 * NF, :]      # middle tap only (h == 1 rows)
    biases = bias_nf_ref[...]               # [3, NF]
    smi_region_b = biases[0:1, :]
    fas_region_b = biases[1:2, :]
    conv_b = biases[2:3, :]

    # Trace-time cache so iota/compare selector builds are emitted once per h.
    cache = {}

    def _boundary_masks(h):
        # [Bt*h, 1] masks zeroing the first / last row of every per-sample block.
        key = ("mask", h)
        if key not in cache:
            rows = lax.broadcasted_iota(jnp.int32, (Bt * h, 1), 0)
            up = jnp.ones((Bt * h, 1), f32)
            dn = jnp.ones((Bt * h, 1), f32)
            for b in range(Bt):
                up = up * (rows != b * h).astype(f32)
                dn = dn * (rows != b * h + (h - 1)).astype(f32)
            cache[key] = (up, dn)
        return cache[key]

    def _pool_selector(h):
        # Single 0/1 selection matrix folding the 3 pooling taps of every sample:
        #   S[k*Bt*h_out + b*h_out + j, b*h + 2*j + k] = 1 ; all-zero row == pad row.
        h_out = (h - 2) // 2 + 1
        key = ("pool", h)
        if key not in cache:
            pieces = []
            for k in range(3):
                for b in range(Bt):
                    jr = lax.broadcasted_iota(jnp.int32, (h_out, Bt * h), 0)
                    cc = lax.broadcasted_iota(jnp.int32, (h_out, Bt * h), 1)
                    hit = (cc == b * h + 2 * jr + k) & (2 * jr + k < h)
                    pieces.append(hit.astype(f32))
            cache[key] = jnp.concatenate(pieces, axis=0)    # [3*Bt*h_out, Bt*h]
        return cache[key], h_out

    def conv3(a, h):
        # padding1 ((0,0,1,1)) -> relu -> Conv2d(NF, NF, (3,1)) + bias, folded
        # into ONE MXU dot with K = 3*NF.  relu(pad(x)) == pad(relu(x)).
        a = jnp.maximum(a, 0.0)
        if h == 1:                      # both neighbours are pad rows
            return jnp.dot(a, conv_w_mid, preferred_element_type=f32) + conv_b
        n = Bt * h
        zrow = jnp.zeros((1, NF), f32)
        a_pad = jnp.concatenate([zrow, a, zrow], axis=0)    # [n+2, NF]
        a_up = a_pad[0:n, :]            # row i -> a[i-1] (0 at global top)
        a_dn = a_pad[2:n + 2, :]        # row i -> a[i+1] (0 at global bottom)
        if Bt > 1:                      # zero the per-sample block boundaries
            up_m, dn_m = _boundary_masks(h)
            a_up = a_up * up_m
            a_dn = a_dn * dn_m
        cat = jnp.concatenate([a_up, a, a_dn], axis=1)      # [n, 3*NF]
        return jnp.dot(cat, conv_w3, preferred_element_type=f32) + conv_b

    def pool(a, h):
        # padding2 ((0,0,0,1)) -> MaxPool2d((3,1), stride=2): one selector dot,
        # then a VPU max over the three tap slices.
        sel, h_out = _pool_selector(h)
        m = Bt * h_out
        r = jnp.dot(sel, a, preferred_element_type=f32)     # [3*m, NF]
        p = jnp.maximum(jnp.maximum(r[0:m, :], r[m:2 * m, :]), r[2 * m:3 * m, :])
        return p, h_out

    def branch(x_ref, region_w, region_b):
        # Region conv Conv2d(1, NF, (3, E)) as ONE dot with K = 3*E; Bt batch
        # elements are stacked along the sublane axis for the whole pyramid.
        L = x_ref.shape[1]
        hm = L - 2
        rows = []
        for b in range(Bt):
            xb = x_ref[b]                                   # [L, E]
            rows.append(jnp.concatenate(
                [xb[0:hm, :], xb[1:hm + 1, :], xb[2:hm + 2, :]], axis=1))
        cat = rows[0] if Bt == 1 else jnp.concatenate(rows, axis=0)  # [Bt*hm, 3E]
        v = jnp.dot(cat, region_w, preferred_element_type=f32) + region_b
        h = hm
        v = conv3(v, h)
        v = conv3(v, h)
        while h >= 2:                   # static heights -> unrolled at trace time
            px, h_out = pool(v, h)
            t = conv3(px, h_out)
            t = conv3(t, h_out)
            v = t + px
            h = h_out
        return v                        # [Bt, NF] (h == 1)

    smi_v = branch(smi_x_ref, region_w_ref[0], smi_region_b)
    fas_v = branch(fas_x_ref, region_w_ref[1], fas_region_b)

    # Both MLPs (Linear -> Dropout(identity) -> ReLU -> Linear) fused into two
    # block-diagonal dots; single lane-dense [Bt, 2*C] store.
    v_cat = jnp.concatenate([smi_v, fas_v], axis=1)                    # [Bt, 2*NF]
    hdn = jnp.maximum(
        jnp.dot(v_cat, mlp_w1_ref[...], preferred_element_type=f32) + mlp_b1_ref[...],
        0.0)
    out_ref[0] = (jnp.dot(hdn, mlp_w2_ref[...], preferred_element_type=f32)
                  + mlp_b2_ref[...])


def _full_spec(shape):
    zeros = (0,) * len(shape)
    return pl.BlockSpec(shape, lambda g: zeros)


def _fused_forward(smi_x, fas_x, p):
    """smi_x: [B, Ls, E], fas_x: [B, Lf, E] (already embedded) -> ([B,C], [B,C])."""
    B, Ls, E = smi_x.shape
    Bf, Lf, Ef = fas_x.shape
    assert B == Bf and E == Ef and Ls >= 3 and Lf >= 3
    NF = p["conv_w"].shape[1]
    NH = p["smi_mlp_w1"].shape[1]
    C = p["smi_mlp_w2"].shape[1]

    # Keep an even "parallel" grid axis (v7x megacore) while stacking B//G batch
    # elements per step along the sublane axis (fewer serial steps on v5e/v6e,
    # better MXU row fill).
    G = 2 if (B >= 2 and B % 2 == 0) else 1
    Bt = B // G

    # One-time weight packing (wrapper-side plumbing, not kernel work).
    region_w = jnp.stack([p["smi_region_w"].reshape(3 * E, NF),
                          p["fas_region_w"].reshape(3 * E, NF)], axis=0)
    bias_nf = jnp.concatenate(
        [p["smi_region_b"], p["fas_region_b"], p["conv_b"]], axis=0)       # [3, NF]
    conv_w3 = p["conv_w"].reshape(3 * NF, NF)
    zw1 = jnp.zeros((NF, NH), jnp.float32)
    zw2 = jnp.zeros((NH, C), jnp.float32)
    mlp_w1 = jnp.concatenate(
        [jnp.concatenate([p["smi_mlp_w1"], zw1], axis=1),
         jnp.concatenate([zw1, p["fas_mlp_w1"]], axis=1)], axis=0)         # [2NF, 2NH]
    mlp_b1 = jnp.concatenate([p["smi_mlp_b1"], p["fas_mlp_b1"]], axis=1)   # [1, 2NH]
    mlp_w2 = jnp.concatenate(
        [jnp.concatenate([p["smi_mlp_w2"], zw2], axis=1),
         jnp.concatenate([zw2, p["fas_mlp_w2"]], axis=1)], axis=0)         # [2NH, 2C]
    mlp_b2 = jnp.concatenate([p["smi_mlp_b2"], p["fas_mlp_b2"]], axis=1)   # [1, 2C]

    in_specs = (
        pl.BlockSpec((Bt, Ls, E), lambda g: (g, 0, 0)),
        pl.BlockSpec((Bt, Lf, E), lambda g: (g, 0, 0)),
        _full_spec((2, 3 * E, NF)),
        _full_spec((3, NF)),
        _full_spec((3 * NF, NF)),
        _full_spec((2 * NF, 2 * NH)),
        _full_spec((1, 2 * NH)),
        _full_spec((2 * NH, 2 * C)),
        _full_spec((1, 2 * C)),
    )
    out_spec = pl.BlockSpec((1, Bt, 2 * C), lambda g: (g, 0, 0))
    out_shape = jax.ShapeDtypeStruct((G, Bt, 2 * C), jnp.float32)

    out = pl.pallas_call(
        _common_model_kernel,
        grid=(G,),
        in_specs=in_specs,
        out_specs=out_spec,
        out_shape=out_shape,
        compiler_params=pltpu.CompilerParams(dimension_semantics=("parallel",)),
    )(smi_x, fas_x, region_w, bias_nf, conv_w3, mlp_w1, mlp_b1, mlp_w2, mlp_b2)

    out = out.reshape(B, 2 * C)
    return out[:, :C], out[:, C:]


# ----------------------------------------------------------------------------
# Model params / forward
# ----------------------------------------------------------------------------
class Config:
    num_filters = 32
    embedding_size = 32
    common_size = 32
    smi_dict_len = 64
    fas_dict_len = 25
    ds_nums = 8
    se_nums = 8


def init_params(cfg, key):
    ks = jax.random.split(key, 18)
    nrm = lambda k, shape, s=0.02: s * jax.random.normal(k, shape, jnp.float32)
    NF, E, C = cfg.num_filters, cfg.embedding_size, cfg.common_size
    NH = NF // 2
    p = {}
    p["smi_emb"] = nrm(ks[0], (cfg.smi_dict_len + 1, E), 1.0)
    p["fas_emb"] = nrm(ks[1], (cfg.fas_dict_len + 1, E), 1.0)
    # region convs: torch [NF,1,3,E] -> [3, E, NF]
    p["smi_region_w"] = nrm(ks[2], (3, E, NF))
    p["smi_region_b"] = nrm(ks[3], (1, NF))
    p["fas_region_w"] = nrm(ks[4], (3, E, NF))
    p["fas_region_b"] = nrm(ks[5], (1, NF))
    # shared conv: torch [NF,NF,3,1] -> [3, NF_in, NF_out]
    p["conv_w"] = nrm(ks[6], (3, NF, NF))
    p["conv_b"] = nrm(ks[7], (1, NF))
    # MLPs (torch Linear weight [out,in] -> stored [in,out])
    p["smi_mlp_w1"] = nrm(ks[8], (NF, NH))
    p["smi_mlp_b1"] = nrm(ks[9], (1, NH))
    p["smi_mlp_w2"] = nrm(ks[10], (NH, C))
    p["smi_mlp_b2"] = nrm(ks[11], (1, C))
    p["fas_mlp_w1"] = nrm(ks[12], (NF, NH))
    p["fas_mlp_b1"] = nrm(ks[13], (1, NH))
    p["fas_mlp_w2"] = nrm(ks[14], (NH, C))
    p["fas_mlp_b2"] = nrm(ks[15], (1, C))
    # ds_common / se_common ~ N(0, 0.01)
    p["ds_common"] = 0.01 * jax.random.normal(ks[16], (cfg.ds_nums, C), jnp.float32)
    p["se_common"] = 0.01 * jax.random.normal(ks[17], (cfg.se_nums, C), jnp.float32)
    return p


@jax.jit
def common_model_forward(params, smiles, fasta):
    # Embedding gathers stay outside the kernel; the tiny [B,L,E] slabs feed the
    # fused kernel's VMEM input directly.
    smi_x = jnp.take(params["smi_emb"], smiles, axis=0).astype(jnp.float32)
    fas_x = jnp.take(params["fas_emb"], fasta, axis=0).astype(jnp.float32)
    smile_common, fasta_common = _fused_forward(smi_x, fas_x, params)
    return smile_common, fasta_common, params["ds_common"], params["se_common"]


# ----------------------------------------------------------------------------
# Pure-JAX reference (naive per-sample) for correctness cross-checking.
# ----------------------------------------------------------------------------
def _reference_forward(p, smiles, fasta):
    hp = lax.Precision.HIGHEST

    def conv3(a, cw, cb):
        a = jnp.maximum(a, 0.0)
        nf = a.shape[1]
        z = jnp.zeros((1, nf), jnp.float32)
        up = jnp.concatenate([z, a[:-1]], axis=0)
        dn = jnp.concatenate([a[1:], z], axis=0)
        return (jnp.dot(up, cw[0], precision=hp) + jnp.dot(a, cw[1], precision=hp)
                + jnp.dot(dn, cw[2], precision=hp) + cb)

    def pool(a):
        h, nf = a.shape
        ap = jnp.concatenate([a, jnp.zeros((1, nf), jnp.float32)], axis=0)
        h_out = (h - 2) // 2 + 1
        return jnp.stack(
            [jnp.max(ap[2 * j:2 * j + 3], axis=0) for j in range(h_out)], axis=0)

    def branch(x, rw, rb, cw, cb, w1, b1, w2, b2):
        L = x.shape[0]
        hm = L - 2
        v = (jnp.dot(x[0:hm], rw[0], precision=hp)
             + jnp.dot(x[1:hm + 1], rw[1], precision=hp)
             + jnp.dot(x[2:hm + 2], rw[2], precision=hp) + rb)
        v = conv3(v, cw, cb)
        v = conv3(v, cw, cb)
        while v.shape[0] >= 2:
            px = pool(v)
            v = conv3(conv3(px, cw, cb), cw, cb) + px
        hdn = jnp.maximum(jnp.dot(v, w1, precision=hp) + b1, 0.0)
        return (jnp.dot(hdn, w2, precision=hp) + b2)[0]

    smi_x = jnp.take(p["smi_emb"], smiles, axis=0).astype(jnp.float32)
    fas_x = jnp.take(p["fas_emb"], fasta, axis=0).astype(jnp.float32)
    smi_out, fas_out = [], []
    for b in range(smiles.shape[0]):
        smi_out.append(branch(smi_x[b], p["smi_region_w"], p["smi_region_b"],
                              p["conv_w"], p["conv_b"],
                              p["smi_mlp_w1"], p["smi_mlp_b1"],
                              p["smi_mlp_w2"], p["smi_mlp_b2"]))
        fas_out.append(branch(fas_x[b], p["fas_region_w"], p["fas_region_b"],
                              p["conv_w"], p["conv_b"],
                              p["fas_mlp_w1"], p["fas_mlp_b1"],
                              p["fas_mlp_w2"], p["fas_mlp_b2"]))
    return jnp.stack(smi_out), jnp.stack(fas_out)


if __name__ == "__main__":
    cfg = Config()
    key = jax.random.PRNGKey(0)
    k_p, k_s, k_f = jax.random.split(key, 3)

    params = init_params(cfg, k_p)

    B, L_smi, L_fas = 4, 16, 20
    smiles = jax.random.randint(k_s, (B, L_smi), 0, cfg.smi_dict_len + 1, jnp.int32)
    fasta = jax.random.randint(k_f, (B, L_fas), 0, cfg.fas_dict_len + 1, jnp.int32)

    outs = common_model_forward(params, smiles, fasta)
    jax.block_until_ready(outs)
    smile_common, fasta_common, ds_common, se_common = outs

    assert smile_common.shape == (B, cfg.common_size)
    assert fasta_common.shape == (B, cfg.common_size)
    assert ds_common.shape == (cfg.ds_nums, cfg.common_size)
    assert se_common.shape == (cfg.se_nums, cfg.common_size)

    # Cross-check the fused kernel against the straightforward JAX reference.
    ref_smi, ref_fas = _reference_forward(params, smiles, fasta)
    np.testing.assert_allclose(np.asarray(smile_common), np.asarray(ref_smi),
                               rtol=1e-2, atol=2e-3)
    np.testing.assert_allclose(np.asarray(fasta_common), np.asarray(ref_fas),
                               rtol=1e-2, atol=2e-3)

    print("KERNEL_OK")
</pallas_src>

<mosaic_0001>
module attributes {stable_mosaic.version = 11 : i64} {
  func.func @_common_model_kernel(%arg0: i32, %arg1: memref<2x16x32xf32, #tpu.memory_space<vmem>>, %arg2: memref<2x20x32xf32, #tpu.memory_space<vmem>>, %arg3: memref<2x96x32xf32, #tpu.memory_space<vmem>>, %arg4: memref<3x32xf32, #tpu.memory_space<vmem>>, %arg5: memref<96x32xf32, #tpu.memory_space<vmem>>, %arg6: memref<64x32xf32, #tpu.memory_space<vmem>>, %arg7: memref<1x32xf32, #tpu.memory_space<vmem>>, %arg8: memref<32x64xf32, #tpu.memory_space<vmem>>, %arg9: memref<1x64xf32, #tpu.memory_space<vmem>>, %arg10: memref<1x2x64xf32, #tpu.memory_space<vmem>>) attributes {dimension_semantics = [#tpu.dimension_semantics<parallel>], iteration_bounds = array<i64: 2>, scalar_prefetch = 0 : i64, scratch_operands = 0 : i64, tpu.core_type = #tpu.core_type<tc>, window_params = [{transform_indices = @transform_0, window_bounds = array<i64: 2, 16, 32>}, {transform_indices = @transform_1, window_bounds = array<i64: 2, 20, 32>}, {pipeline_mode = #tpu.pipeline_mode<synchronous>, transform_indices = @transform_2, window_bounds = array<i64: 2, 96, 32>}, {pipeline_mode = #tpu.pipeline_mode<synchronous>, transform_indices = @transform_3, window_bounds = array<i64: 3, 32>}, {pipeline_mode = #tpu.pipeline_mode<synchronous>, transform_indices = @transform_4, window_bounds = array<i64: 96, 32>}, {pipeline_mode = #tpu.pipeline_mode<synchronous>, transform_indices = @transform_5, window_bounds = array<i64: 64, 32>}, {pipeline_mode = #tpu.pipeline_mode<synchronous>, transform_indices = @transform_6, window_bounds = array<i64: 1, 32>}, {pipeline_mode = #tpu.pipeline_mode<synchronous>, transform_indices = @transform_7, window_bounds = array<i64: 32, 64>}, {pipeline_mode = #tpu.pipeline_mode<synchronous>, transform_indices = @transform_8, window_bounds = array<i64: 1, 64>}, {transform_indices = @transform_9, window_bounds = array<i64: 1, 2, 64>}]} {
    %c0 = arith.constant 0 : index
    %c0_0 = arith.constant 0 : index
    %0 = vector.load %arg5[%c0, %c0_0] : memref<96x32xf32, #tpu.memory_space<vmem>>, vector<96x32xf32>
    %1 = vector.extract_strided_slice %0 {offsets = [32, 0], sizes = [32, 32], strides = [1, 1]} : vector<96x32xf32> to vector<32x32xf32>
    %c0_1 = arith.constant 0 : index
    %c0_2 = arith.constant 0 : index
    %2 = vector.load %arg4[%c0_1, %c0_2] : memref<3x32xf32, #tpu.memory_space<vmem>>, vector<3x32xf32>
    %3 = vector.extract_strided_slice %2 {offsets = [0, 0], sizes = [1, 32], strides = [1, 1]} : vector<3x32xf32> to vector<1x32xf32>
    %4 = vector.extract_strided_slice %2 {offsets = [1, 0], sizes = [1, 32], strides = [1, 1]} : vector<3x32xf32> to vector<1x32xf32>
    %5 = vector.extract_strided_slice %2 {offsets = [2, 0], sizes = [1, 32], strides = [1, 1]} : vector<3x32xf32> to vector<1x32xf32>
    %c0_3 = arith.constant 0 : index
    %c0_4 = arith.constant 0 : index
    %c0_5 = arith.constant 0 : index
    %6 = vector.load %arg3[%c0_3, %c0_4, %c0_5] : memref<2x96x32xf32, #tpu.memory_space<vmem>>, vector<1x96x32xf32>
    %7 = vector.shape_cast %6 : vector<1x96x32xf32> to vector<96x32xf32>
    %c0_6 = arith.constant 0 : index
    %c0_7 = arith.constant 0 : index
    %c0_8 = arith.constant 0 : index
    %8 = vector.load %arg1[%c0_6, %c0_7, %c0_8] : memref<2x16x32xf32, #tpu.memory_space<vmem>>, vector<1x16x32xf32>
    %9 = vector.shape_cast %8 : vector<1x16x32xf32> to vector<16x32xf32>
    %10 = vector.extract_strided_slice %9 {offsets = [0, 0], sizes = [14, 32], strides = [1, 1]} : vector<16x32xf32> to vector<14x32xf32>
    %11 = vector.extract_strided_slice %9 {offsets = [1, 0], sizes = [14, 32], strides = [1, 1]} : vector<16x32xf32> to vector<14x32xf32>
    %12 = vector.extract_strided_slice %9 {offsets = [2, 0], sizes = [14, 32], strides = [1, 1]} : vector<16x32xf32> to vector<14x32xf32>
    %13 = tpu.concatenate %10, %11, %12 in 1 : vector<14x32xf32>, vector<14x32xf32>, vector<14x32xf32> -> vector<14x96xf32>
    %c1 = arith.constant 1 : index
    %c0_9 = arith.constant 0 : index
    %c0_10 = arith.constant 0 : index
    %14 = vector.load %arg1[%c1, %c0_9, %c0_10] : memref<2x16x32xf32, #tpu.memory_space<vmem>>, vector<1x16x32xf32>
    %15 = vector.shape_cast %14 : vector<1x16x32xf32> to vector<16x32xf32>
    %16 = vector.extract_strided_slice %15 {offsets = [0, 0], sizes = [14, 32], strides = [1, 1]} : vector<16x32xf32> to vector<14x32xf32>
    %17 = vector.extract_strided_slice %15 {offsets = [1, 0], sizes = [14, 32], strides = [1, 1]} : vector<16x32xf32> to vector<14x32xf32>
    %18 = vector.extract_strided_slice %15 {offsets = [2, 0], sizes = [14, 32], strides = [1, 1]} : vector<16x32xf32> to vector<14x32xf32>
    %19 = tpu.concatenate %16, %17, %18 in 1 : vector<14x32xf32>, vector<14x32xf32>, vector<14x32xf32> -> vector<14x96xf32>
    %20 = tpu.concatenate %13, %19 in 0 : vector<14x96xf32>, vector<14x96xf32> -> vector<28x96xf32>
    %cst = arith.constant dense<0.000000e+00> : vector<28x32xf32>
    %21 = tpu.matmul %20, %7, %cst {dimension_numbers = #tpu.dot_dimension_numbers<[1], [0], [0], [1], [0, 0, 1, 1], [], []>} : vector<28x96xf32>, vector<96x32xf32>, vector<28x32xf32> -> vector<28x32xf32>
    %22 = vector.broadcast %3 : vector<1x32xf32> to vector<28x32xf32>
    %23 = arith.addf %21, %22 : vector<28x32xf32>
    %cst_11 = arith.constant 0.000000e+00 : f32
    %24 = vector.broadcast %cst_11 : f32 to vector<28x32xf32>
    %25 = arith.maximumf %23, %24 : vector<28x32xf32>
    %cst_12 = arith.constant 0.000000e+00 : f32
    %26 = vector.broadcast %cst_12 : f32 to vector<1x32xf32>
    %27 = tpu.concatenate %26, %25, %26 in 0 : vector<1x32xf32>, vector<28x32xf32>, vector<1x32xf32> -> vector<30x32xf32>
    %28 = vector.extract_strided_slice %27 {offsets = [0, 0], sizes = [28, 32], strides = [1, 1]} : vector<30x32xf32> to vector<28x32xf32>
    %29 = vector.extract_strided_slice %27 {offsets = [2, 0], sizes = [28, 32], strides = [1, 1]} : vector<30x32xf32> to vector<28x32xf32>
    %30 = tpu.iota {dimensions = array<i32: 0>} : vector<28x1xi32>
    %cst_13 = arith.constant 1.000000e+00 : f32
    %31 = vector.broadcast %cst_13 : f32 to vector<28x1xf32>
    %cst_14 = arith.constant 1.000000e+00 : f32
    %32 = vector.broadcast %cst_14 : f32 to vector<28x1xf32>
    %c0_i32 = arith.constant 0 : i32
    %33 = vector.broadcast %c0_i32 : i32 to vector<28x1xi32>
    %34 = arith.cmpi ne, %30, %33 : vector<28x1xi32>
    %35 = arith.extui %34 : vector<28x1xi1> to vector<28x1xi32>
    %36 = arith.sitofp %35 : vector<28x1xi32> to vector<28x1xf32>
    %37 = arith.mulf %31, %36 : vector<28x1xf32>
    %c13_i32 = arith.constant 13 : i32
    %38 = vector.broadcast %c13_i32 : i32 to vector<28x1xi32>
    %39 = arith.cmpi ne, %30, %38 : vector<28x1xi32>
    %40 = arith.extui %39 : vector<28x1xi1> to vector<28x1xi32>
    %41 = arith.sitofp %40 : vector<28x1xi32> to vector<28x1xf32>
    %42 = arith.mulf %32, %41 : vector<28x1xf32>
    %c14_i32 = arith.constant 14 : i32
    %43 = vector.broadcast %c14_i32 : i32 to vector<28x1xi32>
    %44 = arith.cmpi ne, %30, %43 : vector<28x1xi32>
    %45 = arith.extui %44 : vector<28x1xi1> to vector<28x1xi32>
    %46 = arith.sitofp %45 : vector<28x1xi32> to vector<28x1xf32>
    %47 = arith.mulf %37, %46 : vector<28x1xf32>
    %c27_i32 = arith.constant 27 : i32
    %48 = vector.broadcast %c27_i32 : i32 to vector<28x1xi32>
    %49 = arith.cmpi ne, %30, %48 : vector<28x1xi32>
    %50 = arith.extui %49 : vector<28x1xi1> to vector<28x1xi32>
    %51 = arith.sitofp %50 : vector<28x1xi32> to vector<28x1xf32>
    %52 = arith.mulf %42, %51 : vector<28x1xf32>
    %53 = vector.broadcast %47 : vector<28x1xf32> to vector<28x32xf32>
    %54 = arith.mulf %28, %53 : vector<28x32xf32>
    %55 = vector.broadcast %52 : vector<28x1xf32> to vector<28x32xf32>
    %56 = arith.mulf %29, %55 : vector<28x32xf32>
    %57 = tpu.concatenate %54, %25, %56 in 1 : vector<28x32xf32>, vector<28x32xf32>, vector<28x32xf32> -> vector<28x96xf32>
    %cst_15 = arith.constant dense<0.000000e+00> : vector<28x32xf32>
    %58 = tpu.matmul %57, %0, %cst_15 {dimension_numbers = #tpu.dot_dimension_numbers<[1], [0], [0], [1], [0, 0, 1, 1], [], []>} : vector<28x96xf32>, vector<96x32xf32>, vector<28x32xf32> -> vector<28x32xf32>
    %59 = vector.broadcast %5 : vector<1x32xf32> to vector<28x32xf32>
    %60 = arith.addf %58, %59 : vector<28x32xf32>
    %cst_16 = arith.constant 0.000000e+00 : f32
    %61 = vector.broadcast %cst_16 : f32 to vector<28x32xf32>
    %62 = arith.maximumf %60, %61 : vector<28x32xf32>
    %cst_17 = arith.constant 0.000000e+00 : f32
    %63 = vector.broadcast %cst_17 : f32 to vector<1x32xf32>
    %64 = tpu.concatenate %63, %62, %63 in 0 : vector<1x32xf32>, vector<28x32xf32>, vector<1x32xf32> -> vector<30x32xf32>
    %65 = vector.extract_strided_slice %64 {offsets = [0, 0], sizes = [28, 32], strides = [1, 1]} : vector<30x32xf32> to vector<28x32xf32>
    %66 = vector.extract_strided_slice %64 {offsets = [2, 0], sizes = [28, 32], strides = [1, 1]} : vector<30x32xf32> to vector<28x32xf32>
    %67 = vector.broadcast %47 : vector<28x1xf32> to vector<28x32xf32>
    %68 = arith.mulf %65, %67 : vector<28x32xf32>
    %69 = vector.broadcast %52 : vector<28x1xf32> to vector<28x32xf32>
    %70 = arith.mulf %66, %69 : vector<28x32xf32>
    %71 = tpu.concatenate %68, %62, %70 in 1 : vector<28x32xf32>, vector<28x32xf32>, vector<28x32xf32> -> vector<28x96xf32>
    %cst_18 = arith.constant dense<0.000000e+00> : vector<28x32xf32>
    %72 = tpu.matmul %71, %0, %cst_18 {dimension_numbers = #tpu.dot_dimension_numbers<[1], [0], [0], [1], [0, 0, 1, 1], [], []>} : vector<28x96xf32>, vector<96x32xf32>, vector<28x32xf32> -> vector<28x32xf32>
    %73 = vector.broadcast %5 : vector<1x32xf32> to vector<28x32xf32>
    %74 = arith.addf %72, %73 : vector<28x32xf32>
    %75 = tpu.iota {dimensions = array<i32: 0>} : vector<7x28xi32>
    %76 = tpu.iota {dimensions = array<i32: 1>} : vector<7x28xi32>
    %c2_i32 = arith.constant 2 : i32
    %77 = vector.broadcast %c2_i32 : i32 to vector<7x28xi32>
    %78 = arith.muli %77, %75 : vector<7x28xi32>
    %c0_i32_19 = arith.constant 0 : i32
    %79 = vector.broadcast %c0_i32_19 : i32 to vector<7x28xi32>
    %80 = arith.addi %79, %78 : vector<7x28xi32>
    %c0_i32_20 = arith.constant 0 : i32
    %81 = vector.broadcast %c0_i32_20 : i32 to vector<7x28xi32>
    %82 = arith.addi %80, %81 : vector<7x28xi32>
    %83 = arith.cmpi eq, %76, %82 : vector<7x28xi32>
    %c2_i32_21 = arith.constant 2 : i32
    %84 = vector.broadcast %c2_i32_21 : i32 to vector<7x28xi32>
    %85 = arith.muli %84, %75 : vector<7x28xi32>
    %c0_i32_22 = arith.constant 0 : i32
    %86 = vector.broadcast %c0_i32_22 : i32 to vector<7x28xi32>
    %87 = arith.addi %85, %86 : vector<7x28xi32>
    %c14_i32_23 = arith.constant 14 : i32
    %88 = vector.broadcast %c14_i32_23 : i32 to vector<7x28xi32>
    %89 = arith.cmpi slt, %87, %88 : vector<7x28xi32>
    %90 = arith.andi %83, %89 : vector<7x28xi1>
    %91 = arith.extui %90 : vector<7x28xi1> to vector<7x28xi32>
    %92 = arith.sitofp %91 : vector<7x28xi32> to vector<7x28xf32>
    %93 = tpu.iota {dimensions = array<i32: 0>} : vector<7x28xi32>
    %94 = tpu.iota {dimensions = array<i32: 1>} : vector<7x28xi32>
    %c2_i32_24 = arith.constant 2 : i32
    %95 = vector.broadcast %c2_i32_24 : i32 to vector<7x28xi32>
    %96 = arith.muli %95, %93 : vector<7x28xi32>
    %c14_i32_25 = arith.constant 14 : i32
    %97 = vector.broadcast %c14_i32_25 : i32 to vector<7x28xi32>
    %98 = arith.addi %97, %96 : vector<7x28xi32>
    %c0_i32_26 = arith.constant 0 : i32
    %99 = vector.broadcast %c0_i32_26 : i32 to vector<7x28xi32>
    %100 = arith.addi %98, %99 : vector<7x28xi32>
    %101 = arith.cmpi eq, %94, %100 : vector<7x28xi32>
    %c2_i32_27 = arith.constant 2 : i32
    %102 = vector.broadcast %c2_i32_27 : i32 to vector<7x28xi32>
    %103 = arith.muli %102, %93 : vector<7x28xi32>
    %c0_i32_28 = arith.constant 0 : i32
    %104 = vector.broadcast %c0_i32_28 : i32 to vector<7x28xi32>
    %105 = arith.addi %103, %104 : vector<7x28xi32>
    %c14_i32_29 = arith.constant 14 : i32
    %106 = vector.broadcast %c14_i32_29 : i32 to vector<7x28xi32>
    %107 = arith.cmpi slt, %105, %106 : vector<7x28xi32>
    %108 = arith.andi %101, %107 : vector<7x28xi1>
    %109 = arith.extui %108 : vector<7x28xi1> to vector<7x28xi32>
    %110 = arith.sitofp %109 : vector<7x28xi32> to vector<7x28xf32>
    %111 = tpu.iota {dimensions = array<i32: 0>} : vector<7x28xi32>
    %112 = tpu.iota {dimensions = array<i32: 1>} : vector<7x28xi32>
    %c2_i32_30 = arith.constant 2 : i32
    %113 = vector.broadcast %c2_i32_30 : i32 to vector<7x28xi32>
    %114 = arith.muli %113, %111 : vector<7x28xi32>
    %c0_i32_31 = arith.constant 0 : i32
    %115 = vector.broadcast %c0_i32_31 : i32 to vector<7x28xi32>
    %116 = arith.addi %115, %114 : vector<7x28xi32>
    %c1_i32 = arith.constant 1 : i32
    %117 = vector.broadcast %c1_i32 : i32 to vector<7x28xi32>
    %118 = arith.addi %116, %117 : vector<7x28xi32>
    %119 = arith.cmpi eq, %112, %118 : vector<7x28xi32>
    %c2_i32_32 = arith.constant 2 : i32
    %120 = vector.broadcast %c2_i32_32 : i32 to vector<7x28xi32>
    %121 = arith.muli %120, %111 : vector<7x28xi32>
    %c1_i32_33 = arith.constant 1 : i32
    %122 = vector.broadcast %c1_i32_33 : i32 to vector<7x28xi32>
    %123 = arith.addi %121, %122 : vector<7x28xi32>
    %c14_i32_34 = arith.constant 14 : i32
    %124 = vector.broadcast %c14_i32_34 : i32 to vector<7x28xi32>
    %125 = arith.cmpi slt, %123, %124 : vector<7x28xi32>
    %126 = arith.andi %119, %125 : vector<7x28xi1>
    %127 = arith.extui %126 : vector<7x28xi1> to vector<7x28xi32>
    %128 = arith.sitofp %127 : vector<7x28xi32> to vector<7x28xf32>
    %129 = tpu.iota {dimensions = array<i32: 0>} : vector<7x28xi32>
    %130 = tpu.iota {dimensions = array<i32: 1>} : vector<7x28xi32>
    %c2_i32_35 = arith.constant 2 : i32
    %131 = vector.broadcast %c2_i32_35 : i32 to vector<7x28xi32>
    %132 = arith.muli %131, %129 : vector<7x28xi32>
    %c14_i32_36 = arith.constant 14 : i32
    %133 = vector.broadcast %c14_i32_36 : i32 to vector<7x28xi32>
    %134 = arith.addi %133, %132 : vector<7x28xi32>
    %c1_i32_37 = arith.constant 1 : i32
    %135 = vector.broadcast %c1_i32_37 : i32 to vector<7x28xi32>
    %136 = arith.addi %134, %135 : vector<7x28xi32>
    %137 = arith.cmpi eq, %130, %136 : vector<7x28xi32>
    %c2_i32_38 = arith.constant 2 : i32
    %138 = vector.broadcast %c2_i32_38 : i32 to vector<7x28xi32>
    %139 = arith.muli %138, %129 : vector<7x28xi32>
    %c1_i32_39 = arith.constant 1 : i32
    %140 = vector.broadcast %c1_i32_39 : i32 to vector<7x28xi32>
    %141 = arith.addi %139, %140 : vector<7x28xi32>
    %c14_i32_40 = arith.constant 14 : i32
    %142 = vector.broadcast %c14_i32_40 : i32 to vector<7x28xi32>
    %143 = arith.cmpi slt, %141, %142 : vector<7x28xi32>
    %144 = arith.andi %137, %143 : vector<7x28xi1>
    %145 = arith.extui %144 : vector<7x28xi1> to vector<7x28xi32>
    %146 = arith.sitofp %145 : vector<7x28xi32> to vector<7x28xf32>
    %147 = tpu.iota {dimensions = array<i32: 0>} : vector<7x28xi32>
    %148 = tpu.iota {dimensions = array<i32: 1>} : vector<7x28xi32>
    %c2_i32_41 = arith.constant 2 : i32
    %149 = vector.broadcast %c2_i32_41 : i32 to vector<7x28xi32>
    %150 = arith.muli %149, %147 : vector<7x28xi32>
    %c0_i32_42 = arith.constant 0 : i32
    %151 = vector.broadcast %c0_i32_42 : i32 to vector<7x28xi32>
    %152 = arith.addi %151, %150 : vector<7x28xi32>
    %c2_i32_43 = arith.constant 2 : i32
    %153 = vector.broadcast %c2_i32_43 : i32 to vector<7x28xi32>
    %154 = arith.addi %152, %153 : vector<7x28xi32>
    %155 = arith.cmpi eq, %148, %154 : vector<7x28xi32>
    %c2_i32_44 = arith.constant 2 : i32
    %156 = vector.broadcast %c2_i32_44 : i32 to vector<7x28xi32>
    %157 = arith.muli %156, %147 : vector<7x28xi32>
    %c2_i32_45 = arith.constant 2 : i32
    %158 = vector.broadcast %c2_i32_45 : i32 to vector<7x28xi32>
    %159 = arith.addi %157, %158 : vector<7x28xi32>
    %c14_i32_46 = arith.constant 14 : i32
    %160 = vector.broadcast %c14_i32_46 : i32 to vector<7x28xi32>
    %161 = arith.cmpi slt, %159, %160 : vector<7x28xi32>
    %162 = arith.andi %155, %161 : vector<7x28xi1>
    %163 = arith.extui %162 : vector<7x28xi1> to vector<7x28xi32>
    %164 = arith.sitofp %163 : vector<7x28xi32> to vector<7x28xf32>
    %165 = tpu.iota {dimensions = array<i32: 0>} : vector<7x28xi32>
    %166 = tpu.iota {dimensions = array<i32: 1>} : vector<7x28xi32>
    %c2_i32_47 = arith.constant 2 : i32
    %167 = vector.broadcast %c2_i32_47 : i32 to vector<7x28xi32>
    %168 = arith.muli %167, %165 : vector<7x28xi32>
    %c14_i32_48 = arith.constant 14 : i32
    %169 = vector.broadcast %c14_i32_48 : i32 to vector<7x28xi32>
    %170 = arith.addi %169, %168 : vector<7x28xi32>
    %c2_i32_49 = arith.constant 2 : i32
    %171 = vector.broadcast %c2_i32_49 : i32 to vector<7x28xi32>
    %172 = arith.addi %170, %171 : vector<7x28xi32>
    %173 = arith.cmpi eq, %166, %172 : vector<7x28xi32>
    %c2_i32_50 = arith.constant 2 : i32
    %174 = vector.broadcast %c2_i32_50 : i32 to vector<7x28xi32>
    %175 = arith.muli %174, %165 : vector<7x28xi32>
    %c2_i32_51 = arith.constant 2 : i32
    %176 = vector.broadcast %c2_i32_51 : i32 to vector<7x28xi32>
    %177 = arith.addi %175, %176 : vector<7x28xi32>
    %c14_i32_52 = arith.constant 14 : i32
    %178 = vector.broadcast %c14_i32_52 : i32 to vector<7x28xi32>
    %179 = arith.cmpi slt, %177, %178 : vector<7x28xi32>
    %180 = arith.andi %173, %179 : vector<7x28xi1>
    %181 = arith.extui %180 : vector<7x28xi1> to vector<7x28xi32>
    %182 = arith.sitofp %181 : vector<7x28xi32> to vector<7x28xf32>
    %183 = tpu.concatenate %92, %110, %128, %146, %164, %182 in 0 : vector<7x28xf32>, vector<7x28xf32>, vector<7x28xf32>, vector<7x28xf32>, vector<7x28xf32>, vector<7x28xf32> -> vector<42x28xf32>
    %cst_53 = arith.constant dense<0.000000e+00> : vector<42x32xf32>
    %184 = tpu.matmul %183, %74, %cst_53 {dimension_numbers = #tpu.dot_dimension_numbers<[1], [0], [0], [1], [0, 0, 1, 1], [], []>} : vector<42x28xf32>, vector<28x32xf32>, vector<42x32xf32> -> vector<42x32xf32>
    %185 = vector.extract_strided_slice %184 {offsets = [0, 0], sizes = [14, 32], strides = [1, 1]} : vector<42x32xf32> to vector<14x32xf32>
    %186 = vector.extract_strided_slice %184 {offsets = [14, 0], sizes = [14, 32], strides = [1, 1]} : vector<42x32xf32> to vector<14x32xf32>
    %187 = arith.maximumf %185, %186 : vector<14x32xf32>
    %188 = vector.extract_strided_slice %184 {offsets = [28, 0], sizes = [14, 32], strides = [1, 1]} : vector<42x32xf32> to vector<14x32xf32>
    %189 = arith.maximumf %187, %188 : vector<14x32xf32>
    %cst_54 = arith.constant 0.000000e+00 : f32
    %190 = vector.broadcast %cst_54 : f32 to vector<14x32xf32>
    %191 = arith.maximumf %189, %190 : vector<14x32xf32>
    %cst_55 = arith.constant 0.000000e+00 : f32
    %192 = vector.broadcast %cst_55 : f32 to vector<1x32xf32>
    %193 = tpu.concatenate %192, %191, %192 in 0 : vector<1x32xf32>, vector<14x32xf32>, vector<1x32xf32> -> vector<16x32xf32>
    %194 = vector.extract_strided_slice %193 {offsets = [0, 0], sizes = [14, 32], strides = [1, 1]} : vector<16x32xf32> to vector<14x32xf32>
    %195 = vector.extract_strided_slice %193 {offsets = [2, 0], sizes = [14, 32], strides = [1, 1]} : vector<16x32xf32> to vector<14x32xf32>
    %196 = tpu.iota {dimensions = array<i32: 0>} : vector<14x1xi32>
    %cst_56 = arith.constant 1.000000e+00 : f32
    %197 = vector.broadcast %cst_56 : f32 to vector<14x1xf32>
    %cst_57 = arith.constant 1.000000e+00 : f32
    %198 = vector.broadcast %cst_57 : f32 to vector<14x1xf32>
    %c0_i32_58 = arith.constant 0 : i32
    %199 = vector.broadcast %c0_i32_58 : i32 to vector<14x1xi32>
    %200 = arith.cmpi ne, %196, %199 : vector<14x1xi32>
    %201 = arith.extui %200 : vector<14x1xi1> to vector<14x1xi32>
    %202 = arith.sitofp %201 : vector<14x1xi32> to vector<14x1xf32>
    %203 = arith.mulf %197, %202 : vector<14x1xf32>
    %c6_i32 = arith.constant 6 : i32
    %204 = vector.broadcast %c6_i32 : i32 to vector<14x1xi32>
    %205 = arith.cmpi ne, %196, %204 : vector<14x1xi32>
    %206 = arith.extui %205 : vector<14x1xi1> to vector<14x1xi32>
    %207 = arith.sitofp %206 : vector<14x1xi32> to vector<14x1xf32>
    %208 = arith.mulf %198, %207 : vector<14x1xf32>
    %c7_i32 = arith.constant 7 : i32
    %209 = vector.broadcast %c7_i32 : i32 to vector<14x1xi32>
    %210 = arith.cmpi ne, %196, %209 : vector<14x1xi32>
    %211 = arith.extui %210 : vector<14x1xi1> to vector<14x1xi32>
    %212 = arith.sitofp %211 : vector<14x1xi32> to vector<14x1xf32>
    %213 = arith.mulf %203, %212 : vector<14x1xf32>
    %c13_i32_59 = arith.constant 13 : i32
    %214 = vector.broadcast %c13_i32_59 : i32 to vector<14x1xi32>
    %215 = arith.cmpi ne, %196, %214 : vector<14x1xi32>
    %216 = arith.extui %215 : vector<14x1xi1> to vector<14x1xi32>
    %217 = arith.sitofp %216 : vector<14x1xi32> to vector<14x1xf32>
    %218 = arith.mulf %208, %217 : vector<14x1xf32>
    %219 = vector.broadcast %213 : vector<14x1xf32> to vector<14x32xf32>
    %220 = arith.mulf %194, %219 : vector<14x32xf32>
    %221 = vector.broadcast %218 : vector<14x1xf32> to vector<14x32xf32>
    %222 = arith.mulf %195, %221 : vector<14x32xf32>
    %223 = tpu.concatenate %220, %191, %222 in 1 : vector<14x32xf32>, vector<14x32xf32>, vector<14x32xf32> -> vector<14x96xf32>
    %cst_60 = arith.constant dense<0.000000e+00> : vector<14x32xf32>
    %224 = tpu.matmul %223, %0, %cst_60 {dimension_numbers = #tpu.dot_dimension_numbers<[1], [0], [0], [1], [0, 0, 1, 1], [], []>} : vector<14x96xf32>, vector<96x32xf32>, vector<14x32xf32> -> vector<14x32xf32>
    %225 = vector.broadcast %5 : vector<1x32xf32> to vector<14x32xf32>
    %226 = arith.addf %224, %225 : vector<14x32xf32>
    %cst_61 = arith.constant 0.000000e+00 : f32
    %227 = vector.broadcast %cst_61 : f32 to vector<14x32xf32>
    %228 = arith.maximumf %226, %227 : vector<14x32xf32>
    %cst_62 = arith.constant 0.000000e+00 : f32
    %229 = vector.broadcast %cst_62 : f32 to vector<1x32xf32>
    %230 = tpu.concatenate %229, %228, %229 in 0 : vector<1x32xf32>, vector<14x32xf32>, vector<1x32xf32> -> vector<16x32xf32>
    %231 = vector.extract_strided_slice %230 {offsets = [0, 0], sizes = [14, 32], strides = [1, 1]} : vector<16x32xf32> to vector<14x32xf32>
    %232 = vector.extract_strided_slice %230 {offsets = [2, 0], sizes = [14, 32], strides = [1, 1]} : vector<16x32xf32> to vector<14x32xf32>
    %233 = vector.broadcast %213 : vector<14x1xf32> to vector<14x32xf32>
    %234 = arith.mulf %231, %233 : vector<14x32xf32>
    %235 = vector.broadcast %218 : vector<14x1xf32> to vector<14x32xf32>
    %236 = arith.mulf %232, %235 : vector<14x32xf32>
    %237 = tpu.concatenate %234, %228, %236 in 1 : vector<14x32xf32>, vector<14x32xf32>, vector<14x32xf32> -> vector<14x96xf32>
    %cst_63 = arith.constant dense<0.000000e+00> : vector<14x32xf32>
    %238 = tpu.matmul %237, %0, %cst_63 {dimension_numbers = #tpu.dot_dimension_numbers<[1], [0], [0], [1], [0, 0, 1, 1], [], []>} : vector<14x96xf32>, vector<96x32xf32>, vector<14x32xf32> -> vector<14x32xf32>
    %239 = vector.broadcast %5 : vector<1x32xf32> to vector<14x32xf32>
    %240 = arith.addf %238, %239 : vector<14x32xf32>
    %241 = arith.addf %240, %189 : vector<14x32xf32>
    %242 = tpu.iota {dimensions = array<i32: 0>} : vector<3x14xi32>
    %243 = tpu.iota {dimensions = array<i32: 1>} : vector<3x14xi32>
    %c2_i32_64 = arith.constant 2 : i32
    %244 = vector.broadcast %c2_i32_64 : i32 to vector<3x14xi32>
    %245 = arith.muli %244, %242 : vector<3x14xi32>
    %c0_i32_65 = arith.constant 0 : i32
    %246 = vector.broadcast %c0_i32_65 : i32 to vector<3x14xi32>
    %247 = arith.addi %246, %245 : vector<3x14xi32>
    %c0_i32_66 = arith.constant 0 : i32
    %248 = vector.broadcast %c0_i32_66 : i32 to vector<3x14xi32>
    %249 = arith.addi %247, %248 : vector<3x14xi32>
    %250 = arith.cmpi eq, %243, %249 : vector<3x14xi32>
    %c2_i32_67 = arith.constant 2 : i32
    %251 = vector.broadcast %c2_i32_67 : i32 to vector<3x14xi32>
    %252 = arith.muli %251, %242 : vector<3x14xi32>
    %c0_i32_68 = arith.constant 0 : i32
    %253 = vector.broadcast %c0_i32_68 : i32 to vector<3x14xi32>
    %254 = arith.addi %252, %253 : vector<3x14xi32>
    %c7_i32_69 = arith.constant 7 : i32
    %255 = vector.broadcast %c7_i32_69 : i32 to vector<3x14xi32>
    %256 = arith.cmpi slt, %254, %255 : vector<3x14xi32>
    %257 = arith.andi %250, %256 : vector<3x14xi1>
    %258 = arith.extui %257 : vector<3x14xi1> to vector<3x14xi32>
    %259 = arith.sitofp %258 : vector<3x14xi32> to vector<3x14xf32>
    %260 = tpu.iota {dimensions = array<i32: 0>} : vector<3x14xi32>
    %261 = tpu.iota {dimensions = array<i32: 1>} : vector<3x14xi32>
    %c2_i32_70 = arith.constant 2 : i32
    %262 = vector.broadcast %c2_i32_70 : i32 to vector<3x14xi32>
    %263 = arith.muli %262, %260 : vector<3x14xi32>
    %c7_i32_71 = arith.constant 7 : i32
    %264 = vector.broadcast %c7_i32_71 : i32 to vector<3x14xi32>
    %265 = arith.addi %264, %263 : vector<3x14xi32>
    %c0_i32_72 = arith.constant 0 : i32
    %266 = vector.broadcast %c0_i32_72 : i32 to vector<3x14xi32>
    %267 = arith.addi %265, %266 : vector<3x14xi32>
    %268 = arith.cmpi eq, %261, %267 : vector<3x14xi32>
    %c2_i32_73 = arith.constant 2 : i32
    %269 = vector.broadcast %c2_i32_73 : i32 to vector<3x14xi32>
    %270 = arith.muli %269, %260 : vector<3x14xi32>
    %c0_i32_74 = arith.constant 0 : i32
    %271 = vector.broadcast %c0_i32_74 : i32 to vector<3x14xi32>
    %272 = arith.addi %270, %271 : vector<3x14xi32>
    %c7_i32_75 = arith.constant 7 : i32
    %273 = vector.broadcast %c7_i32_75 : i32 to vector<3x14xi32>
    %274 = arith.cmpi slt, %272, %273 : vector<3x14xi32>
    %275 = arith.andi %268, %274 : vector<3x14xi1>
    %276 = arith.extui %275 : vector<3x14xi1> to vector<3x14xi32>
    %277 = arith.sitofp %276 : vector<3x14xi32> to vector<3x14xf32>
    %278 = tpu.iota {dimensions = array<i32: 0>} : vector<3x14xi32>
    %279 = tpu.iota {dimensions = array<i32: 1>} : vector<3x14xi32>
    %c2_i32_76 = arith.constant 2 : i32
    %280 = vector.broadcast %c2_i32_76 : i32 to vector<3x14xi32>
    %281 = arith.muli %280, %278 : vector<3x14xi32>
    %c0_i32_77 = arith.constant 0 : i32
    %282 = vector.broadcast %c0_i32_77 : i32 to vector<3x14xi32>
    %283 = arith.addi %282, %281 : vector<3x14xi32>
    %c1_i32_78 = arith.constant 1 : i32
    %284 = vector.broadcast %c1_i32_78 : i32 to vector<3x14xi32>
    %285 = arith.addi %283, %284 : vector<3x14xi32>
    %286 = arith.cmpi eq, %279, %285 : vector<3x14xi32>
    %c2_i32_79 = arith.constant 2 : i32
    %287 = vector.broadcast %c2_i32_79 : i32 to vector<3x14xi32>
    %288 = arith.muli %287, %278 : vector<3x14xi32>
    %c1_i32_80 = arith.constant 1 : i32
    %289 = vector.broadcast %c1_i32_80 : i32 to vector<3x14xi32>
    %290 = arith.addi %288, %289 : vector<3x14xi32>
    %c7_i32_81 = arith.constant 7 : i32
    %291 = vector.broadcast %c7_i32_81 : i32 to vector<3x14xi32>
    %292 = arith.cmpi slt, %290, %291 : vector<3x14xi32>
    %293 = arith.andi %286, %292 : vector<3x14xi1>
    %294 = arith.extui %293 : vector<3x14xi1> to vector<3x14xi32>
    %295 = arith.sitofp %294 : vector<3x14xi32> to vector<3x14xf32>
    %296 = tpu.iota {dimensions = array<i32: 0>} : vector<3x14xi32>
    %297 = tpu.iota {dimensions = array<i32: 1>} : vector<3x14xi32>
    %c2_i32_82 = arith.constant 2 : i32
    %298 = vector.broadcast %c2_i32_82 : i32 to vector<3x14xi32>
    %299 = arith.muli %298, %296 : vector<3x14xi32>
    %c7_i32_83 = arith.constant 7 : i32
    %300 = vector.broadcast %c7_i32_83 : i32 to vector<3x14xi32>
    %301 = arith.addi %300, %299 : vector<3x14xi32>
    %c1_i32_84 = arith.constant 1 : i32
    %302 = vector.broadcast %c1_i32_84 : i32 to vector<3x14xi32>
    %303 = arith.addi %301, %302 : vector<3x14xi32>
    %304 = arith.cmpi eq, %297, %303 : vector<3x14xi32>
    %c2_i32_85 = arith.constant 2 : i32
    %305 = vector.broadcast %c2_i32_85 : i32 to vector<3x14xi32>
    %306 = arith.muli %305, %296 : vector<3x14xi32>
    %c1_i32_86 = arith.constant 1 : i32
    %307 = vector.broadcast %c1_i32_86 : i32 to vector<3x14xi32>
    %308 = arith.addi %306, %307 : vector<3x14xi32>
    %c7_i32_87 = arith.constant 7 : i32
    %309 = vector.broadcast %c7_i32_87 : i32 to vector<3x14xi32>
    %310 = arith.cmpi slt, %308, %309 : vector<3x14xi32>
    %311 = arith.andi %304, %310 : vector<3x14xi1>
    %312 = arith.extui %311 : vector<3x14xi1> to vector<3x14xi32>
    %313 = arith.sitofp %312 : vector<3x14xi32> to vector<3x14xf32>
    %314 = tpu.iota {dimensions = array<i32: 0>} : vector<3x14xi32>
    %315 = tpu.iota {dimensions = array<i32: 1>} : vector<3x14xi32>
    %c2_i32_88 = arith.constant 2 : i32
    %316 = vector.broadcast %c2_i32_88 : i32 to vector<3x14xi32>
    %317 = arith.muli %316, %314 : vector<3x14xi32>
    %c0_i32_89 = arith.constant 0 : i32
    %318 = vector.broadcast %c0_i32_89 : i32 to vector<3x14xi32>
    %319 = arith.addi %318, %317 : vector<3x14xi32>
    %c2_i32_90 = arith.constant 2 : i32
    %320 = vector.broadcast %c2_i32_90 : i32 to vector<3x14xi32>
    %321 = arith.addi %319, %320 : vector<3x14xi32>
    %322 = arith.cmpi eq, %315, %321 : vector<3x14xi32>
    %c2_i32_91 = arith.constant 2 : i32
    %323 = vector.broadcast %c2_i32_91 : i32 to vector<3x14xi32>
    %324 = arith.muli %323, %314 : vector<3x14xi32>
    %c2_i32_92 = arith.constant 2 : i32
    %325 = vector.broadcast %c2_i32_92 : i32 to vector<3x14xi32>
    %326 = arith.addi %324, %325 : vector<3x14xi32>
    %c7_i32_93 = arith.constant 7 : i32
    %327 = vector.broadcast %c7_i32_93 : i32 to vector<3x14xi32>
    %328 = arith.cmpi slt, %326, %327 : vector<3x14xi32>
    %329 = arith.andi %322, %328 : vector<3x14xi1>
    %330 = arith.extui %329 : vector<3x14xi1> to vector<3x14xi32>
    %331 = arith.sitofp %330 : vector<3x14xi32> to vector<3x14xf32>
    %332 = tpu.iota {dimensions = array<i32: 0>} : vector<3x14xi32>
    %333 = tpu.iota {dimensions = array<i32: 1>} : vector<3x14xi32>
    %c2_i32_94 = arith.constant 2 : i32
    %334 = vector.broadcast %c2_i32_94 : i32 to vector<3x14xi32>
    %335 = arith.muli %334, %332 : vector<3x14xi32>
    %c7_i32_95 = arith.constant 7 : i32
    %336 = vector.broadcast %c7_i32_95 : i32 to vector<3x14xi32>
    %337 = arith.addi %336, %335 : vector<3x14xi32>
    %c2_i32_96 = arith.constant 2 : i32
    %338 = vector.broadcast %c2_i32_96 : i32 to vector<3x14xi32>
    %339 = arith.addi %337, %338 : vector<3x14xi32>
    %340 = arith.cmpi eq, %333, %339 : vector<3x14xi32>
    %c2_i32_97 = arith.constant 2 : i32
    %341 = vector.broadcast %c2_i32_97 : i32 to vector<3x14xi32>
    %342 = arith.muli %341, %332 : vector<3x14xi32>
    %c2_i32_98 = arith.constant 2 : i32
    %343 = vector.broadcast %c2_i32_98 : i32 to vector<3x14xi32>
    %344 = arith.addi %342, %343 : vector<3x14xi32>
    %c7_i32_99 = arith.constant 7 : i32
    %345 = vector.broadcast %c7_i32_99 : i32 to vector<3x14xi32>
    %346 = arith.cmpi slt, %344, %345 : vector<3x14xi32>
    %347 = arith.andi %340, %346 : vector<3x14xi1>
    %348 = arith.extui %347 : vector<3x14xi1> to vector<3x14xi32>
    %349 = arith.sitofp %348 : vector<3x14xi32> to vector<3x14xf32>
    %350 = tpu.concatenate %259, %277, %295, %313, %331, %349 in 0 : vector<3x14xf32>, vector<3x14xf32>, vector<3x14xf32>, vector<3x14xf32>, vector<3x14xf32>, vector<3x14xf32> -> vector<18x14xf32>
    %cst_100 = arith.constant dense<0.000000e+00> : vector<18x32xf32>
    %351 = tpu.matmul %350, %241, %cst_100 {dimension_numbers = #tpu.dot_dimension_numbers<[1], [0], [0], [1], [0, 0, 1, 1], [], []>} : vector<18x14xf32>, vector<14x32xf32>, vector<18x32xf32> -> vector<18x32xf32>
    %352 = vector.extract_strided_slice %351 {offsets = [0, 0], sizes = [6, 32], strides = [1, 1]} : vector<18x32xf32> to vector<6x32xf32>
    %353 = vector.extract_strided_slice %351 {offsets = [6, 0], sizes = [6, 32], strides = [1, 1]} : vector<18x32xf32> to vector<6x32xf32>
    %354 = arith.maximumf %352, %353 : vector<6x32xf32>
    %355 = vector.extract_strided_slice %351 {offsets = [12, 0], sizes = [6, 32], strides = [1, 1]} : vector<18x32xf32> to vector<6x32xf32>
    %356 = arith.maximumf %354, %355 : vector<6x32xf32>
    %cst_101 = arith.constant 0.000000e+00 : f32
    %357 = vector.broadcast %cst_101 : f32 to vector<6x32xf32>
    %358 = arith.maximumf %356, %357 : vector<6x32xf32>
    %cst_102 = arith.constant 0.000000e+00 : f32
    %359 = vector.broadcast %cst_102 : f32 to vector<1x32xf32>
    %360 = tpu.concatenate %359, %358, %359 in 0 : vector<1x32xf32>, vector<6x32xf32>, vector<1x32xf32> -> vector<8x32xf32>
    %361 = vector.extract_strided_slice %360 {offsets = [0, 0], sizes = [6, 32], strides = [1, 1]} : vector<8x32xf32> to vector<6x32xf32>
    %362 = vector.extract_strided_slice %360 {offsets = [2, 0], sizes = [6, 32], strides = [1, 1]} : vector<8x32xf32> to vector<6x32xf32>
    %363 = tpu.iota {dimensions = array<i32: 0>} : vector<6x1xi32>
    %cst_103 = arith.constant 1.000000e+00 : f32
    %364 = vector.broadcast %cst_103 : f32 to vector<6x1xf32>
    %cst_104 = arith.constant 1.000000e+00 : f32
    %365 = vector.broadcast %cst_104 : f32 to vector<6x1xf32>
    %c0_i32_105 = arith.constant 0 : i32
    %366 = vector.broadcast %c0_i32_105 : i32 to vector<6x1xi32>
    %367 = arith.cmpi ne, %363, %366 : vector<6x1xi32>
    %368 = arith.extui %367 : vector<6x1xi1> to vector<6x1xi32>
    %369 = arith.sitofp %368 : vector<6x1xi32> to vector<6x1xf32>
    %370 = arith.mulf %364, %369 : vector<6x1xf32>
    %c2_i32_106 = arith.constant 2 : i32
    %371 = vector.broadcast %c2_i32_106 : i32 to vector<6x1xi32>
    %372 = arith.cmpi ne, %363, %371 : vector<6x1xi32>
    %373 = arith.extui %372 : vector<6x1xi1> to vector<6x1xi32>
    %374 = arith.sitofp %373 : vector<6x1xi32> to vector<6x1xf32>
    %375 = arith.mulf %365, %374 : vector<6x1xf32>
    %c3_i32 = arith.constant 3 : i32
    %376 = vector.broadcast %c3_i32 : i32 to vector<6x1xi32>
    %377 = arith.cmpi ne, %363, %376 : vector<6x1xi32>
    %378 = arith.extui %377 : vector<6x1xi1> to vector<6x1xi32>
    %379 = arith.sitofp %378 : vector<6x1xi32> to vector<6x1xf32>
    %380 = arith.mulf %370, %379 : vector<6x1xf32>
    %c5_i32 = arith.constant 5 : i32
    %381 = vector.broadcast %c5_i32 : i32 to vector<6x1xi32>
    %382 = arith.cmpi ne, %363, %381 : vector<6x1xi32>
    %383 = arith.extui %382 : vector<6x1xi1> to vector<6x1xi32>
    %384 = arith.sitofp %383 : vector<6x1xi32> to vector<6x1xf32>
    %385 = arith.mulf %375, %384 : vector<6x1xf32>
    %386 = vector.broadcast %380 : vector<6x1xf32> to vector<6x32xf32>
    %387 = arith.mulf %361, %386 : vector<6x32xf32>
    %388 = vector.broadcast %385 : vector<6x1xf32> to vector<6x32xf32>
    %389 = arith.mulf %362, %388 : vector<6x32xf32>
    %390 = tpu.concatenate %387, %358, %389 in 1 : vector<6x32xf32>, vector<6x32xf32>, vector<6x32xf32> -> vector<6x96xf32>
    %cst_107 = arith.constant dense<0.000000e+00> : vector<6x32xf32>
    %391 = tpu.matmul %390, %0, %cst_107 {dimension_numbers = #tpu.dot_dimension_numbers<[1], [0], [0], [1], [0, 0, 1, 1], [], []>} : vector<6x96xf32>, vector<96x32xf32>, vector<6x32xf32> -> vector<6x32xf32>
    %392 = vector.broadcast %5 : vector<1x32xf32> to vector<6x32xf32>
    %393 = arith.addf %391, %392 : vector<6x32xf32>
    %cst_108 = arith.constant 0.000000e+00 : f32
    %394 = vector.broadcast %cst_108 : f32 to vector<6x32xf32>
    %395 = arith.maximumf %393, %394 : vector<6x32xf32>
    %cst_109 = arith.constant 0.000000e+00 : f32
    %396 = vector.broadcast %cst_109 : f32 to vector<1x32xf32>
    %397 = tpu.concatenate %396, %395, %396 in 0 : vector<1x32xf32>, vector<6x32xf32>, vector<1x32xf32> -> vector<8x32xf32>
    %398 = vector.extract_strided_slice %397 {offsets = [0, 0], sizes = [6, 32], strides = [1, 1]} : vector<8x32xf32> to vector<6x32xf32>
    %399 = vector.extract_strided_slice %397 {offsets = [2, 0], sizes = [6, 32], strides = [1, 1]} : vector<8x32xf32> to vector<6x32xf32>
    %400 = vector.broadcast %380 : vector<6x1xf32> to vector<6x32xf32>
    %401 = arith.mulf %398, %400 : vector<6x32xf32>
    %402 = vector.broadcast %385 : vector<6x1xf32> to vector<6x32xf32>
    %403 = arith.mulf %399, %402 : vector<6x32xf32>
    %404 = tpu.concatenate %401, %395, %403 in 1 : vector<6x32xf32>, vector<6x32xf32>, vector<6x32xf32> -> vector<6x96xf32>
    %cst_110 = arith.constant dense<0.000000e+00> : vector<6x32xf32>
    %405 = tpu.matmul %404, %0, %cst_110 {dimension_numbers = #tpu.dot_dimension_numbers<[1], [0], [0], [1], [0, 0, 1, 1], [], []>} : vector<6x96xf32>, vector<96x32xf32>, vector<6x32xf32> -> vector<6x32xf32>
    %406 = vector.broadcast %5 : vector<1x32xf32> to vector<6x32xf32>
    %407 = arith.addf %405, %406 : vector<6x32xf32>
    %408 = arith.addf %407, %356 : vector<6x32xf32>
    %409 = tpu.iota {dimensions = array<i32: 0>} : vector<1x6xi32>
    %410 = tpu.iota {dimensions = array<i32: 1>} : vector<1x6xi32>
    %c2_i32_111 = arith.constant 2 : i32
    %411 = vector.broadcast %c2_i32_111 : i32 to vector<1x6xi32>
    %412 = arith.muli %411, %409 : vector<1x6xi32>
    %c0_i32_112 = arith.constant 0 : i32
    %413 = vector.broadcast %c0_i32_112 : i32 to vector<1x6xi32>
    %414 = arith.addi %413, %412 : vector<1x6xi32>
    %c0_i32_113 = arith.constant 0 : i32
    %415 = vector.broadcast %c0_i32_113 : i32 to vector<1x6xi32>
    %416 = arith.addi %414, %415 : vector<1x6xi32>
    %417 = arith.cmpi eq, %410, %416 : vector<1x6xi32>
    %c2_i32_114 = arith.constant 2 : i32
    %418 = vector.broadcast %c2_i32_114 : i32 to vector<1x6xi32>
    %419 = arith.muli %418, %409 : vector<1x6xi32>
    %c0_i32_115 = arith.constant 0 : i32
    %420 = vector.broadcast %c0_i32_115 : i32 to vector<1x6xi32>
    %421 = arith.addi %419, %420 : vector<1x6xi32>
    %c3_i32_116 = arith.constant 3 : i32
    %422 = vector.broadcast %c3_i32_116 : i32 to vector<1x6xi32>
    %423 = arith.cmpi slt, %421, %422 : vector<1x6xi32>
    %424 = arith.andi %417, %423 : vector<1x6xi1>
    %425 = arith.extui %424 : vector<1x6xi1> to vector<1x6xi32>
    %426 = arith.sitofp %425 : vector<1x6xi32> to vector<1x6xf32>
    %427 = tpu.iota {dimensions = array<i32: 0>} : vector<1x6xi32>
    %428 = tpu.iota {dimensions = array<i32: 1>} : vector<1x6xi32>
    %c2_i32_117 = arith.constant 2 : i32
    %429 = vector.broadcast %c2_i32_117 : i32 to vector<1x6xi32>
    %430 = arith.muli %429, %427 : vector<1x6xi32>
    %c3_i32_118 = arith.constant 3 : i32
    %431 = vector.broadcast %c3_i32_118 : i32 to vector<1x6xi32>
    %432 = arith.addi %431, %430 : vector<1x6xi32>
    %c0_i32_119 = arith.constant 0 : i32
    %433 = vector.broadcast %c0_i32_119 : i32 to vector<1x6xi32>
    %434 = arith.addi %432, %433 : vector<1x6xi32>
    %435 = arith.cmpi eq, %428, %434 : vector<1x6xi32>
    %c2_i32_120 = arith.constant 2 : i32
    %436 = vector.broadcast %c2_i32_120 : i32 to vector<1x6xi32>
    %437 = arith.muli %436, %427 : vector<1x6xi32>
    %c0_i32_121 = arith.constant 0 : i32
    %438 = vector.broadcast %c0_i32_121 : i32 to vector<1x6xi32>
    %439 = arith.addi %437, %438 : vector<1x6xi32>
    %c3_i32_122 = arith.constant 3 : i32
    %440 = vector.broadcast %c3_i32_122 : i32 to vector<1x6xi32>
    %441 = arith.cmpi slt, %439, %440 : vector<1x6xi32>
    %442 = arith.andi %435, %441 : vector<1x6xi1>
    %443 = arith.extui %442 : vector<1x6xi1> to vector<1x6xi32>
    %444 = arith.sitofp %443 : vector<1x6xi32> to vector<1x6xf32>
    %445 = tpu.iota {dimensions = array<i32: 0>} : vector<1x6xi32>
    %446 = tpu.iota {dimensions = array<i32: 1>} : vector<1x6xi32>
    %c2_i32_123 = arith.constant 2 : i32
    %447 = vector.broadcast %c2_i32_123 : i32 to vector<1x6xi32>
    %448 = arith.muli %447, %445 : vector<1x6xi32>
    %c0_i32_124 = arith.constant 0 : i32
    %449 = vector.broadcast %c0_i32_124 : i32 to vector<1x6xi32>
    %450 = arith.addi %449, %448 : vector<1x6xi32>
    %c1_i32_125 = arith.constant 1 : i32
    %451 = vector.broadcast %c1_i32_125 : i32 to vector<1x6xi32>
    %452 = arith.addi %450, %451 : vector<1x6xi32>
    %453 = arith.cmpi eq, %446, %452 : vector<1x6xi32>
    %c2_i32_126 = arith.constant 2 : i32
    %454 = vector.broadcast %c2_i32_126 : i32 to vector<1x6xi32>
    %455 = arith.muli %454, %445 : vector<1x6xi32>
    %c1_i32_127 = arith.constant 1 : i32
    %456 = vector.broadcast %c1_i32_127 : i32 to vector<1x6xi32>
    %457 = arith.addi %455, %456 : vector<1x6xi32>
    %c3_i32_128 = arith.constant 3 : i32
    %458 = vector.broadcast %c3_i32_128 : i32 to vector<1x6xi32>
    %459 = arith.cmpi slt, %457, %458 : vector<1x6xi32>
    %460 = arith.andi %453, %459 : vector<1x6xi1>
    %461 = arith.extui %460 : vector<1x6xi1> to vector<1x6xi32>
    %462 = arith.sitofp %461 : vector<1x6xi32> to vector<1x6xf32>
    %463 = tpu.iota {dimensions = array<i32: 0>} : vector<1x6xi32>
    %464 = tpu.iota {dimensions = array<i32: 1>} : vector<1x6xi32>
    %c2_i32_129 = arith.constant 2 : i32
    %465 = vector.broadcast %c2_i32_129 : i32 to vector<1x6xi32>
    %466 = arith.muli %465, %463 : vector<1x6xi32>
    %c3_i32_130 = arith.constant 3 : i32
    %467 = vector.broadcast %c3_i32_130 : i32 to vector<1x6xi32>
    %468 = arith.addi %467, %466 : vector<1x6xi32>
    %c1_i32_131 = arith.constant 1 : i32
    %469 = vector.broadcast %c1_i32_131 : i32 to vector<1x6xi32>
    %470 = arith.addi %468, %469 : vector<1x6xi32>
    %471 = arith.cmpi eq, %464, %470 : vector<1x6xi32>
    %c2_i32_132 = arith.constant 2 : i32
    %472 = vector.broadcast %c2_i32_132 : i32 to vector<1x6xi32>
    %473 = arith.muli %472, %463 : vector<1x6xi32>
    %c1_i32_133 = arith.constant 1 : i32
    %474 = vector.broadcast %c1_i32_133 : i32 to vector<1x6xi32>
    %475 = arith.addi %473, %474 : vector<1x6xi32>
    %c3_i32_134 = arith.constant 3 : i32
    %476 = vector.broadcast %c3_i32_134 : i32 to vector<1x6xi32>
    %477 = arith.cmpi slt, %475, %476 : vector<1x6xi32>
    %478 = arith.andi %471, %477 : vector<1x6xi1>
    %479 = arith.extui %478 : vector<1x6xi1> to vector<1x6xi32>
    %480 = arith.sitofp %479 : vector<1x6xi32> to vector<1x6xf32>
    %481 = tpu.iota {dimensions = array<i32: 0>} : vector<1x6xi32>
    %482 = tpu.iota {dimensions = array<i32: 1>} : vector<1x6xi32>
    %c2_i32_135 = arith.constant 2 : i32
    %483 = vector.broadcast %c2_i32_135 : i32 to vector<1x6xi32>
    %484 = arith.muli %483, %481 : vector<1x6xi32>
    %c0_i32_136 = arith.constant 0 : i32
    %485 = vector.broadcast %c0_i32_136 : i32 to vector<1x6xi32>
    %486 = arith.addi %485, %484 : vector<1x6xi32>
    %c2_i32_137 = arith.constant 2 : i32
    %487 = vector.broadcast %c2_i32_137 : i32 to vector<1x6xi32>
    %488 = arith.addi %486, %487 : vector<1x6xi32>
    %489 = arith.cmpi eq, %482, %488 : vector<1x6xi32>
    %c2_i32_138 = arith.constant 2 : i32
    %490 = vector.broadcast %c2_i32_138 : i32 to vector<1x6xi32>
    %491 = arith.muli %490, %481 : vector<1x6xi32>
    %c2_i32_139 = arith.constant 2 : i32
    %492 = vector.broadcast %c2_i32_139 : i32 to vector<1x6xi32>
    %493 = arith.addi %491, %492 : vector<1x6xi32>
    %c3_i32_140 = arith.constant 3 : i32
    %494 = vector.broadcast %c3_i32_140 : i32 to vector<1x6xi32>
    %495 = arith.cmpi slt, %493, %494 : vector<1x6xi32>
    %496 = arith.andi %489, %495 : vector<1x6xi1>
    %497 = arith.extui %496 : vector<1x6xi1> to vector<1x6xi32>
    %498 = arith.sitofp %497 : vector<1x6xi32> to vector<1x6xf32>
    %499 = tpu.iota {dimensions = array<i32: 0>} : vector<1x6xi32>
    %500 = tpu.iota {dimensions = array<i32: 1>} : vector<1x6xi32>
    %c2_i32_141 = arith.constant 2 : i32
    %501 = vector.broadcast %c2_i32_141 : i32 to vector<1x6xi32>
    %502 = arith.muli %501, %499 : vector<1x6xi32>
    %c3_i32_142 = arith.constant 3 : i32
    %503 = vector.broadcast %c3_i32_142 : i32 to vector<1x6xi32>
    %504 = arith.addi %503, %502 : vector<1x6xi32>
    %c2_i32_143 = arith.constant 2 : i32
    %505 = vector.broadcast %c2_i32_143 : i32 to vector<1x6xi32>
    %506 = arith.addi %504, %505 : vector<1x6xi32>
    %507 = arith.cmpi eq, %500, %506 : vector<1x6xi32>
    %c2_i32_144 = arith.constant 2 : i32
    %508 = vector.broadcast %c2_i32_144 : i32 to vector<1x6xi32>
    %509 = arith.muli %508, %499 : vector<1x6xi32>
    %c2_i32_145 = arith.constant 2 : i32
    %510 = vector.broadcast %c2_i32_145 : i32 to vector<1x6xi32>
    %511 = arith.addi %509, %510 : vector<1x6xi32>
    %c3_i32_146 = arith.constant 3 : i32
    %512 = vector.broadcast %c3_i32_146 : i32 to vector<1x6xi32>
    %513 = arith.cmpi slt, %511, %512 : vector<1x6xi32>
    %514 = arith.andi %507, %513 : vector<1x6xi1>
    %515 = arith.extui %514 : vector<1x6xi1> to vector<1x6xi32>
    %516 = arith.sitofp %515 : vector<1x6xi32> to vector<1x6xf32>
    %517 = tpu.concatenate %426, %444, %462, %480, %498, %516 in 0 : vector<1x6xf32>, vector<1x6xf32>, vector<1x6xf32>, vector<1x6xf32>, vector<1x6xf32>, vector<1x6xf32> -> vector<6x6xf32>
    %cst_147 = arith.constant dense<0.000000e+00> : vector<6x32xf32>
    %518 = tpu.matmul %517, %408, %cst_147 {dimension_numbers = #tpu.dot_dimension_numbers<[1], [0], [0], [1], [0, 0, 1, 1], [], []>} : vector<6x6xf32>, vector<6x32xf32>, vector<6x32xf32> -> vector<6x32xf32>
    %519 = vector.extract_strided_slice %518 {offsets = [0, 0], sizes = [2, 32], strides = [1, 1]} : vector<6x32xf32> to vector<2x32xf32>
    %520 = vector.extract_strided_slice %518 {offsets = [2, 0], sizes = [2, 32], strides = [1, 1]} : vector<6x32xf32> to vector<2x32xf32>
    %521 = arith.maximumf %519, %520 : vector<2x32xf32>
    %522 = vector.extract_strided_slice %518 {offsets = [4, 0], sizes = [2, 32], strides = [1, 1]} : vector<6x32xf32> to vector<2x32xf32>
    %523 = arith.maximumf %521, %522 : vector<2x32xf32>
    %cst_148 = arith.constant 0.000000e+00 : f32
    %524 = vector.broadcast %cst_148 : f32 to vector<2x32xf32>
    %525 = arith.maximumf %523, %524 : vector<2x32xf32>
    %cst_149 = arith.constant dense<0.000000e+00> : vector<2x32xf32>
    %526 = tpu.matmul %525, %1, %cst_149 {dimension_numbers = #tpu.dot_dimension_numbers<[1], [0], [0], [1], [0, 0, 1, 1], [], []>} : vector<2x32xf32>, vector<32x32xf32>, vector<2x32xf32> -> vector<2x32xf32>
    %527 = vector.broadcast %5 : vector<1x32xf32> to vector<2x32xf32>
    %528 = arith.addf %526, %527 : vector<2x32xf32>
    %cst_150 = arith.constant 0.000000e+00 : f32
    %529 = vector.broadcast %cst_150 : f32 to vector<2x32xf32>
    %530 = arith.maximumf %528, %529 : vector<2x32xf32>
    %cst_151 = arith.constant dense<0.000000e+00> : vector<2x32xf32>
    %531 = tpu.matmul %530, %1, %cst_151 {dimension_numbers = #tpu.dot_dimension_numbers<[1], [0], [0], [1], [0, 0, 1, 1], [], []>} : vector<2x32xf32>, vector<32x32xf32>, vector<2x32xf32> -> vector<2x32xf32>
    %532 = vector.broadcast %5 : vector<1x32xf32> to vector<2x32xf32>
    %533 = arith.addf %531, %532 : vector<2x32xf32>
    %534 = arith.addf %533, %523 : vector<2x32xf32>
    %c1_152 = arith.constant 1 : index
    %c0_153 = arith.constant 0 : index
    %c0_154 = arith.constant 0 : index
    %535 = vector.load %arg3[%c1_152, %c0_153, %c0_154] : memref<2x96x32xf32, #tpu.memory_space<vmem>>, vector<1x96x32xf32>
    %536 = vector.shape_cast %535 : vector<1x96x32xf32> to vector<96x32xf32>
    %c0_155 = arith.constant 0 : index
    %c0_156 = arith.constant 0 : index
    %c0_157 = arith.constant 0 : index
    %537 = vector.load %arg2[%c0_155, %c0_156, %c0_157] : memref<2x20x32xf32, #tpu.memory_space<vmem>>, vector<1x20x32xf32>
    %538 = vector.shape_cast %537 : vector<1x20x32xf32> to vector<20x32xf32>
    %539 = vector.extract_strided_slice %538 {offsets = [0, 0], sizes = [18, 32], strides = [1, 1]} : vector<20x32xf32> to vector<18x32xf32>
    %540 = vector.extract_strided_slice %538 {offsets = [1, 0], sizes = [18, 32], strides = [1, 1]} : vector<20x32xf32> to vector<18x32xf32>
    %541 = vector.extract_strided_slice %538 {offsets = [2, 0], sizes = [18, 32], strides = [1, 1]} : vector<20x32xf32> to vector<18x32xf32>
    %542 = tpu.concatenate %539, %540, %541 in 1 : vector<18x32xf32>, vector<18x32xf32>, vector<18x32xf32> -> vector<18x96xf32>
    %c1_158 = arith.constant 1 : index
    %c0_159 = arith.constant 0 : index
    %c0_160 = arith.constant 0 : index
    %543 = vector.load %arg2[%c1_158, %c0_159, %c0_160] : memref<2x20x32xf32, #tpu.memory_space<vmem>>, vector<1x20x32xf32>
    %544 = vector.shape_cast %543 : vector<1x20x32xf32> to vector<20x32xf32>
    %545 = vector.extract_strided_slice %544 {offsets = [0, 0], sizes = [18, 32], strides = [1, 1]} : vector<20x32xf32> to vector<18x32xf32>
    %546 = vector.extract_strided_slice %544 {offsets = [1, 0], sizes = [18, 32], strides = [1, 1]} : vector<20x32xf32> to vector<18x32xf32>
    %547 = vector.extract_strided_slice %544 {offsets = [2, 0], sizes = [18, 32], strides = [1, 1]} : vector<20x32xf32> to vector<18x32xf32>
    %548 = tpu.concatenate %545, %546, %547 in 1 : vector<18x32xf32>, vector<18x32xf32>, vector<18x32xf32> -> vector<18x96xf32>
    %549 = tpu.concatenate %542, %548 in 0 : vector<18x96xf32>, vector<18x96xf32> -> vector<36x96xf32>
    %cst_161 = arith.constant dense<0.000000e+00> : vector<36x32xf32>
    %550 = tpu.matmul %549, %536, %cst_161 {dimension_numbers = #tpu.dot_dimension_numbers<[1], [0], [0], [1], [0, 0, 1, 1], [], []>} : vector<36x96xf32>, vector<96x32xf32>, vector<36x32xf32> -> vector<36x32xf32>
    %551 = vector.broadcast %4 : vector<1x32xf32> to vector<36x32xf32>
    %552 = arith.addf %550, %551 : vector<36x32xf32>
    %cst_162 = arith.constant 0.000000e+00 : f32
    %553 = vector.broadcast %cst_162 : f32 to vector<36x32xf32>
    %554 = arith.maximumf %552, %553 : vector<36x32xf32>
    %cst_163 = arith.constant 0.000000e+00 : f32
    %555 = vector.broadcast %cst_163 : f32 to vector<1x32xf32>
    %556 = tpu.concatenate %555, %554, %555 in 0 : vector<1x32xf32>, vector<36x32xf32>, vector<1x32xf32> -> vector<38x32xf32>
    %557 = vector.extract_strided_slice %556 {offsets = [0, 0], sizes = [36, 32], strides = [1, 1]} : vector<38x32xf32> to vector<36x32xf32>
    %558 = vector.extract_strided_slice %556 {offsets = [2, 0], sizes = [36, 32], strides = [1, 1]} : vector<38x32xf32> to vector<36x32xf32>
    %559 = tpu.iota {dimensions = array<i32: 0>} : vector<36x1xi32>
    %cst_164 = arith.constant 1.000000e+00 : f32
    %560 = vector.broadcast %cst_164 : f32 to vector<36x1xf32>
    %cst_165 = arith.constant 1.000000e+00 : f32
    %561 = vector.broadcast %cst_165 : f32 to vector<36x1xf32>
    %c0_i32_166 = arith.constant 0 : i32
    %562 = vector.broadcast %c0_i32_166 : i32 to vector<36x1xi32>
    %563 = arith.cmpi ne, %559, %562 : vector<36x1xi32>
    %564 = arith.extui %563 : vector<36x1xi1> to vector<36x1xi32>
    %565 = arith.sitofp %564 : vector<36x1xi32> to vector<36x1xf32>
    %566 = arith.mulf %560, %565 : vector<36x1xf32>
    %c17_i32 = arith.constant 17 : i32
    %567 = vector.broadcast %c17_i32 : i32 to vector<36x1xi32>
    %568 = arith.cmpi ne, %559, %567 : vector<36x1xi32>
    %569 = arith.extui %568 : vector<36x1xi1> to vector<36x1xi32>
    %570 = arith.sitofp %569 : vector<36x1xi32> to vector<36x1xf32>
    %571 = arith.mulf %561, %570 : vector<36x1xf32>
    %c18_i32 = arith.constant 18 : i32
    %572 = vector.broadcast %c18_i32 : i32 to vector<36x1xi32>
    %573 = arith.cmpi ne, %559, %572 : vector<36x1xi32>
    %574 = arith.extui %573 : vector<36x1xi1> to vector<36x1xi32>
    %575 = arith.sitofp %574 : vector<36x1xi32> to vector<36x1xf32>
    %576 = arith.mulf %566, %575 : vector<36x1xf32>
    %c35_i32 = arith.constant 35 : i32
    %577 = vector.broadcast %c35_i32 : i32 to vector<36x1xi32>
    %578 = arith.cmpi ne, %559, %577 : vector<36x1xi32>
    %579 = arith.extui %578 : vector<36x1xi1> to vector<36x1xi32>
    %580 = arith.sitofp %579 : vector<36x1xi32> to vector<36x1xf32>
    %581 = arith.mulf %571, %580 : vector<36x1xf32>
    %582 = vector.broadcast %576 : vector<36x1xf32> to vector<36x32xf32>
    %583 = arith.mulf %557, %582 : vector<36x32xf32>
    %584 = vector.broadcast %581 : vector<36x1xf32> to vector<36x32xf32>
    %585 = arith.mulf %558, %584 : vector<36x32xf32>
    %586 = tpu.concatenate %583, %554, %585 in 1 : vector<36x32xf32>, vector<36x32xf32>, vector<36x32xf32> -> vector<36x96xf32>
    %cst_167 = arith.constant dense<0.000000e+00> : vector<36x32xf32>
    %587 = tpu.matmul %586, %0, %cst_167 {dimension_numbers = #tpu.dot_dimension_numbers<[1], [0], [0], [1], [0, 0, 1, 1], [], []>} : vector<36x96xf32>, vector<96x32xf32>, vector<36x32xf32> -> vector<36x32xf32>
    %588 = vector.broadcast %5 : vector<1x32xf32> to vector<36x32xf32>
    %589 = arith.addf %587, %588 : vector<36x32xf32>
    %cst_168 = arith.constant 0.000000e+00 : f32
    %590 = vector.broadcast %cst_168 : f32 to vector<36x32xf32>
    %591 = arith.maximumf %589, %590 : vector<36x32xf32>
    %cst_169 = arith.constant 0.000000e+00 : f32
    %592 = vector.broadcast %cst_169 : f32 to vector<1x32xf32>
    %593 = tpu.concatenate %592, %591, %592 in 0 : vector<1x32xf32>, vector<36x32xf32>, vector<1x32xf32> -> vector<38x32xf32>
    %594 = vector.extract_strided_slice %593 {offsets = [0, 0], sizes = [36, 32], strides = [1, 1]} : vector<38x32xf32> to vector<36x32xf32>
    %595 = vector.extract_strided_slice %593 {offsets = [2, 0], sizes = [36, 32], strides = [1, 1]} : vector<38x32xf32> to vector<36x32xf32>
    %596 = vector.broadcast %576 : vector<36x1xf32> to vector<36x32xf32>
    %597 = arith.mulf %594, %596 : vector<36x32xf32>
    %598 = vector.broadcast %581 : vector<36x1xf32> to vector<36x32xf32>
    %599 = arith.mulf %595, %598 : vector<36x32xf32>
    %600 = tpu.concatenate %597, %591, %599 in 1 : vector<36x32xf32>, vector<36x32xf32>, vector<36x32xf32> -> vector<36x96xf32>
    %cst_170 = arith.constant dense<0.000000e+00> : vector<36x32xf32>
    %601 = tpu.matmul %600, %0, %cst_170 {dimension_numbers = #tpu.dot_dimension_numbers<[1], [0], [0], [1], [0, 0, 1, 1], [], []>} : vector<36x96xf32>, vector<96x32xf32>, vector<36x32xf32> -> vector<36x32xf32>
    %602 = vector.broadcast %5 : vector<1x32xf32> to vector<36x32xf32>
    %603 = arith.addf %601, %602 : vector<36x32xf32>
    %604 = tpu.iota {dimensions = array<i32: 0>} : vector<9x36xi32>
    %605 = tpu.iota {dimensions = array<i32: 1>} : vector<9x36xi32>
    %c2_i32_171 = arith.constant 2 : i32
    %606 = vector.broadcast %c2_i32_171 : i32 to vector<9x36xi32>
    %607 = arith.muli %606, %604 : vector<9x36xi32>
    %c0_i32_172 = arith.constant 0 : i32
    %608 = vector.broadcast %c0_i32_172 : i32 to vector<9x36xi32>
    %609 = arith.addi %608, %607 : vector<9x36xi32>
    %c0_i32_173 = arith.constant 0 : i32
    %610 = vector.broadcast %c0_i32_173 : i32 to vector<9x36xi32>
    %611 = arith.addi %609, %610 : vector<9x36xi32>
    %612 = arith.cmpi eq, %605, %611 : vector<9x36xi32>
    %c2_i32_174 = arith.constant 2 : i32
    %613 = vector.broadcast %c2_i32_174 : i32 to vector<9x36xi32>
    %614 = arith.muli %613, %604 : vector<9x36xi32>
    %c0_i32_175 = arith.constant 0 : i32
    %615 = vector.broadcast %c0_i32_175 : i32 to vector<9x36xi32>
    %616 = arith.addi %614, %615 : vector<9x36xi32>
    %c18_i32_176 = arith.constant 18 : i32
    %617 = vector.broadcast %c18_i32_176 : i32 to vector<9x36xi32>
    %618 = arith.cmpi slt, %616, %617 : vector<9x36xi32>
    %619 = arith.andi %612, %618 : vector<9x36xi1>
    %620 = arith.extui %619 : vector<9x36xi1> to vector<9x36xi32>
    %621 = arith.sitofp %620 : vector<9x36xi32> to vector<9x36xf32>
    %622 = tpu.iota {dimensions = array<i32: 0>} : vector<9x36xi32>
    %623 = tpu.iota {dimensions = array<i32: 1>} : vector<9x36xi32>
    %c2_i32_177 = arith.constant 2 : i32
    %624 = vector.broadcast %c2_i32_177 : i32 to vector<9x36xi32>
    %625 = arith.muli %624, %622 : vector<9x36xi32>
    %c18_i32_178 = arith.constant 18 : i32
    %626 = vector.broadcast %c18_i32_178 : i32 to vector<9x36xi32>
    %627 = arith.addi %626, %625 : vector<9x36xi32>
    %c0_i32_179 = arith.constant 0 : i32
    %628 = vector.broadcast %c0_i32_179 : i32 to vector<9x36xi32>
    %629 = arith.addi %627, %628 : vector<9x36xi32>
    %630 = arith.cmpi eq, %623, %629 : vector<9x36xi32>
    %c2_i32_180 = arith.constant 2 : i32
    %631 = vector.broadcast %c2_i32_180 : i32 to vector<9x36xi32>
    %632 = arith.muli %631, %622 : vector<9x36xi32>
    %c0_i32_181 = arith.constant 0 : i32
    %633 = vector.broadcast %c0_i32_181 : i32 to vector<9x36xi32>
    %634 = arith.addi %632, %633 : vector<9x36xi32>
    %c18_i32_182 = arith.constant 18 : i32
    %635 = vector.broadcast %c18_i32_182 : i32 to vector<9x36xi32>
    %636 = arith.cmpi slt, %634, %635 : vector<9x36xi32>
    %637 = arith.andi %630, %636 : vector<9x36xi1>
    %638 = arith.extui %637 : vector<9x36xi1> to vector<9x36xi32>
    %639 = arith.sitofp %638 : vector<9x36xi32> to vector<9x36xf32>
    %640 = tpu.iota {dimensions = array<i32: 0>} : vector<9x36xi32>
    %641 = tpu.iota {dimensions = array<i32: 1>} : vector<9x36xi32>
    %c2_i32_183 = arith.constant 2 : i32
    %642 = vector.broadcast %c2_i32_183 : i32 to vector<9x36xi32>
    %643 = arith.muli %642, %640 : vector<9x36xi32>
    %c0_i32_184 = arith.constant 0 : i32
    %644 = vector.broadcast %c0_i32_184 : i32 to vector<9x36xi32>
    %645 = arith.addi %644, %643 : vector<9x36xi32>
    %c1_i32_185 = arith.constant 1 : i32
    %646 = vector.broadcast %c1_i32_185 : i32 to vector<9x36xi32>
    %647 = arith.addi %645, %646 : vector<9x36xi32>
    %648 = arith.cmpi eq, %641, %647 : vector<9x36xi32>
    %c2_i32_186 = arith.constant 2 : i32
    %649 = vector.broadcast %c2_i32_186 : i32 to vector<9x36xi32>
    %650 = arith.muli %649, %640 : vector<9x36xi32>
    %c1_i32_187 = arith.constant 1 : i32
    %651 = vector.broadcast %c1_i32_187 : i32 to vector<9x36xi32>
    %652 = arith.addi %650, %651 : vector<9x36xi32>
    %c18_i32_188 = arith.constant 18 : i32
    %653 = vector.broadcast %c18_i32_188 : i32 to vector<9x36xi32>
    %654 = arith.cmpi slt, %652, %653 : vector<9x36xi32>
    %655 = arith.andi %648, %654 : vector<9x36xi1>
    %656 = arith.extui %655 : vector<9x36xi1> to vector<9x36xi32>
    %657 = arith.sitofp %656 : vector<9x36xi32> to vector<9x36xf32>
    %658 = tpu.iota {dimensions = array<i32: 0>} : vector<9x36xi32>
    %659 = tpu.iota {dimensions = array<i32: 1>} : vector<9x36xi32>
    %c2_i32_189 = arith.constant 2 : i32
    %660 = vector.broadcast %c2_i32_189 : i32 to vector<9x36xi32>
    %661 = arith.muli %660, %658 : vector<9x36xi32>
    %c18_i32_190 = arith.constant 18 : i32
    %662 = vector.broadcast %c18_i32_190 : i32 to vector<9x36xi32>
    %663 = arith.addi %662, %661 : vector<9x36xi32>
    %c1_i32_191 = arith.constant 1 : i32
    %664 = vector.broadcast %c1_i32_191 : i32 to vector<9x36xi32>
    %665 = arith.addi %663, %664 : vector<9x36xi32>
    %666 = arith.cmpi eq, %659, %665 : vector<9x36xi32>
    %c2_i32_192 = arith.constant 2 : i32
    %667 = vector.broadcast %c2_i32_192 : i32 to vector<9x36xi32>
    %668 = arith.muli %667, %658 : vector<9x36xi32>
    %c1_i32_193 = arith.constant 1 : i32
    %669 = vector.broadcast %c1_i32_193 : i32 to vector<9x36xi32>
    %670 = arith.addi %668, %669 : vector<9x36xi32>
    %c18_i32_194 = arith.constant 18 : i32
    %671 = vector.broadcast %c18_i32_194 : i32 to vector<9x36xi32>
    %672 = arith.cmpi slt, %670, %671 : vector<9x36xi32>
    %673 = arith.andi %666, %672 : vector<9x36xi1>
    %674 = arith.extui %673 : vector<9x36xi1> to vector<9x36xi32>
    %675 = arith.sitofp %674 : vector<9x36xi32> to vector<9x36xf32>
    %676 = tpu.iota {dimensions = array<i32: 0>} : vector<9x36xi32>
    %677 = tpu.iota {dimensions = array<i32: 1>} : vector<9x36xi32>
    %c2_i32_195 = arith.constant 2 : i32
    %678 = vector.broadcast %c2_i32_195 : i32 to vector<9x36xi32>
    %679 = arith.muli %678, %676 : vector<9x36xi32>
    %c0_i32_196 = arith.constant 0 : i32
    %680 = vector.broadcast %c0_i32_196 : i32 to vector<9x36xi32>
    %681 = arith.addi %680, %679 : vector<9x36xi32>
    %c2_i32_197 = arith.constant 2 : i32
    %682 = vector.broadcast %c2_i32_197 : i32 to vector<9x36xi32>
    %683 = arith.addi %681, %682 : vector<9x36xi32>
    %684 = arith.cmpi eq, %677, %683 : vector<9x36xi32>
    %c2_i32_198 = arith.constant 2 : i32
    %685 = vector.broadcast %c2_i32_198 : i32 to vector<9x36xi32>
    %686 = arith.muli %685, %676 : vector<9x36xi32>
    %c2_i32_199 = arith.constant 2 : i32
    %687 = vector.broadcast %c2_i32_199 : i32 to vector<9x36xi32>
    %688 = arith.addi %686, %687 : vector<9x36xi32>
    %c18_i32_200 = arith.constant 18 : i32
    %689 = vector.broadcast %c18_i32_200 : i32 to vector<9x36xi32>
    %690 = arith.cmpi slt, %688, %689 : vector<9x36xi32>
    %691 = arith.andi %684, %690 : vector<9x36xi1>
    %692 = arith.extui %691 : vector<9x36xi1> to vector<9x36xi32>
    %693 = arith.sitofp %692 : vector<9x36xi32> to vector<9x36xf32>
    %694 = tpu.iota {dimensions = array<i32: 0>} : vector<9x36xi32>
    %695 = tpu.iota {dimensions = array<i32: 1>} : vector<9x36xi32>
    %c2_i32_201 = arith.constant 2 : i32
    %696 = vector.broadcast %c2_i32_201 : i32 to vector<9x36xi32>
    %697 = arith.muli %696, %694 : vector<9x36xi32>
    %c18_i32_202 = arith.constant 18 : i32
    %698 = vector.broadcast %c18_i32_202 : i32 to vector<9x36xi32>
    %699 = arith.addi %698, %697 : vector<9x36xi32>
    %c2_i32_203 = arith.constant 2 : i32
    %700 = vector.broadcast %c2_i32_203 : i32 to vector<9x36xi32>
    %701 = arith.addi %699, %700 : vector<9x36xi32>
    %702 = arith.cmpi eq, %695, %701 : vector<9x36xi32>
    %c2_i32_204 = arith.constant 2 : i32
    %703 = vector.broadcast %c2_i32_204 : i32 to vector<9x36xi32>
    %704 = arith.muli %703, %694 : vector<9x36xi32>
    %c2_i32_205 = arith.constant 2 : i32
    %705 = vector.broadcast %c2_i32_205 : i32 to vector<9x36xi32>
    %706 = arith.addi %704, %705 : vector<9x36xi32>
    %c18_i32_206 = arith.constant 18 : i32
    %707 = vector.broadcast %c18_i32_206 : i32 to vector<9x36xi32>
    %708 = arith.cmpi slt, %706, %707 : vector<9x36xi32>
    %709 = arith.andi %702, %708 : vector<9x36xi1>
    %710 = arith.extui %709 : vector<9x36xi1> to vector<9x36xi32>
    %711 = arith.sitofp %710 : vector<9x36xi32> to vector<9x36xf32>
    %712 = tpu.concatenate %621, %639, %657, %675, %693, %711 in 0 : vector<9x36xf32>, vector<9x36xf32>, vector<9x36xf32>, vector<9x36xf32>, vector<9x36xf32>, vector<9x36xf32> -> vector<54x36xf32>
    %cst_207 = arith.constant dense<0.000000e+00> : vector<54x32xf32>
    %713 = tpu.matmul %712, %603, %cst_207 {dimension_numbers = #tpu.dot_dimension_numbers<[1], [0], [0], [1], [0, 0, 1, 1], [], []>} : vector<54x36xf32>, vector<36x32xf32>, vector<54x32xf32> -> vector<54x32xf32>
    %714 = vector.extract_strided_slice %713 {offsets = [0, 0], sizes = [18, 32], strides = [1, 1]} : vector<54x32xf32> to vector<18x32xf32>
    %715 = vector.extract_strided_slice %713 {offsets = [18, 0], sizes = [18, 32], strides = [1, 1]} : vector<54x32xf32> to vector<18x32xf32>
    %716 = arith.maximumf %714, %715 : vector<18x32xf32>
    %717 = vector.extract_strided_slice %713 {offsets = [36, 0], sizes = [18, 32], strides = [1, 1]} : vector<54x32xf32> to vector<18x32xf32>
    %718 = arith.maximumf %716, %717 : vector<18x32xf32>
    %cst_208 = arith.constant 0.000000e+00 : f32
    %719 = vector.broadcast %cst_208 : f32 to vector<18x32xf32>
    %720 = arith.maximumf %718, %719 : vector<18x32xf32>
    %cst_209 = arith.constant 0.000000e+00 : f32
    %721 = vector.broadcast %cst_209 : f32 to vector<1x32xf32>
    %722 = tpu.concatenate %721, %720, %721 in 0 : vector<1x32xf32>, vector<18x32xf32>, vector<1x32xf32> -> vector<20x32xf32>
    %723 = vector.extract_strided_slice %722 {offsets = [0, 0], sizes = [18, 32], strides = [1, 1]} : vector<20x32xf32> to vector<18x32xf32>
    %724 = vector.extract_strided_slice %722 {offsets = [2, 0], sizes = [18, 32], strides = [1, 1]} : vector<20x32xf32> to vector<18x32xf32>
    %725 = tpu.iota {dimensions = array<i32: 0>} : vector<18x1xi32>
    %cst_210 = arith.constant 1.000000e+00 : f32
    %726 = vector.broadcast %cst_210 : f32 to vector<18x1xf32>
    %cst_211 = arith.constant 1.000000e+00 : f32
    %727 = vector.broadcast %cst_211 : f32 to vector<18x1xf32>
    %c0_i32_212 = arith.constant 0 : i32
    %728 = vector.broadcast %c0_i32_212 : i32 to vector<18x1xi32>
    %729 = arith.cmpi ne, %725, %728 : vector<18x1xi32>
    %730 = arith.extui %729 : vector<18x1xi1> to vector<18x1xi32>
    %731 = arith.sitofp %730 : vector<18x1xi32> to vector<18x1xf32>
    %732 = arith.mulf %726, %731 : vector<18x1xf32>
    %c8_i32 = arith.constant 8 : i32
    %733 = vector.broadcast %c8_i32 : i32 to vector<18x1xi32>
    %734 = arith.cmpi ne, %725, %733 : vector<18x1xi32>
    %735 = arith.extui %734 : vector<18x1xi1> to vector<18x1xi32>
    %736 = arith.sitofp %735 : vector<18x1xi32> to vector<18x1xf32>
    %737 = arith.mulf %727, %736 : vector<18x1xf32>
    %c9_i32 = arith.constant 9 : i32
    %738 = vector.broadcast %c9_i32 : i32 to vector<18x1xi32>
    %739 = arith.cmpi ne, %725, %738 : vector<18x1xi32>
    %740 = arith.extui %739 : vector<18x1xi1> to vector<18x1xi32>
    %741 = arith.sitofp %740 : vector<18x1xi32> to vector<18x1xf32>
    %742 = arith.mulf %732, %741 : vector<18x1xf32>
    %c17_i32_213 = arith.constant 17 : i32
    %743 = vector.broadcast %c17_i32_213 : i32 to vector<18x1xi32>
    %744 = arith.cmpi ne, %725, %743 : vector<18x1xi32>
    %745 = arith.extui %744 : vector<18x1xi1> to vector<18x1xi32>
    %746 = arith.sitofp %745 : vector<18x1xi32> to vector<18x1xf32>
    %747 = arith.mulf %737, %746 : vector<18x1xf32>
    %748 = vector.broadcast %742 : vector<18x1xf32> to vector<18x32xf32>
    %749 = arith.mulf %723, %748 : vector<18x32xf32>
    %750 = vector.broadcast %747 : vector<18x1xf32> to vector<18x32xf32>
    %751 = arith.mulf %724, %750 : vector<18x32xf32>
    %752 = tpu.concatenate %749, %720, %751 in 1 : vector<18x32xf32>, vector<18x32xf32>, vector<18x32xf32> -> vector<18x96xf32>
    %cst_214 = arith.constant dense<0.000000e+00> : vector<18x32xf32>
    %753 = tpu.matmul %752, %0, %cst_214 {dimension_numbers = #tpu.dot_dimension_numbers<[1], [0], [0], [1], [0, 0, 1, 1], [], []>} : vector<18x96xf32>, vector<96x32xf32>, vector<18x32xf32> -> vector<18x32xf32>
    %754 = vector.broadcast %5 : vector<1x32xf32> to vector<18x32xf32>
    %755 = arith.addf %753, %754 : vector<18x32xf32>
    %cst_215 = arith.constant 0.000000e+00 : f32
    %756 = vector.broadcast %cst_215 : f32 to vector<18x32xf32>
    %757 = arith.maximumf %755, %756 : vector<18x32xf32>
    %cst_216 = arith.constant 0.000000e+00 : f32
    %758 = vector.broadcast %cst_216 : f32 to vector<1x32xf32>
    %759 = tpu.concatenate %758, %757, %758 in 0 : vector<1x32xf32>, vector<18x32xf32>, vector<1x32xf32> -> vector<20x32xf32>
    %760 = vector.extract_strided_slice %759 {offsets = [0, 0], sizes = [18, 32], strides = [1, 1]} : vector<20x32xf32> to vector<18x32xf32>
    %761 = vector.extract_strided_slice %759 {offsets = [2, 0], sizes = [18, 32], strides = [1, 1]} : vector<20x32xf32> to vector<18x32xf32>
    %762 = vector.broadcast %742 : vector<18x1xf32> to vector<18x32xf32>
    %763 = arith.mulf %760, %762 : vector<18x32xf32>
    %764 = vector.broadcast %747 : vector<18x1xf32> to vector<18x32xf32>
    %765 = arith.mulf %761, %764 : vector<18x32xf32>
    %766 = tpu.concatenate %763, %757, %765 in 1 : vector<18x32xf32>, vector<18x32xf32>, vector<18x32xf32> -> vector<18x96xf32>
    %cst_217 = arith.constant dense<0.000000e+00> : vector<18x32xf32>
    %767 = tpu.matmul %766, %0, %cst_217 {dimension_numbers = #tpu.dot_dimension_numbers<[1], [0], [0], [1], [0, 0, 1, 1], [], []>} : vector<18x96xf32>, vector<96x32xf32>, vector<18x32xf32> -> vector<18x32xf32>
    %768 = vector.broadcast %5 : vector<1x32xf32> to vector<18x32xf32>
    %769 = arith.addf %767, %768 : vector<18x32xf32>
    %770 = arith.addf %769, %718 : vector<18x32xf32>
    %771 = tpu.iota {dimensions = array<i32: 0>} : vector<4x18xi32>
    %772 = tpu.iota {dimensions = array<i32: 1>} : vector<4x18xi32>
    %c2_i32_218 = arith.constant 2 : i32
    %773 = vector.broadcast %c2_i32_218 : i32 to vector<4x18xi32>
    %774 = arith.muli %773, %771 : vector<4x18xi32>
    %c0_i32_219 = arith.constant 0 : i32
    %775 = vector.broadcast %c0_i32_219 : i32 to vector<4x18xi32>
    %776 = arith.addi %775, %774 : vector<4x18xi32>
    %c0_i32_220 = arith.constant 0 : i32
    %777 = vector.broadcast %c0_i32_220 : i32 to vector<4x18xi32>
    %778 = arith.addi %776, %777 : vector<4x18xi32>
    %779 = arith.cmpi eq, %772, %778 : vector<4x18xi32>
    %c2_i32_221 = arith.constant 2 : i32
    %780 = vector.broadcast %c2_i32_221 : i32 to vector<4x18xi32>
    %781 = arith.muli %780, %771 : vector<4x18xi32>
    %c0_i32_222 = arith.constant 0 : i32
    %782 = vector.broadcast %c0_i32_222 : i32 to vector<4x18xi32>
    %783 = arith.addi %781, %782 : vector<4x18xi32>
    %c9_i32_223 = arith.constant 9 : i32
    %784 = vector.broadcast %c9_i32_223 : i32 to vector<4x18xi32>
    %785 = arith.cmpi slt, %783, %784 : vector<4x18xi32>
    %786 = arith.andi %779, %785 : vector<4x18xi1>
    %787 = arith.extui %786 : vector<4x18xi1> to vector<4x18xi32>
    %788 = arith.sitofp %787 : vector<4x18xi32> to vector<4x18xf32>
    %789 = tpu.iota {dimensions = array<i32: 0>} : vector<4x18xi32>
    %790 = tpu.iota {dimensions = array<i32: 1>} : vector<4x18xi32>
    %c2_i32_224 = arith.constant 2 : i32
    %791 = vector.broadcast %c2_i32_224 : i32 to vector<4x18xi32>
    %792 = arith.muli %791, %789 : vector<4x18xi32>
    %c9_i32_225 = arith.constant 9 : i32
    %793 = vector.broadcast %c9_i32_225 : i32 to vector<4x18xi32>
    %794 = arith.addi %793, %792 : vector<4x18xi32>
    %c0_i32_226 = arith.constant 0 : i32
    %795 = vector.broadcast %c0_i32_226 : i32 to vector<4x18xi32>
    %796 = arith.addi %794, %795 : vector<4x18xi32>
    %797 = arith.cmpi eq, %790, %796 : vector<4x18xi32>
    %c2_i32_227 = arith.constant 2 : i32
    %798 = vector.broadcast %c2_i32_227 : i32 to vector<4x18xi32>
    %799 = arith.muli %798, %789 : vector<4x18xi32>
    %c0_i32_228 = arith.constant 0 : i32
    %800 = vector.broadcast %c0_i32_228 : i32 to vector<4x18xi32>
    %801 = arith.addi %799, %800 : vector<4x18xi32>
    %c9_i32_229 = arith.constant 9 : i32
    %802 = vector.broadcast %c9_i32_229 : i32 to vector<4x18xi32>
    %803 = arith.cmpi slt, %801, %802 : vector<4x18xi32>
    %804 = arith.andi %797, %803 : vector<4x18xi1>
    %805 = arith.extui %804 : vector<4x18xi1> to vector<4x18xi32>
    %806 = arith.sitofp %805 : vector<4x18xi32> to vector<4x18xf32>
    %807 = tpu.iota {dimensions = array<i32: 0>} : vector<4x18xi32>
    %808 = tpu.iota {dimensions = array<i32: 1>} : vector<4x18xi32>
    %c2_i32_230 = arith.constant 2 : i32
    %809 = vector.broadcast %c2_i32_230 : i32 to vector<4x18xi32>
    %810 = arith.muli %809, %807 : vector<4x18xi32>
    %c0_i32_231 = arith.constant 0 : i32
    %811 = vector.broadcast %c0_i32_231 : i32 to vector<4x18xi32>
    %812 = arith.addi %811, %810 : vector<4x18xi32>
    %c1_i32_232 = arith.constant 1 : i32
    %813 = vector.broadcast %c1_i32_232 : i32 to vector<4x18xi32>
    %814 = arith.addi %812, %813 : vector<4x18xi32>
    %815 = arith.cmpi eq, %808, %814 : vector<4x18xi32>
    %c2_i32_233 = arith.constant 2 : i32
    %816 = vector.broadcast %c2_i32_233 : i32 to vector<4x18xi32>
    %817 = arith.muli %816, %807 : vector<4x18xi32>
    %c1_i32_234 = arith.constant 1 : i32
    %818 = vector.broadcast %c1_i32_234 : i32 to vector<4x18xi32>
    %819 = arith.addi %817, %818 : vector<4x18xi32>
    %c9_i32_235 = arith.constant 9 : i32
    %820 = vector.broadcast %c9_i32_235 : i32 to vector<4x18xi32>
    %821 = arith.cmpi slt, %819, %820 : vector<4x18xi32>
    %822 = arith.andi %815, %821 : vector<4x18xi1>
    %823 = arith.extui %822 : vector<4x18xi1> to vector<4x18xi32>
    %824 = arith.sitofp %823 : vector<4x18xi32> to vector<4x18xf32>
    %825 = tpu.iota {dimensions = array<i32: 0>} : vector<4x18xi32>
    %826 = tpu.iota {dimensions = array<i32: 1>} : vector<4x18xi32>
    %c2_i32_236 = arith.constant 2 : i32
    %827 = vector.broadcast %c2_i32_236 : i32 to vector<4x18xi32>
    %828 = arith.muli %827, %825 : vector<4x18xi32>
    %c9_i32_237 = arith.constant 9 : i32
    %829 = vector.broadcast %c9_i32_237 : i32 to vector<4x18xi32>
    %830 = arith.addi %829, %828 : vector<4x18xi32>
    %c1_i32_238 = arith.constant 1 : i32
    %831 = vector.broadcast %c1_i32_238 : i32 to vector<4x18xi32>
    %832 = arith.addi %830, %831 : vector<4x18xi32>
    %833 = arith.cmpi eq, %826, %832 : vector<4x18xi32>
    %c2_i32_239 = arith.constant 2 : i32
    %834 = vector.broadcast %c2_i32_239 : i32 to vector<4x18xi32>
    %835 = arith.muli %834, %825 : vector<4x18xi32>
    %c1_i32_240 = arith.constant 1 : i32
    %836 = vector.broadcast %c1_i32_240 : i32 to vector<4x18xi32>
    %837 = arith.addi %835, %836 : vector<4x18xi32>
    %c9_i32_241 = arith.constant 9 : i32
    %838 = vector.broadcast %c9_i32_241 : i32 to vector<4x18xi32>
    %839 = arith.cmpi slt, %837, %838 : vector<4x18xi32>
    %840 = arith.andi %833, %839 : vector<4x18xi1>
    %841 = arith.extui %840 : vector<4x18xi1> to vector<4x18xi32>
    %842 = arith.sitofp %841 : vector<4x18xi32> to vector<4x18xf32>
    %843 = tpu.iota {dimensions = array<i32: 0>} : vector<4x18xi32>
    %844 = tpu.iota {dimensions = array<i32: 1>} : vector<4x18xi32>
    %c2_i32_242 = arith.constant 2 : i32
    %845 = vector.broadcast %c2_i32_242 : i32 to vector<4x18xi32>
    %846 = arith.muli %845, %843 : vector<4x18xi32>
    %c0_i32_243 = arith.constant 0 : i32
    %847 = vector.broadcast %c0_i32_243 : i32 to vector<4x18xi32>
    %848 = arith.addi %847, %846 : vector<4x18xi32>
    %c2_i32_244 = arith.constant 2 : i32
    %849 = vector.broadcast %c2_i32_244 : i32 to vector<4x18xi32>
    %850 = arith.addi %848, %849 : vector<4x18xi32>
    %851 = arith.cmpi eq, %844, %850 : vector<4x18xi32>
    %c2_i32_245 = arith.constant 2 : i32
    %852 = vector.broadcast %c2_i32_245 : i32 to vector<4x18xi32>
    %853 = arith.muli %852, %843 : vector<4x18xi32>
    %c2_i32_246 = arith.constant 2 : i32
    %854 = vector.broadcast %c2_i32_246 : i32 to vector<4x18xi32>
    %855 = arith.addi %853, %854 : vector<4x18xi32>
    %c9_i32_247 = arith.constant 9 : i32
    %856 = vector.broadcast %c9_i32_247 : i32 to vector<4x18xi32>
    %857 = arith.cmpi slt, %855, %856 : vector<4x18xi32>
    %858 = arith.andi %851, %857 : vector<4x18xi1>
    %859 = arith.extui %858 : vector<4x18xi1> to vector<4x18xi32>
    %860 = arith.sitofp %859 : vector<4x18xi32> to vector<4x18xf32>
    %861 = tpu.iota {dimensions = array<i32: 0>} : vector<4x18xi32>
    %862 = tpu.iota {dimensions = array<i32: 1>} : vector<4x18xi32>
    %c2_i32_248 = arith.constant 2 : i32
    %863 = vector.broadcast %c2_i32_248 : i32 to vector<4x18xi32>
    %864 = arith.muli %863, %861 : vector<4x18xi32>
    %c9_i32_249 = arith.constant 9 : i32
    %865 = vector.broadcast %c9_i32_249 : i32 to vector<4x18xi32>
    %866 = arith.addi %865, %864 : vector<4x18xi32>
    %c2_i32_250 = arith.constant 2 : i32
    %867 = vector.broadcast %c2_i32_250 : i32 to vector<4x18xi32>
    %868 = arith.addi %866, %867 : vector<4x18xi32>
    %869 = arith.cmpi eq, %862, %868 : vector<4x18xi32>
    %c2_i32_251 = arith.constant 2 : i32
    %870 = vector.broadcast %c2_i32_251 : i32 to vector<4x18xi32>
    %871 = arith.muli %870, %861 : vector<4x18xi32>
    %c2_i32_252 = arith.constant 2 : i32
    %872 = vector.broadcast %c2_i32_252 : i32 to vector<4x18xi32>
    %873 = arith.addi %871, %872 : vector<4x18xi32>
    %c9_i32_253 = arith.constant 9 : i32
    %874 = vector.broadcast %c9_i32_253 : i32 to vector<4x18xi32>
    %875 = arith.cmpi slt, %873, %874 : vector<4x18xi32>
    %876 = arith.andi %869, %875 : vector<4x18xi1>
    %877 = arith.extui %876 : vector<4x18xi1> to vector<4x18xi32>
    %878 = arith.sitofp %877 : vector<4x18xi32> to vector<4x18xf32>
    %879 = tpu.concatenate %788, %806, %824, %842, %860, %878 in 0 : vector<4x18xf32>, vector<4x18xf32>, vector<4x18xf32>, vector<4x18xf32>, vector<4x18xf32>, vector<4x18xf32> -> vector<24x18xf32>
    %cst_254 = arith.constant dense<0.000000e+00> : vector<24x32xf32>
    %880 = tpu.matmul %879, %770, %cst_254 {dimension_numbers = #tpu.dot_dimension_numbers<[1], [0], [0], [1], [0, 0, 1, 1], [], []>} : vector<24x18xf32>, vector<18x32xf32>, vector<24x32xf32> -> vector<24x32xf32>
    %881 = vector.extract_strided_slice %880 {offsets = [0, 0], sizes = [8, 32], strides = [1, 1]} : vector<24x32xf32> to vector<8x32xf32>
    %882 = vector.extract_strided_slice %880 {offsets = [8, 0], sizes = [8, 32], strides = [1, 1]} : vector<24x32xf32> to vector<8x32xf32>
    %883 = arith.maximumf %881, %882 : vector<8x32xf32>
    %884 = vector.extract_strided_slice %880 {offsets = [16, 0], sizes = [8, 32], strides = [1, 1]} : vector<24x32xf32> to vector<8x32xf32>
    %885 = arith.maximumf %883, %884 : vector<8x32xf32>
    %cst_255 = arith.constant 0.000000e+00 : f32
    %886 = vector.broadcast %cst_255 : f32 to vector<8x32xf32>
    %887 = arith.maximumf %885, %886 : vector<8x32xf32>
    %cst_256 = arith.constant 0.000000e+00 : f32
    %888 = vector.broadcast %cst_256 : f32 to vector<1x32xf32>
    %889 = tpu.concatenate %888, %887, %888 in 0 : vector<1x32xf32>, vector<8x32xf32>, vector<1x32xf32> -> vector<10x32xf32>
    %890 = vector.extract_strided_slice %889 {offsets = [0, 0], sizes = [8, 32], strides = [1, 1]} : vector<10x32xf32> to vector<8x32xf32>
    %891 = vector.extract_strided_slice %889 {offsets = [2, 0], sizes = [8, 32], strides = [1, 1]} : vector<10x32xf32> to vector<8x32xf32>
    %892 = tpu.iota {dimensions = array<i32: 0>} : vector<8x1xi32>
    %cst_257 = arith.constant 1.000000e+00 : f32
    %893 = vector.broadcast %cst_257 : f32 to vector<8x1xf32>
    %cst_258 = arith.constant 1.000000e+00 : f32
    %894 = vector.broadcast %cst_258 : f32 to vector<8x1xf32>
    %c0_i32_259 = arith.constant 0 : i32
    %895 = vector.broadcast %c0_i32_259 : i32 to vector<8x1xi32>
    %896 = arith.cmpi ne, %892, %895 : vector<8x1xi32>
    %897 = arith.extui %896 : vector<8x1xi1> to vector<8x1xi32>
    %898 = arith.sitofp %897 : vector<8x1xi32> to vector<8x1xf32>
    %899 = arith.mulf %893, %898 : vector<8x1xf32>
    %c3_i32_260 = arith.constant 3 : i32
    %900 = vector.broadcast %c3_i32_260 : i32 to vector<8x1xi32>
    %901 = arith.cmpi ne, %892, %900 : vector<8x1xi32>
    %902 = arith.extui %901 : vector<8x1xi1> to vector<8x1xi32>
    %903 = arith.sitofp %902 : vector<8x1xi32> to vector<8x1xf32>
    %904 = arith.mulf %894, %903 : vector<8x1xf32>
    %c4_i32 = arith.constant 4 : i32
    %905 = vector.broadcast %c4_i32 : i32 to vector<8x1xi32>
    %906 = arith.cmpi ne, %892, %905 : vector<8x1xi32>
    %907 = arith.extui %906 : vector<8x1xi1> to vector<8x1xi32>
    %908 = arith.sitofp %907 : vector<8x1xi32> to vector<8x1xf32>
    %909 = arith.mulf %899, %908 : vector<8x1xf32>
    %c7_i32_261 = arith.constant 7 : i32
    %910 = vector.broadcast %c7_i32_261 : i32 to vector<8x1xi32>
    %911 = arith.cmpi ne, %892, %910 : vector<8x1xi32>
    %912 = arith.extui %911 : vector<8x1xi1> to vector<8x1xi32>
    %913 = arith.sitofp %912 : vector<8x1xi32> to vector<8x1xf32>
    %914 = arith.mulf %904, %913 : vector<8x1xf32>
    %915 = vector.broadcast %909 : vector<8x1xf32> to vector<8x32xf32>
    %916 = arith.mulf %890, %915 : vector<8x32xf32>
    %917 = vector.broadcast %914 : vector<8x1xf32> to vector<8x32xf32>
    %918 = arith.mulf %891, %917 : vector<8x32xf32>
    %919 = tpu.concatenate %916, %887, %918 in 1 : vector<8x32xf32>, vector<8x32xf32>, vector<8x32xf32> -> vector<8x96xf32>
    %cst_262 = arith.constant dense<0.000000e+00> : vector<8x32xf32>
    %920 = tpu.matmul %919, %0, %cst_262 {dimension_numbers = #tpu.dot_dimension_numbers<[1], [0], [0], [1], [0, 0, 1, 1], [], []>} : vector<8x96xf32>, vector<96x32xf32>, vector<8x32xf32> -> vector<8x32xf32>
    %921 = vector.broadcast %5 : vector<1x32xf32> to vector<8x32xf32>
    %922 = arith.addf %920, %921 : vector<8x32xf32>
    %cst_263 = arith.constant 0.000000e+00 : f32
    %923 = vector.broadcast %cst_263 : f32 to vector<8x32xf32>
    %924 = arith.maximumf %922, %923 : vector<8x32xf32>
    %cst_264 = arith.constant 0.000000e+00 : f32
    %925 = vector.broadcast %cst_264 : f32 to vector<1x32xf32>
    %926 = tpu.concatenate %925, %924, %925 in 0 : vector<1x32xf32>, vector<8x32xf32>, vector<1x32xf32> -> vector<10x32xf32>
    %927 = vector.extract_strided_slice %926 {offsets = [0, 0], sizes = [8, 32], strides = [1, 1]} : vector<10x32xf32> to vector<8x32xf32>
    %928 = vector.extract_strided_slice %926 {offsets = [2, 0], sizes = [8, 32], strides = [1, 1]} : vector<10x32xf32> to vector<8x32xf32>
    %929 = vector.broadcast %909 : vector<8x1xf32> to vector<8x32xf32>
    %930 = arith.mulf %927, %929 : vector<8x32xf32>
    %931 = vector.broadcast %914 : vector<8x1xf32> to vector<8x32xf32>
    %932 = arith.mulf %928, %931 : vector<8x32xf32>
    %933 = tpu.concatenate %930, %924, %932 in 1 : vector<8x32xf32>, vector<8x32xf32>, vector<8x32xf32> -> vector<8x96xf32>
    %cst_265 = arith.constant dense<0.000000e+00> : vector<8x32xf32>
    %934 = tpu.matmul %933, %0, %cst_265 {dimension_numbers = #tpu.dot_dimension_numbers<[1], [0], [0], [1], [0, 0, 1, 1], [], []>} : vector<8x96xf32>, vector<96x32xf32>, vector<8x32xf32> -> vector<8x32xf32>
    %935 = vector.broadcast %5 : vector<1x32xf32> to vector<8x32xf32>
    %936 = arith.addf %934, %935 : vector<8x32xf32>
    %937 = arith.addf %936, %885 : vector<8x32xf32>
    %938 = tpu.iota {dimensions = array<i32: 0>} : vector<2x8xi32>
    %939 = tpu.iota {dimensions = array<i32: 1>} : vector<2x8xi32>
    %c2_i32_266 = arith.constant 2 : i32
    %940 = vector.broadcast %c2_i32_266 : i32 to vector<2x8xi32>
    %941 = arith.muli %940, %938 : vector<2x8xi32>
    %c0_i32_267 = arith.constant 0 : i32
    %942 = vector.broadcast %c0_i32_267 : i32 to vector<2x8xi32>
    %943 = arith.addi %942, %941 : vector<2x8xi32>
    %c0_i32_268 = arith.constant 0 : i32
    %944 = vector.broadcast %c0_i32_268 : i32 to vector<2x8xi32>
    %945 = arith.addi %943, %944 : vector<2x8xi32>
    %946 = arith.cmpi eq, %939, %945 : vector<2x8xi32>
    %c2_i32_269 = arith.constant 2 : i32
    %947 = vector.broadcast %c2_i32_269 : i32 to vector<2x8xi32>
    %948 = arith.muli %947, %938 : vector<2x8xi32>
    %c0_i32_270 = arith.constant 0 : i32
    %949 = vector.broadcast %c0_i32_270 : i32 to vector<2x8xi32>
    %950 = arith.addi %948, %949 : vector<2x8xi32>
    %c4_i32_271 = arith.constant 4 : i32
    %951 = vector.broadcast %c4_i32_271 : i32 to vector<2x8xi32>
    %952 = arith.cmpi slt, %950, %951 : vector<2x8xi32>
    %953 = arith.andi %946, %952 : vector<2x8xi1>
    %954 = arith.extui %953 : vector<2x8xi1> to vector<2x8xi32>
    %955 = arith.sitofp %954 : vector<2x8xi32> to vector<2x8xf32>
    %956 = tpu.iota {dimensions = array<i32: 0>} : vector<2x8xi32>
    %957 = tpu.iota {dimensions = array<i32: 1>} : vector<2x8xi32>
    %c2_i32_272 = arith.constant 2 : i32
    %958 = vector.broadcast %c2_i32_272 : i32 to vector<2x8xi32>
    %959 = arith.muli %958, %956 : vector<2x8xi32>
    %c4_i32_273 = arith.constant 4 : i32
    %960 = vector.broadcast %c4_i32_273 : i32 to vector<2x8xi32>
    %961 = arith.addi %960, %959 : vector<2x8xi32>
    %c0_i32_274 = arith.constant 0 : i32
    %962 = vector.broadcast %c0_i32_274 : i32 to vector<2x8xi32>
    %963 = arith.addi %961, %962 : vector<2x8xi32>
    %964 = arith.cmpi eq, %957, %963 : vector<2x8xi32>
    %c2_i32_275 = arith.constant 2 : i32
    %965 = vector.broadcast %c2_i32_275 : i32 to vector<2x8xi32>
    %966 = arith.muli %965, %956 : vector<2x8xi32>
    %c0_i32_276 = arith.constant 0 : i32
    %967 = vector.broadcast %c0_i32_276 : i32 to vector<2x8xi32>
    %968 = arith.addi %966, %967 : vector<2x8xi32>
    %c4_i32_277 = arith.constant 4 : i32
    %969 = vector.broadcast %c4_i32_277 : i32 to vector<2x8xi32>
    %970 = arith.cmpi slt, %968, %969 : vector<2x8xi32>
    %971 = arith.andi %964, %970 : vector<2x8xi1>
    %972 = arith.extui %971 : vector<2x8xi1> to vector<2x8xi32>
    %973 = arith.sitofp %972 : vector<2x8xi32> to vector<2x8xf32>
    %974 = tpu.iota {dimensions = array<i32: 0>} : vector<2x8xi32>
    %975 = tpu.iota {dimensions = array<i32: 1>} : vector<2x8xi32>
    %c2_i32_278 = arith.constant 2 : i32
    %976 = vector.broadcast %c2_i32_278 : i32 to vector<2x8xi32>
    %977 = arith.muli %976, %974 : vector<2x8xi32>
    %c0_i32_279 = arith.constant 0 : i32
    %978 = vector.broadcast %c0_i32_279 : i32 to vector<2x8xi32>
    %979 = arith.addi %978, %977 : vector<2x8xi32>
    %c1_i32_280 = arith.constant 1 : i32
    %980 = vector.broadcast %c1_i32_280 : i32 to vector<2x8xi32>
    %981 = arith.addi %979, %980 : vector<2x8xi32>
    %982 = arith.cmpi eq, %975, %981 : vector<2x8xi32>
    %c2_i32_281 = arith.constant 2 : i32
    %983 = vector.broadcast %c2_i32_281 : i32 to vector<2x8xi32>
    %984 = arith.muli %983, %974 : vector<2x8xi32>
    %c1_i32_282 = arith.constant 1 : i32
    %985 = vector.broadcast %c1_i32_282 : i32 to vector<2x8xi32>
    %986 = arith.addi %984, %985 : vector<2x8xi32>
    %c4_i32_283 = arith.constant 4 : i32
    %987 = vector.broadcast %c4_i32_283 : i32 to vector<2x8xi32>
    %988 = arith.cmpi slt, %986, %987 : vector<2x8xi32>
    %989 = arith.andi %982, %988 : vector<2x8xi1>
    %990 = arith.extui %989 : vector<2x8xi1> to vector<2x8xi32>
    %991 = arith.sitofp %990 : vector<2x8xi32> to vector<2x8xf32>
    %992 = tpu.iota {dimensions = array<i32: 0>} : vector<2x8xi32>
    %993 = tpu.iota {dimensions = array<i32: 1>} : vector<2x8xi32>
    %c2_i32_284 = arith.constant 2 : i32
    %994 = vector.broadcast %c2_i32_284 : i32 to vector<2x8xi32>
    %995 = arith.muli %994, %992 : vector<2x8xi32>
    %c4_i32_285 = arith.constant 4 : i32
    %996 = vector.broadcast %c4_i32_285 : i32 to vector<2x8xi32>
    %997 = arith.addi %996, %995 : vector<2x8xi32>
    %c1_i32_286 = arith.constant 1 : i32
    %998 = vector.broadcast %c1_i32_286 : i32 to vector<2x8xi32>
    %999 = arith.addi %997, %998 : vector<2x8xi32>
    %1000 = arith.cmpi eq, %993, %999 : vector<2x8xi32>
    %c2_i32_287 = arith.constant 2 : i32
    %1001 = vector.broadcast %c2_i32_287 : i32 to vector<2x8xi32>
    %1002 = arith.muli %1001, %992 : vector<2x8xi32>
    %c1_i32_288 = arith.constant 1 : i32
    %1003 = vector.broadcast %c1_i32_288 : i32 to vector<2x8xi32>
    %1004 = arith.addi %1002, %1003 : vector<2x8xi32>
    %c4_i32_289 = arith.constant 4 : i32
    %1005 = vector.broadcast %c4_i32_289 : i32 to vector<2x8xi32>
    %1006 = arith.cmpi slt, %1004, %1005 : vector<2x8xi32>
    %1007 = arith.andi %1000, %1006 : vector<2x8xi1>
    %1008 = arith.extui %1007 : vector<2x8xi1> to vector<2x8xi32>
    %1009 = arith.sitofp %1008 : vector<2x8xi32> to vector<2x8xf32>
    %1010 = tpu.iota {dimensions = array<i32: 0>} : vector<2x8xi32>
    %1011 = tpu.iota {dimensions = array<i32: 1>} : vector<2x8xi32>
    %c2_i32_290 = arith.constant 2 : i32
    %1012 = vector.broadcast %c2_i32_290 : i32 to vector<2x8xi32>
    %1013 = arith.muli %1012, %1010 : vector<2x8xi32>
    %c0_i32_291 = arith.constant 0 : i32
    %1014 = vector.broadcast %c0_i32_291 : i32 to vector<2x8xi32>
    %1015 = arith.addi %1014, %1013 : vector<2x8xi32>
    %c2_i32_292 = arith.constant 2 : i32
    %1016 = vector.broadcast %c2_i32_292 : i32 to vector<2x8xi32>
    %1017 = arith.addi %1015, %1016 : vector<2x8xi32>
    %1018 = arith.cmpi eq, %1011, %1017 : vector<2x8xi32>
    %c2_i32_293 = arith.constant 2 : i32
    %1019 = vector.broadcast %c2_i32_293 : i32 to vector<2x8xi32>
    %1020 = arith.muli %1019, %1010 : vector<2x8xi32>
    %c2_i32_294 = arith.constant 2 : i32
    %1021 = vector.broadcast %c2_i32_294 : i32 to vector<2x8xi32>
    %1022 = arith.addi %1020, %1021 : vector<2x8xi32>
    %c4_i32_295 = arith.constant 4 : i32
    %1023 = vector.broadcast %c4_i32_295 : i32 to vector<2x8xi32>
    %1024 = arith.cmpi slt, %1022, %1023 : vector<2x8xi32>
    %1025 = arith.andi %1018, %1024 : vector<2x8xi1>
    %1026 = arith.extui %1025 : vector<2x8xi1> to vector<2x8xi32>
    %1027 = arith.sitofp %1026 : vector<2x8xi32> to vector<2x8xf32>
    %1028 = tpu.iota {dimensions = array<i32: 0>} : vector<2x8xi32>
    %1029 = tpu.iota {dimensions = array<i32: 1>} : vector<2x8xi32>
    %c2_i32_296 = arith.constant 2 : i32
    %1030 = vector.broadcast %c2_i32_296 : i32 to vector<2x8xi32>
    %1031 = arith.muli %1030, %1028 : vector<2x8xi32>
    %c4_i32_297 = arith.constant 4 : i32
    %1032 = vector.broadcast %c4_i32_297 : i32 to vector<2x8xi32>
    %1033 = arith.addi %1032, %1031 : vector<2x8xi32>
    %c2_i32_298 = arith.constant 2 : i32
    %1034 = vector.broadcast %c2_i32_298 : i32 to vector<2x8xi32>
    %1035 = arith.addi %1033, %1034 : vector<2x8xi32>
    %1036 = arith.cmpi eq, %1029, %1035 : vector<2x8xi32>
    %c2_i32_299 = arith.constant 2 : i32
    %1037 = vector.broadcast %c2_i32_299 : i32 to vector<2x8xi32>
    %1038 = arith.muli %1037, %1028 : vector<2x8xi32>
    %c2_i32_300 = arith.constant 2 : i32
    %1039 = vector.broadcast %c2_i32_300 : i32 to vector<2x8xi32>
    %1040 = arith.addi %1038, %1039 : vector<2x8xi32>
    %c4_i32_301 = arith.constant 4 : i32
    %1041 = vector.broadcast %c4_i32_301 : i32 to vector<2x8xi32>
    %1042 = arith.cmpi slt, %1040, %1041 : vector<2x8xi32>
    %1043 = arith.andi %1036, %1042 : vector<2x8xi1>
    %1044 = arith.extui %1043 : vector<2x8xi1> to vector<2x8xi32>
    %1045 = arith.sitofp %1044 : vector<2x8xi32> to vector<2x8xf32>
    %1046 = tpu.concatenate %955, %973, %991, %1009, %1027, %1045 in 0 : vector<2x8xf32>, vector<2x8xf32>, vector<2x8xf32>, vector<2x8xf32>, vector<2x8xf32>, vector<2x8xf32> -> vector<12x8xf32>
    %cst_302 = arith.constant dense<0.000000e+00> : vector<12x32xf32>
    %1047 = tpu.matmul %1046, %937, %cst_302 {dimension_numbers = #tpu.dot_dimension_numbers<[1], [0], [0], [1], [0, 0, 1, 1], [], []>} : vector<12x8xf32>, vector<8x32xf32>, vector<12x32xf32> -> vector<12x32xf32>
    %1048 = vector.extract_strided_slice %1047 {offsets = [0, 0], sizes = [4, 32], strides = [1, 1]} : vector<12x32xf32> to vector<4x32xf32>
    %1049 = vector.extract_strided_slice %1047 {offsets = [4, 0], sizes = [4, 32], strides = [1, 1]} : vector<12x32xf32> to vector<4x32xf32>
    %1050 = arith.maximumf %1048, %1049 : vector<4x32xf32>
    %1051 = vector.extract_strided_slice %1047 {offsets = [8, 0], sizes = [4, 32], strides = [1, 1]} : vector<12x32xf32> to vector<4x32xf32>
    %1052 = arith.maximumf %1050, %1051 : vector<4x32xf32>
    %cst_303 = arith.constant 0.000000e+00 : f32
    %1053 = vector.broadcast %cst_303 : f32 to vector<4x32xf32>
    %1054 = arith.maximumf %1052, %1053 : vector<4x32xf32>
    %cst_304 = arith.constant 0.000000e+00 : f32
    %1055 = vector.broadcast %cst_304 : f32 to vector<1x32xf32>
    %1056 = tpu.concatenate %1055, %1054, %1055 in 0 : vector<1x32xf32>, vector<4x32xf32>, vector<1x32xf32> -> vector<6x32xf32>
    %1057 = vector.extract_strided_slice %1056 {offsets = [0, 0], sizes = [4, 32], strides = [1, 1]} : vector<6x32xf32> to vector<4x32xf32>
    %1058 = vector.extract_strided_slice %1056 {offsets = [2, 0], sizes = [4, 32], strides = [1, 1]} : vector<6x32xf32> to vector<4x32xf32>
    %1059 = tpu.iota {dimensions = array<i32: 0>} : vector<4x1xi32>
    %cst_305 = arith.constant 1.000000e+00 : f32
    %1060 = vector.broadcast %cst_305 : f32 to vector<4x1xf32>
    %cst_306 = arith.constant 1.000000e+00 : f32
    %1061 = vector.broadcast %cst_306 : f32 to vector<4x1xf32>
    %c0_i32_307 = arith.constant 0 : i32
    %1062 = vector.broadcast %c0_i32_307 : i32 to vector<4x1xi32>
    %1063 = arith.cmpi ne, %1059, %1062 : vector<4x1xi32>
    %1064 = arith.extui %1063 : vector<4x1xi1> to vector<4x1xi32>
    %1065 = arith.sitofp %1064 : vector<4x1xi32> to vector<4x1xf32>
    %1066 = arith.mulf %1060, %1065 : vector<4x1xf32>
    %c1_i32_308 = arith.constant 1 : i32
    %1067 = vector.broadcast %c1_i32_308 : i32 to vector<4x1xi32>
    %1068 = arith.cmpi ne, %1059, %1067 : vector<4x1xi32>
    %1069 = arith.extui %1068 : vector<4x1xi1> to vector<4x1xi32>
    %1070 = arith.sitofp %1069 : vector<4x1xi32> to vector<4x1xf32>
    %1071 = arith.mulf %1061, %1070 : vector<4x1xf32>
    %c2_i32_309 = arith.constant 2 : i32
    %1072 = vector.broadcast %c2_i32_309 : i32 to vector<4x1xi32>
    %1073 = arith.cmpi ne, %1059, %1072 : vector<4x1xi32>
    %1074 = arith.extui %1073 : vector<4x1xi1> to vector<4x1xi32>
    %1075 = arith.sitofp %1074 : vector<4x1xi32> to vector<4x1xf32>
    %1076 = arith.mulf %1066, %1075 : vector<4x1xf32>
    %c3_i32_310 = arith.constant 3 : i32
    %1077 = vector.broadcast %c3_i32_310 : i32 to vector<4x1xi32>
    %1078 = arith.cmpi ne, %1059, %1077 : vector<4x1xi32>
    %1079 = arith.extui %1078 : vector<4x1xi1> to vector<4x1xi32>
    %1080 = arith.sitofp %1079 : vector<4x1xi32> to vector<4x1xf32>
    %1081 = arith.mulf %1071, %1080 : vector<4x1xf32>
    %1082 = vector.broadcast %1076 : vector<4x1xf32> to vector<4x32xf32>
    %1083 = arith.mulf %1057, %1082 : vector<4x32xf32>
    %1084 = vector.broadcast %1081 : vector<4x1xf32> to vector<4x32xf32>
    %1085 = arith.mulf %1058, %1084 : vector<4x32xf32>
    %1086 = tpu.concatenate %1083, %1054, %1085 in 1 : vector<4x32xf32>, vector<4x32xf32>, vector<4x32xf32> -> vector<4x96xf32>
    %cst_311 = arith.constant dense<0.000000e+00> : vector<4x32xf32>
    %1087 = tpu.matmul %1086, %0, %cst_311 {dimension_numbers = #tpu.dot_dimension_numbers<[1], [0], [0], [1], [0, 0, 1, 1], [], []>} : vector<4x96xf32>, vector<96x32xf32>, vector<4x32xf32> -> vector<4x32xf32>
    %1088 = vector.broadcast %5 : vector<1x32xf32> to vector<4x32xf32>
    %1089 = arith.addf %1087, %1088 : vector<4x32xf32>
    %cst_312 = arith.constant 0.000000e+00 : f32
    %1090 = vector.broadcast %cst_312 : f32 to vector<4x32xf32>
    %1091 = arith.maximumf %1089, %1090 : vector<4x32xf32>
    %cst_313 = arith.constant 0.000000e+00 : f32
    %1092 = vector.broadcast %cst_313 : f32 to vector<1x32xf32>
    %1093 = tpu.concatenate %1092, %1091, %1092 in 0 : vector<1x32xf32>, vector<4x32xf32>, vector<1x32xf32> -> vector<6x32xf32>
    %1094 = vector.extract_strided_slice %1093 {offsets = [0, 0], sizes = [4, 32], strides = [1, 1]} : vector<6x32xf32> to vector<4x32xf32>
    %1095 = vector.extract_strided_slice %1093 {offsets = [2, 0], sizes = [4, 32], strides = [1, 1]} : vector<6x32xf32> to vector<4x32xf32>
    %1096 = vector.broadcast %1076 : vector<4x1xf32> to vector<4x32xf32>
    %1097 = arith.mulf %1094, %1096 : vector<4x32xf32>
    %1098 = vector.broadcast %1081 : vector<4x1xf32> to vector<4x32xf32>
    %1099 = arith.mulf %1095, %1098 : vector<4x32xf32>
    %1100 = tpu.concatenate %1097, %1091, %1099 in 1 : vector<4x32xf32>, vector<4x32xf32>, vector<4x32xf32> -> vector<4x96xf32>
    %cst_314 = arith.constant dense<0.000000e+00> : vector<4x32xf32>
    %1101 = tpu.matmul %1100, %0, %cst_314 {dimension_numbers = #tpu.dot_dimension_numbers<[1], [0], [0], [1], [0, 0, 1, 1], [], []>} : vector<4x96xf32>, vector<96x32xf32>, vector<4x32xf32> -> vector<4x32xf32>
    %1102 = vector.broadcast %5 : vector<1x32xf32> to vector<4x32xf32>
    %1103 = arith.addf %1101, %1102 : vector<4x32xf32>
    %1104 = arith.addf %1103, %1052 : vector<4x32xf32>
    %1105 = tpu.iota {dimensions = array<i32: 0>} : vector<1x4xi32>
    %1106 = tpu.iota {dimensions = array<i32: 1>} : vector<1x4xi32>
    %c2_i32_315 = arith.constant 2 : i32
    %1107 = vector.broadcast %c2_i32_315 : i32 to vector<1x4xi32>
    %1108 = arith.muli %1107, %1105 : vector<1x4xi32>
    %c0_i32_316 = arith.constant 0 : i32
    %1109 = vector.broadcast %c0_i32_316 : i32 to vector<1x4xi32>
    %1110 = arith.addi %1109, %1108 : vector<1x4xi32>
    %c0_i32_317 = arith.constant 0 : i32
    %1111 = vector.broadcast %c0_i32_317 : i32 to vector<1x4xi32>
    %1112 = arith.addi %1110, %1111 : vector<1x4xi32>
    %1113 = arith.cmpi eq, %1106, %1112 : vector<1x4xi32>
    %c2_i32_318 = arith.constant 2 : i32
    %1114 = vector.broadcast %c2_i32_318 : i32 to vector<1x4xi32>
    %1115 = arith.muli %1114, %1105 : vector<1x4xi32>
    %c0_i32_319 = arith.constant 0 : i32
    %1116 = vector.broadcast %c0_i32_319 : i32 to vector<1x4xi32>
    %1117 = arith.addi %1115, %1116 : vector<1x4xi32>
    %c2_i32_320 = arith.constant 2 : i32
    %1118 = vector.broadcast %c2_i32_320 : i32 to vector<1x4xi32>
    %1119 = arith.cmpi slt, %1117, %1118 : vector<1x4xi32>
    %1120 = arith.andi %1113, %1119 : vector<1x4xi1>
    %1121 = arith.extui %1120 : vector<1x4xi1> to vector<1x4xi32>
    %1122 = arith.sitofp %1121 : vector<1x4xi32> to vector<1x4xf32>
    %1123 = tpu.iota {dimensions = array<i32: 0>} : vector<1x4xi32>
    %1124 = tpu.iota {dimensions = array<i32: 1>} : vector<1x4xi32>
    %c2_i32_321 = arith.constant 2 : i32
    %1125 = vector.broadcast %c2_i32_321 : i32 to vector<1x4xi32>
    %1126 = arith.muli %1125, %1123 : vector<1x4xi32>
    %c2_i32_322 = arith.constant 2 : i32
    %1127 = vector.broadcast %c2_i32_322 : i32 to vector<1x4xi32>
    %1128 = arith.addi %1127, %1126 : vector<1x4xi32>
    %c0_i32_323 = arith.constant 0 : i32
    %1129 = vector.broadcast %c0_i32_323 : i32 to vector<1x4xi32>
    %1130 = arith.addi %1128, %1129 : vector<1x4xi32>
    %1131 = arith.cmpi eq, %1124, %1130 : vector<1x4xi32>
    %c2_i32_324 = arith.constant 2 : i32
    %1132 = vector.broadcast %c2_i32_324 : i32 to vector<1x4xi32>
    %1133 = arith.muli %1132, %1123 : vector<1x4xi32>
    %c0_i32_325 = arith.constant 0 : i32
    %1134 = vector.broadcast %c0_i32_325 : i32 to vector<1x4xi32>
    %1135 = arith.addi %1133, %1134 : vector<1x4xi32>
    %c2_i32_326 = arith.constant 2 : i32
    %1136 = vector.broadcast %c2_i32_326 : i32 to vector<1x4xi32>
    %1137 = arith.cmpi slt, %1135, %1136 : vector<1x4xi32>
    %1138 = arith.andi %1131, %1137 : vector<1x4xi1>
    %1139 = arith.extui %1138 : vector<1x4xi1> to vector<1x4xi32>
    %1140 = arith.sitofp %1139 : vector<1x4xi32> to vector<1x4xf32>
    %1141 = tpu.iota {dimensions = array<i32: 0>} : vector<1x4xi32>
    %1142 = tpu.iota {dimensions = array<i32: 1>} : vector<1x4xi32>
    %c2_i32_327 = arith.constant 2 : i32
    %1143 = vector.broadcast %c2_i32_327 : i32 to vector<1x4xi32>
    %1144 = arith.muli %1143, %1141 : vector<1x4xi32>
    %c0_i32_328 = arith.constant 0 : i32
    %1145 = vector.broadcast %c0_i32_328 : i32 to vector<1x4xi32>
    %1146 = arith.addi %1145, %1144 : vector<1x4xi32>
    %c1_i32_329 = arith.constant 1 : i32
    %1147 = vector.broadcast %c1_i32_329 : i32 to vector<1x4xi32>
    %1148 = arith.addi %1146, %1147 : vector<1x4xi32>
    %1149 = arith.cmpi eq, %1142, %1148 : vector<1x4xi32>
    %c2_i32_330 = arith.constant 2 : i32
    %1150 = vector.broadcast %c2_i32_330 : i32 to vector<1x4xi32>
    %1151 = arith.muli %1150, %1141 : vector<1x4xi32>
    %c1_i32_331 = arith.constant 1 : i32
    %1152 = vector.broadcast %c1_i32_331 : i32 to vector<1x4xi32>
    %1153 = arith.addi %1151, %1152 : vector<1x4xi32>
    %c2_i32_332 = arith.constant 2 : i32
    %1154 = vector.broadcast %c2_i32_332 : i32 to vector<1x4xi32>
    %1155 = arith.cmpi slt, %1153, %1154 : vector<1x4xi32>
    %1156 = arith.andi %1149, %1155 : vector<1x4xi1>
    %1157 = arith.extui %1156 : vector<1x4xi1> to vector<1x4xi32>
    %1158 = arith.sitofp %1157 : vector<1x4xi32> to vector<1x4xf32>
    %1159 = tpu.iota {dimensions = array<i32: 0>} : vector<1x4xi32>
    %1160 = tpu.iota {dimensions = array<i32: 1>} : vector<1x4xi32>
    %c2_i32_333 = arith.constant 2 : i32
    %1161 = vector.broadcast %c2_i32_333 : i32 to vector<1x4xi32>
    %1162 = arith.muli %1161, %1159 : vector<1x4xi32>
    %c2_i32_334 = arith.constant 2 : i32
    %1163 = vector.broadcast %c2_i32_334 : i32 to vector<1x4xi32>
    %1164 = arith.addi %1163, %1162 : vector<1x4xi32>
    %c1_i32_335 = arith.constant 1 : i32
    %1165 = vector.broadcast %c1_i32_335 : i32 to vector<1x4xi32>
    %1166 = arith.addi %1164, %1165 : vector<1x4xi32>
    %1167 = arith.cmpi eq, %1160, %1166 : vector<1x4xi32>
    %c2_i32_336 = arith.constant 2 : i32
    %1168 = vector.broadcast %c2_i32_336 : i32 to vector<1x4xi32>
    %1169 = arith.muli %1168, %1159 : vector<1x4xi32>
    %c1_i32_337 = arith.constant 1 : i32
    %1170 = vector.broadcast %c1_i32_337 : i32 to vector<1x4xi32>
    %1171 = arith.addi %1169, %1170 : vector<1x4xi32>
    %c2_i32_338 = arith.constant 2 : i32
    %1172 = vector.broadcast %c2_i32_338 : i32 to vector<1x4xi32>
    %1173 = arith.cmpi slt, %1171, %1172 : vector<1x4xi32>
    %1174 = arith.andi %1167, %1173 : vector<1x4xi1>
    %1175 = arith.extui %1174 : vector<1x4xi1> to vector<1x4xi32>
    %1176 = arith.sitofp %1175 : vector<1x4xi32> to vector<1x4xf32>
    %1177 = tpu.iota {dimensions = array<i32: 0>} : vector<1x4xi32>
    %1178 = tpu.iota {dimensions = array<i32: 1>} : vector<1x4xi32>
    %c2_i32_339 = arith.constant 2 : i32
    %1179 = vector.broadcast %c2_i32_339 : i32 to vector<1x4xi32>
    %1180 = arith.muli %1179, %1177 : vector<1x4xi32>
    %c0_i32_340 = arith.constant 0 : i32
    %1181 = vector.broadcast %c0_i32_340 : i32 to vector<1x4xi32>
    %1182 = arith.addi %1181, %1180 : vector<1x4xi32>
    %c2_i32_341 = arith.constant 2 : i32
    %1183 = vector.broadcast %c2_i32_341 : i32 to vector<1x4xi32>
    %1184 = arith.addi %1182, %1183 : vector<1x4xi32>
    %1185 = arith.cmpi eq, %1178, %1184 : vector<1x4xi32>
    %c2_i32_342 = arith.constant 2 : i32
    %1186 = vector.broadcast %c2_i32_342 : i32 to vector<1x4xi32>
    %1187 = arith.muli %1186, %1177 : vector<1x4xi32>
    %c2_i32_343 = arith.constant 2 : i32
    %1188 = vector.broadcast %c2_i32_343 : i32 to vector<1x4xi32>
    %1189 = arith.addi %1187, %1188 : vector<1x4xi32>
    %c2_i32_344 = arith.constant 2 : i32
    %1190 = vector.broadcast %c2_i32_344 : i32 to vector<1x4xi32>
    %1191 = arith.cmpi slt, %1189, %1190 : vector<1x4xi32>
    %1192 = arith.andi %1185, %1191 : vector<1x4xi1>
    %1193 = arith.extui %1192 : vector<1x4xi1> to vector<1x4xi32>
    %1194 = arith.sitofp %1193 : vector<1x4xi32> to vector<1x4xf32>
    %1195 = tpu.iota {dimensions = array<i32: 0>} : vector<1x4xi32>
    %1196 = tpu.iota {dimensions = array<i32: 1>} : vector<1x4xi32>
    %c2_i32_345 = arith.constant 2 : i32
    %1197 = vector.broadcast %c2_i32_345 : i32 to vector<1x4xi32>
    %1198 = arith.muli %1197, %1195 : vector<1x4xi32>
    %c2_i32_346 = arith.constant 2 : i32
    %1199 = vector.broadcast %c2_i32_346 : i32 to vector<1x4xi32>
    %1200 = arith.addi %1199, %1198 : vector<1x4xi32>
    %c2_i32_347 = arith.constant 2 : i32
    %1201 = vector.broadcast %c2_i32_347 : i32 to vector<1x4xi32>
    %1202 = arith.addi %1200, %1201 : vector<1x4xi32>
    %1203 = arith.cmpi eq, %1196, %1202 : vector<1x4xi32>
    %c2_i32_348 = arith.constant 2 : i32
    %1204 = vector.broadcast %c2_i32_348 : i32 to vector<1x4xi32>
    %1205 = arith.muli %1204, %1195 : vector<1x4xi32>
    %c2_i32_349 = arith.constant 2 : i32
    %1206 = vector.broadcast %c2_i32_349 : i32 to vector<1x4xi32>
    %1207 = arith.addi %1205, %1206 : vector<1x4xi32>
    %c2_i32_350 = arith.constant 2 : i32
    %1208 = vector.broadcast %c2_i32_350 : i32 to vector<1x4xi32>
    %1209 = arith.cmpi slt, %1207, %1208 : vector<1x4xi32>
    %1210 = arith.andi %1203, %1209 : vector<1x4xi1>
    %1211 = arith.extui %1210 : vector<1x4xi1> to vector<1x4xi32>
    %1212 = arith.sitofp %1211 : vector<1x4xi32> to vector<1x4xf32>
    %1213 = tpu.concatenate %1122, %1140, %1158, %1176, %1194, %1212 in 0 : vector<1x4xf32>, vector<1x4xf32>, vector<1x4xf32>, vector<1x4xf32>, vector<1x4xf32>, vector<1x4xf32> -> vector<6x4xf32>
    %cst_351 = arith.constant dense<0.000000e+00> : vector<6x32xf32>
    %1214 = tpu.matmul %1213, %1104, %cst_351 {dimension_numbers = #tpu.dot_dimension_numbers<[1], [0], [0], [1], [0, 0, 1, 1], [], []>} : vector<6x4xf32>, vector<4x32xf32>, vector<6x32xf32> -> vector<6x32xf32>
    %1215 = vector.extract_strided_slice %1214 {offsets = [0, 0], sizes = [2, 32], strides = [1, 1]} : vector<6x32xf32> to vector<2x32xf32>
    %1216 = vector.extract_strided_slice %1214 {offsets = [2, 0], sizes = [2, 32], strides = [1, 1]} : vector<6x32xf32> to vector<2x32xf32>
    %1217 = arith.maximumf %1215, %1216 : vector<2x32xf32>
    %1218 = vector.extract_strided_slice %1214 {offsets = [4, 0], sizes = [2, 32], strides = [1, 1]} : vector<6x32xf32> to vector<2x32xf32>
    %1219 = arith.maximumf %1217, %1218 : vector<2x32xf32>
    %cst_352 = arith.constant 0.000000e+00 : f32
    %1220 = vector.broadcast %cst_352 : f32 to vector<2x32xf32>
    %1221 = arith.maximumf %1219, %1220 : vector<2x32xf32>
    %cst_353 = arith.constant dense<0.000000e+00> : vector<2x32xf32>
    %1222 = tpu.matmul %1221, %1, %cst_353 {dimension_numbers = #tpu.dot_dimension_numbers<[1], [0], [0], [1], [0, 0, 1, 1], [], []>} : vector<2x32xf32>, vector<32x32xf32>, vector<2x32xf32> -> vector<2x32xf32>
    %1223 = vector.broadcast %5 : vector<1x32xf32> to vector<2x32xf32>
    %1224 = arith.addf %1222, %1223 : vector<2x32xf32>
    %cst_354 = arith.constant 0.000000e+00 : f32
    %1225 = vector.broadcast %cst_354 : f32 to vector<2x32xf32>
    %1226 = arith.maximumf %1224, %1225 : vector<2x32xf32>
    %cst_355 = arith.constant dense<0.000000e+00> : vector<2x32xf32>
    %1227 = tpu.matmul %1226, %1, %cst_355 {dimension_numbers = #tpu.dot_dimension_numbers<[1], [0], [0], [1], [0, 0, 1, 1], [], []>} : vector<2x32xf32>, vector<32x32xf32>, vector<2x32xf32> -> vector<2x32xf32>
    %1228 = vector.broadcast %5 : vector<1x32xf32> to vector<2x32xf32>
    %1229 = arith.addf %1227, %1228 : vector<2x32xf32>
    %1230 = arith.addf %1229, %1219 : vector<2x32xf32>
    %1231 = tpu.concatenate %534, %1230 in 1 : vector<2x32xf32>, vector<2x32xf32> -> vector<2x64xf32>
    %c0_356 = arith.constant 0 : index
    %c0_357 = arith.constant 0 : index
    %1232 = vector.load %arg6[%c0_356, %c0_357] : memref<64x32xf32, #tpu.memory_space<vmem>>, vector<64x32xf32>
    %cst_358 = arith.constant dense<0.000000e+00> : vector<2x32xf32>
    %1233 = tpu.matmul %1231, %1232, %cst_358 {dimension_numbers = #tpu.dot_dimension_numbers<[1], [0], [0], [1], [0, 0, 1, 1], [], []>} : vector<2x64xf32>, vector<64x32xf32>, vector<2x32xf32> -> vector<2x32xf32>
    %c0_359 = arith.constant 0 : index
    %c0_360 = arith.constant 0 : index
    %1234 = vector.load %arg7[%c0_359, %c0_360] : memref<1x32xf32, #tpu.memory_space<vmem>>, vector<1x32xf32>
    %1235 = vector.broadcast %1234 : vector<1x32xf32> to vector<2x32xf32>
    %1236 = arith.addf %1233, %1235 : vector<2x32xf32>
    %cst_361 = arith.constant 0.000000e+00 : f32
    %1237 = vector.broadcast %cst_361 : f32 to vector<2x32xf32>
    %1238 = arith.maximumf %1236, %1237 : vector<2x32xf32>
    %c0_362 = arith.constant 0 : index
    %c0_363 = arith.constant 0 : index
    %1239 = vector.load %arg8[%c0_362, %c0_363] : memref<32x64xf32, #tpu.memory_space<vmem>>, vector<32x64xf32>
    %cst_364 = arith.constant dense<0.000000e+00> : vector<2x64xf32>
    %1240 = tpu.matmul %1238, %1239, %cst_364 {dimension_numbers = #tpu.dot_dimension_numbers<[1], [0], [0], [1], [0, 0, 1, 1], [], []>} : vector<2x32xf32>, vector<32x64xf32>, vector<2x64xf32> -> vector<2x64xf32>
    %c0_365 = arith.constant 0 : index
    %c0_366 = arith.constant 0 : index
    %1241 = vector.load %arg9[%c0_365, %c0_366] : memref<1x64xf32, #tpu.memory_space<vmem>>, vector<1x64xf32>
    %1242 = vector.broadcast %1241 : vector<1x64xf32> to vector<2x64xf32>
    %1243 = arith.addf %1240, %1242 : vector<2x64xf32>
    %c0_367 = arith.constant 0 : index
    %c0_368 = arith.constant 0 : index
    %c0_369 = arith.constant 0 : index
    %1244 = vector.load %arg10[%c0_367, %c0_368, %c0_369] : memref<1x2x64xf32, #tpu.memory_space<vmem>>, vector<1x2x64xf32>
    %1245 = vector.shape_cast %1244 : vector<1x2x64xf32> to vector<2x64xf32>
    %1246 = vector.shape_cast %1243 : vector<2x64xf32> to vector<1x2x64xf32>
    tpu.vector_store %arg10[%c0_367, %c0_368, %c0_369], %1246 {strides = array<i32>} : memref<1x2x64xf32, #tpu.memory_space<vmem>>, vector<1x2x64xf32>,
    return
  }
  func.func @transform_0(%arg0: i32) -> (i32, i32, i32) {
    %c0_i32 = arith.constant 0 : i32
    %c0_i32_0 = arith.constant 0 : i32
    %c0_i32_1 = arith.constant 0 : i32
    return %arg0, %c0_i32, %c0_i32_0 : i32, i32, i32
  }
  func.func @transform_1(%arg0: i32) -> (i32, i32, i32) {
    %c0_i32 = arith.constant 0 : i32
    %c0_i32_0 = arith.constant 0 : i32
    %c0_i32_1 = arith.constant 0 : i32
    return %arg0, %c0_i32, %c0_i32_0 : i32, i32, i32
  }
  func.func @transform_2(%arg0: i32) -> (i32, i32, i32) {
    %c0_i32 = arith.constant 0 : i32
    %c0_i32_0 = arith.constant 0 : i32
    %c0_i32_1 = arith.constant 0 : i32
    %c0_i32_2 = arith.constant 0 : i32
    return %c0_i32, %c0_i32_0, %c0_i32_1 : i32, i32, i32
  }
  func.func @transform_3(%arg0: i32) -> (i32, i32) {
    %c0_i32 = arith.constant 0 : i32
    %c0_i32_0 = arith.constant 0 : i32
    %c0_i32_1 = arith.constant 0 : i32
    return %c0_i32, %c0_i32_0 : i32, i32
  }
  func.func @transform_4(%arg0: i32) -> (i32, i32) {
    %c0_i32 = arith.constant 0 : i32
    %c0_i32_0 = arith.constant 0 : i32
    %c0_i32_1 = arith.constant 0 : i32
    return %c0_i32, %c0_i32_0 : i32, i32
  }
  func.func @transform_5(%arg0: i32) -> (i32, i32) {
    %c0_i32 = arith.constant 0 : i32
    %c0_i32_0 = arith.constant 0 : i32
    %c0_i32_1 = arith.constant 0 : i32
    return %c0_i32, %c0_i32_0 : i32, i32
  }
  func.func @transform_6(%arg0: i32) -> (i32, i32) {
    %c0_i32 = arith.constant 0 : i32
    %c0_i32_0 = arith.constant 0 : i32
    %c0_i32_1 = arith.constant 0 : i32
    return %c0_i32, %c0_i32_0 : i32, i32
  }
  func.func @transform_7(%arg0: i32) -> (i32, i32) {
    %c0_i32 = arith.constant 0 : i32
    %c0_i32_0 = arith.constant 0 : i32
    %c0_i32_1 = arith.constant 0 : i32
    return %c0_i32, %c0_i32_0 : i32, i32
  }
  func.func @transform_8(%arg0: i32) -> (i32, i32) {
    %c0_i32 = arith.constant 0 : i32
    %c0_i32_0 = arith.constant 0 : i32
    %c0_i32_1 = arith.constant 0 : i32
    return %c0_i32, %c0_i32_0 : i32, i32
  }
  func.func @transform_9(%arg0: i32) -> (i32, i32, i32) {
    %c0_i32 = arith.constant 0 : i32
    %c0_i32_0 = arith.constant 0 : i32
    %c0_i32_1 = arith.constant 0 : i32
    return %arg0, %c0_i32, %c0_i32_0 : i32, i32, i32
  }
}

</mosaic_0001>

<llo_original>
// kernel: common_model_forward.1
$region0: #{common_model_forward.1}
  #allocation0 [shape = 'u32[]', space=smem, size = 0x4, offset = 0x4, fixed_abs, tag = 'smem constant byte address 0x4 - core index']
  #allocation1 [shape = 'u32[144,128]{1,0:T(1,128)}', space=vmem, size = 0x12000, scoped, tag = 'internal scratch']
  %s0 = inlined_call_operand.vmem [shape: f32[4,16,32], index: 0, kind: input, shape index: {}]
  %s1 = inlined_call_operand.vmem [shape: f32[4,20,32], index: 1, kind: input, shape index: {}]
  %s2 = inlined_call_operand.vmem [shape: f32[2,96,32], index: 2, kind: input, shape index: {}]
  %s3 = inlined_call_operand.vmem [shape: f32[3,32], index: 3, kind: input, shape index: {}]
  %s4 = inlined_call_operand.vmem [shape: f32[96,32], index: 4, kind: input, shape index: {}]
  %s5 = inlined_call_operand.vmem [shape: f32[64,32], index: 5, kind: input, shape index: {}]
  %s6 = inlined_call_operand.vmem [shape: f32[1,32], index: 6, kind: input, shape index: {}]
  %s7 = inlined_call_operand.vmem [shape: f32[32,64], index: 7, kind: input, shape index: {}]
  %s8 = inlined_call_operand.vmem [shape: f32[1,64], index: 8, kind: input, shape index: {}]
  %s9 = inlined_call_operand.vmem [shape: f32[2,2,64], index: 9, kind: output, shape index: {}]
  %s10 = sld [smem:[#allocation0]]
  $region69: #{common_model_forward.1} parent=0
    _
  %s12 = ssub.s32 1, %s10
  %s13 = scalar_select 0, %s12, %s10
  loop: start=0, step=1, limit=4
  $region2: #{common_model_forward.1} parent=0 // loop_pre_header
    _
  $region3: #{common_model_forward.1} parent=0 // loop_header
    %s15 = sphi 0, %s19
    %p16 = scmp.ge.s32.totalorder %s15, 4
    %s25 = sphi 0, %s27
    %s28 = sphi 0, %s25
    %s29 = sphi 0, %s28
    %s45 = sphi 0, %s29
    %s51 = sphi 0, %s53
    %s54 = sphi 0, %s51
    %s55 = sphi 0, %s54
    %s71 = sphi 0, %s55
    %s75 = sphi 0, %s75
    %s77 = sphi 0, %s75
    %s78 = sphi 0, %s77
    %s92 = sphi 0, %s78
    %s96 = sphi 0, %s96
    %s98 = sphi 0, %s96
    %s99 = sphi 0, %s98
    %s113 = sphi 0, %s99
    %s117 = sphi 0, %s117
    %s119 = sphi 0, %s117
    %s120 = sphi 0, %s119
    %s134 = sphi 0, %s120
    %s138 = sphi 0, %s138
    %s140 = sphi 0, %s138
    %s141 = sphi 0, %s140
    %s155 = sphi 0, %s141
    %s159 = sphi 0, %s159
    %s161 = sphi 0, %s159
    %s162 = sphi 0, %s161
    %s176 = sphi 0, %s162
    %s180 = sphi 0, %s180
    %s182 = sphi 0, %s180
    %s183 = sphi 0, %s182
    %s197 = sphi 0, %s183
    %s201 = sphi 0, %s201
    %s203 = sphi 0, %s201
    %s204 = sphi 0, %s203
    %s218 = sphi 0, %s204
    %s224 = sphi 0, %s226
    %s227 = sphi 0, %s224
    %s228 = sphi 0, %s227
    %s244 = sphi 0, %s228
  $region4: #{common_model_forward.1} parent=0 // loop_header_branch
    %18 = sbr.rel (%p16) target = $region8
  $region5: #{common_model_forward.1} parent=0 // loop_body
    %s20 = ssub.s32 %s15, 1
    %s21 = ssub.s32 %s15, 2
    %s22 = sadd.s32 %s15, 1
    %s23 = ssub.s32 %s15, %s22
    %p24 = scmp.eq.s32.totalorder %s23, 0
    %s26 = sadd.s32 %s25, 1
    %s27 = scalar_select %p24, %s25, %s26
    %p30 = pneg %p24
    %p31 = scmp.eq.s32.totalorder %s15, 1
    %p32 = por %p30, %p31
    %p33 = scmp.ne.s32.totalorder %s25, %s28
    %p34 = scmp.eq.s32.totalorder %s15, 0
    %p35 = por %p33, %p34
    %p36 = scmp.ne.s32.totalorder %s25, %s28
    %p37 = scmp.eq.s32.totalorder %s20, 1
    %p38 = por %p36, %p37
    %p39 = scmp.ne.s32.totalorder %s28, %s29
    %p40 = scmp.eq.s32.totalorder %s20, 0
    %p41 = por %p39, %p40
    %p42 = scmp.ne.s32.totalorder %s28, %s29
    %p43 = scmp.eq.s32.totalorder %s21, 1
    %p44 = por %p42, %p43
    %p46 = scmp.ne.s32.totalorder %s29, %s45
    %p47 = scmp.eq.s32.totalorder %s21, 0
    %p48 = por %p46, %p47
    %s49 = ssub.s32 %s15, %s22
    %p50 = scmp.eq.s32.totalorder %s49, 0
    %s52 = sadd.s32 %s51, 1
    %s53 = scalar_select %p50, %s51, %s52
    %p56 = pneg %p50
    %p57 = scmp.eq.s32.totalorder %s15, 1
    %p58 = por %p56, %p57
    %p59 = scmp.ne.s32.totalorder %s51, %s54
    %p60 = scmp.eq.s32.totalorder %s15, 0
    %p61 = por %p59, %p60
    %p62 = scmp.ne.s32.totalorder %s51, %s54
    %p63 = scmp.eq.s32.totalorder %s20, 1
    %p64 = por %p62, %p63
    %p65 = scmp.ne.s32.totalorder %s54, %s55
    %p66 = scmp.eq.s32.totalorder %s20, 0
    %p67 = por %p65, %p66
    %p68 = scmp.ne.s32.totalorder %s54, %s55
    %p69 = scmp.eq.s32.totalorder %s21, 1
    %p70 = por %p68, %p69
    %p72 = scmp.ne.s32.totalorder %s55, %s71
    %p73 = scmp.eq.s32.totalorder %s21, 0
    %p74 = por %p72, %p73
    %s76 = sadd.s32 %s75, 1
    %p79 = scmp.eq.s32.totalorder %s15, 1
    %p80 = scmp.ne.s32.totalorder %s75, %s77
    %p81 = scmp.eq.s32.totalorder %s15, 0
    %p82 = por %p80, %p81
    %p83 = scmp.ne.s32.totalorder %s75, %s77
    %p84 = scmp.eq.s32.totalorder %s20, 1
    %p85 = por %p83, %p84
    %p86 = scmp.ne.s32.totalorder %s77, %s78
    %p87 = scmp.eq.s32.totalorder %s20, 0
    %p88 = por %p86, %p87
    %p89 = scmp.ne.s32.totalorder %s77, %s78
    %p90 = scmp.eq.s32.totalorder %s21, 1
    %p91 = por %p89, %p90
    %p93 = scmp.ne.s32.totalorder %s78, %s92
    %p94 = scmp.eq.s32.totalorder %s21, 0
    %p95 = por %p93, %p94
    %s97 = sadd.s32 %s96, 1
    %p100 = scmp.eq.s32.totalorder %s15, 1
    %p101 = scmp.ne.s32.totalorder %s96, %s98
    %p102 = scmp.eq.s32.totalorder %s15, 0
    %p103 = por %p101, %p102
    %p104 = scmp.ne.s32.totalorder %s96, %s98
    %p105 = scmp.eq.s32.totalorder %s20, 1
    %p106 = por %p104, %p105
    %p107 = scmp.ne.s32.totalorder %s98, %s99
    %p108 = scmp.eq.s32.totalorder %s20, 0
    %p109 = por %p107, %p108
    %p110 = scmp.ne.s32.totalorder %s98, %s99
    %p111 = scmp.eq.s32.totalorder %s21, 1
    %p112 = por %p110, %p111
    %p114 = scmp.ne.s32.totalorder %s99, %s113
    %p115 = scmp.eq.s32.totalorder %s21, 0
    %p116 = por %p114, %p115
    %s118 = sadd.s32 %s117, 1
    %p121 = scmp.eq.s32.totalorder %s15, 1
    %p122 = scmp.ne.s32.totalorder %s117, %s119
    %p123 = scmp.eq.s32.totalorder %s15, 0
    %p124 = por %p122, %p123
    %p125 = scmp.ne.s32.totalorder %s117, %s119
    %p126 = scmp.eq.s32.totalorder %s20, 1
    %p127 = por %p125, %p126
    %p128 = scmp.ne.s32.totalorder %s119, %s120
    %p129 = scmp.eq.s32.totalorder %s20, 0
    %p130 = por %p128, %p129
    %p131 = scmp.ne.s32.totalorder %s119, %s120
    %p132 = scmp.eq.s32.totalorder %s21, 1
    %p133 = por %p131, %p132
    %p135 = scmp.ne.s32.totalorder %s120, %s134
    %p136 = scmp.eq.s32.totalorder %s21, 0
    %p137 = por %p135, %p136
    %s139 = sadd.s32 %s138, 1
    %p142 = scmp.eq.s32.totalorder %s15, 1
    %p143 = scmp.ne.s32.totalorder %s138, %s140
    %p144 = scmp.eq.s32.totalorder %s15, 0
    %p145 = por %p143, %p144
    %p146 = scmp.ne.s32.totalorder %s138, %s140
    %p147 = scmp.eq.s32.totalorder %s20, 1
    %p148 = por %p146, %p147
    %p149 = scmp.ne.s32.totalorder %s140, %s141
    %p150 = scmp.eq.s32.totalorder %s20, 0
    %p151 = por %p149, %p150
    %p152 = scmp.ne.s32.totalorder %s140, %s141
    %p153 = scmp.eq.s32.totalorder %s21, 1
    %p154 = por %p152, %p153
    %p156 = scmp.ne.s32.totalorder %s141, %s155
    %p157 = scmp.eq.s32.totalorder %s21, 0
    %p158 = por %p156, %p157
    %s160 = sadd.s32 %s159, 1
    %p163 = scmp.eq.s32.totalorder %s15, 1
    %p164 = scmp.ne.s32.totalorder %s159, %s161
    %p165 = scmp.eq.s32.totalorder %s15, 0
    %p166 = por %p164, %p165
    %p167 = scmp.ne.s32.totalorder %s159, %s161
    %p168 = scmp.eq.s32.totalorder %s20, 1
    %p169 = por %p167, %p168
    %p170 = scmp.ne.s32.totalorder %s161, %s162
    %p171 = scmp.eq.s32.totalorder %s20, 0
    %p172 = por %p170, %p171
    %p173 = scmp.ne.s32.totalorder %s161, %s162
    %p174 = scmp.eq.s32.totalorder %s21, 1
    %p175 = por %p173, %p174
    %p177 = scmp.ne.s32.totalorder %s162, %s176
    %p178 = scmp.eq.s32.totalorder %s21, 0
    %p179 = por %p177, %p178
    %s181 = sadd.s32 %s180, 1
    %p184 = scmp.eq.s32.totalorder %s15, 1
    %p185 = scmp.ne.s32.totalorder %s180, %s182
    %p186 = scmp.eq.s32.totalorder %s15, 0
    %p187 = por %p185, %p186
    %p188 = scmp.ne.s32.totalorder %s180, %s182
    %p189 = scmp.eq.s32.totalorder %s20, 1
    %p190 = por %p188, %p189
    %p191 = scmp.ne.s32.totalorder %s182, %s183
    %p192 = scmp.eq.s32.totalorder %s20, 0
    %p193 = por %p191, %p192
    %p194 = scmp.ne.s32.totalorder %s182, %s183
    %p195 = scmp.eq.s32.totalorder %s21, 1
    %p196 = por %p194, %p195
    %p198 = scmp.ne.s32.totalorder %s183, %s197
    %p199 = scmp.eq.s32.totalorder %s21, 0
    %p200 = por %p198, %p199
    %s202 = sadd.s32 %s201, 1
    %p205 = scmp.eq.s32.totalorder %s15, 1
    %p206 = scmp.ne.s32.totalorder %s201, %s203
    %p207 = scmp.eq.s32.totalorder %s15, 0
    %p208 = por %p206, %p207
    %p209 = scmp.ne.s32.totalorder %s201, %s203
    %p210 = scmp.eq.s32.totalorder %s20, 1
    %p211 = por %p209, %p210
    %p212 = scmp.ne.s32.totalorder %s203, %s204
    %p213 = scmp.eq.s32.totalorder %s20, 0
    %p214 = por %p212, %p213
    %p215 = scmp.ne.s32.totalorder %s203, %s204
    %p216 = scmp.eq.s32.totalorder %s21, 1
    %p217 = por %p215, %p216
    %p219 = scmp.ne.s32.totalorder %s204, %s218
    %p220 = scmp.eq.s32.totalorder %s21, 0
    %p221 = por %p219, %p220
    %s222 = ssub.s32 %s15, %s22
    %p223 = scmp.eq.s32.totalorder %s222, 0
    %s225 = sadd.s32 %s224, 1
    %s226 = scalar_select %p223, %s224, %s225
    %p229 = pneg %p223
    %p230 = scmp.eq.s32.totalorder %s15, 1
    %p231 = por %p229, %p230
    %p232 = scmp.ne.s32.totalorder %s224, %s227
    %p233 = scmp.eq.s32.totalorder %s15, 0
    %p234 = por %p232, %p233
    %p235 = scmp.ne.s32.totalorder %s224, %s227
    %p236 = scmp.eq.s32.totalorder %s20, 1
    %p237 = por %p235, %p236
    %p238 = scmp.ne.s32.totalorder %s227, %s228
    %p239 = scmp.eq.s32.totalorder %s20, 0
    %p240 = por %p238, %p239
    %p241 = scmp.ne.s32.totalorder %s227, %s228
    %p242 = scmp.eq.s32.totalorder %s21, 1
    %p243 = por %p241, %p242
    %p245 = scmp.ne.s32.totalorder %s228, %s244
    %p246 = scmp.eq.s32.totalorder %s21, 0
    %p247 = por %p245, %p246
    %p248 = scmp.le.s32.totalorder 1, %s15
    %p249 = scmp.lt.s32.totalorder %s15, 3
    %p250 = pnand %p248, %p249
    %p251 = pneg %p250
    // Predicated region
    $region9: #{common_model_forward.1} parent=5 // pred_check
      _
    $region10: #{common_model_forward.1} parent=5 // pred_check_branch
      %253 = sbr.rel (%p250) target = $region12
    $region11: #{common_model_forward.1} parent=5 // pred_region
      %s254 = ssub.s32 %s15, 1
      // Predicated region
      $region13: #{common_model_forward.1} parent=11 // pred_check
        %p255 = pneg %p88
      $region14: #{common_model_forward.1} parent=11 // pred_check_branch
        %257 = sbr.rel (%p255) target = $region16
      $region15: #{common_model_forward.1} parent=11 // pred_region
        _
      $region16: #{common_model_forward.1} parent=11 // pred_fallthru
        _
      // Predicated region
      $region17: #{common_model_forward.1} parent=11 // pred_check
        %p258 = pneg %p109
      $region18: #{common_model_forward.1} parent=11 // pred_check_branch
        %260 = sbr.rel (%p258) target = $region20
      $region19: #{common_model_forward.1} parent=11 // pred_region
        _
      $region20: #{common_model_forward.1} parent=11 // pred_fallthru
        _
      // Predicated region
      $region21: #{common_model_forward.1} parent=11 // pred_check
        %p261 = pneg %p130
      $region22: #{common_model_forward.1} parent=11 // pred_check_branch
        %263 = sbr.rel (%p261) target = $region24
      $region23: #{common_model_forward.1} parent=11 // pred_region
        _
      $region24: #{common_model_forward.1} parent=11 // pred_fallthru
        _
      // Predicated region
      $region25: #{common_model_forward.1} parent=11 // pred_check
        %p264 = pneg %p151
      $region26: #{common_model_forward.1} parent=11 // pred_check_branch
        %266 = sbr.rel (%p264) target = $region28
      $region27: #{common_model_forward.1} parent=11 // pred_region
        _
      $region28: #{common_model_forward.1} parent=11 // pred_fallthru
        _
      // Predicated region
      $region29: #{common_model_forward.1} parent=11 // pred_check
        %p267 = pneg %p172
      $region30: #{common_model_forward.1} parent=11 // pred_check_branch
        %269 = sbr.rel (%p267) target = $region32
      $region31: #{common_model_forward.1} parent=11 // pred_region
        _
      $region32: #{common_model_forward.1} parent=11 // pred_fallthru
        _
      // Predicated region
      $region33: #{common_model_forward.1} parent=11 // pred_check
        %p270 = pneg %p193
      $region34: #{common_model_forward.1} parent=11 // pred_check_branch
        %272 = sbr.rel (%p270) target = $region36
      $region35: #{common_model_forward.1} parent=11 // pred_region
        _
      $region36: #{common_model_forward.1} parent=11 // pred_fallthru
        _
      // Predicated region
      $region37: #{common_model_forward.1} parent=11 // pred_check
        %p273 = pneg %p214
      $region38: #{common_model_forward.1} parent=11 // pred_check_branch
        %275 = sbr.rel (%p273) target = $region40
      $region39: #{common_model_forward.1} parent=11 // pred_region
        _
      $region40: #{common_model_forward.1} parent=11 // pred_fallthru
        _
    $region12: #{common_model_forward.1} parent=5 // pred_fallthru
      _
    %p276 = scmp.lt.s32.totalorder %s15, 2
    // Predicated region
    $region41: #{common_model_forward.1} parent=5 // pred_check
      %p277 = pneg %p276
    $region42: #{common_model_forward.1} parent=5 // pred_check_branch
      %279 = sbr.rel (%p277) target = $region44
    $region43: #{common_model_forward.1} parent=5 // pred_region
      // Predicated region
      $region45: #{common_model_forward.1} parent=43 // pred_check
        %p280 = pneg %p35
      $region46: #{common_model_forward.1} parent=43 // pred_check_branch
        %282 = sbr.rel (%p280) target = $region48
      $region47: #{common_model_forward.1} parent=43 // pred_region
        %s283 = smul.u32 2, %s15
        %p284 = scmp.lt.s32.totalorder %s283, 3
        %s285 = scalar_select %p284, %s283, 3
        %s286 = smul.addr %s285, 2
        %s287 = smul.addr %s286, 8
        %s288 = scalar_lea.vmem %s0, %s287
        %s289 = smul.u32 2, %s15
      $region48: #{common_model_forward.1} parent=43 // pred_fallthru
        _
      // Predicated region
      $region49: #{common_model_forward.1} parent=43 // pred_check
        %p290 = pneg %p61
      $region50: #{common_model_forward.1} parent=43 // pred_check_branch
        %292 = sbr.rel (%p290) target = $region52
      $region51: #{common_model_forward.1} parent=43 // pred_region
        %s293 = smul.u32 2, %s15
        %p294 = scmp.lt.s32.totalorder %s293, 3
        %s295 = scalar_select %p294, %s293, 3
        %s296 = smul.addr %s295, 3
        %s297 = smul.addr %s296, 8
        %s298 = scalar_lea.vmem %s1, %s297
        %s299 = smul.u32 2, %s15
      $region52: #{common_model_forward.1} parent=43 // pred_fallthru
        _
    $region44: #{common_model_forward.1} parent=5 // pred_fallthru
      _
    %p300 = scmp.le.s32.totalorder 1, %s15
    %p301 = scmp.lt.s32.totalorder %s15, 3
    %p302 = pnand %p300, %p301
    %p303 = pneg %p302
    // Predicated region
    $region53: #{common_model_forward.1} parent=5 // pred_check
      _
    $region54: #{common_model_forward.1} parent=5 // pred_check_branch
      %305 = sbr.rel (%p302) target = $region56
    $region55: #{common_model_forward.1} parent=5 // pred_region
      %s306 = ssub.s32 %s15, 1
      %s307 = smul.u32 2, %s20
      %p308 = scmp.lt.s32.totalorder %s307, 3
      %s309 = scalar_select %p308, %s307, 3
      %s310 = smul.addr %s309, 2
      %s311 = smul.addr %s310, 8
      %s312 = scalar_lea.vmem %s0, %s311
      %p313 = pneg %p41
      %p314 = pneg %p38
      %s315 = smul.u32 2, %s20
      %p316 = scmp.lt.s32.totalorder %s315, 3
      %s317 = scalar_select %p316, %s315, 3
      %s318 = smul.addr %s317, 3
      %s319 = smul.addr %s318, 8
      %s320 = scalar_lea.vmem %s1, %s319
      %p321 = pneg %p67
      %p322 = pneg %p64
      %p323 = pneg %p88
      %p324 = pneg %p85
      %p325 = pneg %p109
      %p326 = pneg %p106
      %p327 = pneg %p130
      %p328 = pneg %p127
      %p329 = pneg %p151
      %p330 = pneg %p148
      %p331 = pneg %p172
      %p332 = pneg %p169
      %p333 = pneg %p193
      %p334 = pneg %p190
      %p335 = pneg %p214
      %p336 = pneg %p211
      %p337 = pneg %p240
      %p338 = pneg %p237
      %p339 = scmp.lt.s32.totalorder %s20, 1
      %s340 = scalar_select %p339, %s20, 1
      %s341 = smul.addr %s340, 2
      %s342 = scalar_lea.vmem %s9, %s341
      %s343 = smul.u32 2, %s20
      %p344 = scmp.lt.s32.totalorder %s343, 3
      %s345 = scalar_select %p344, %s343, 3
      %s346 = smul.addr %s345, 2
      %s347 = smul.addr %s346, 8
      %s348 = scalar_lea.vmem %s0, %s347
      %s349 = smul.u32 2, %s20
      %s350 = smul.u32 2, %s20
      %p351 = scmp.lt.s32.totalorder %s350, 3
      %s352 = scalar_select %p351, %s350, 3
      %s353 = smul.addr %s352, 3
      %s354 = smul.addr %s353, 8
      %s355 = scalar_lea.vmem %s1, %s354
      %s356 = smul.u32 2, %s20
      %p357 = scmp.lt.s32.totalorder %s20, 1
      %s358 = scalar_select %p357, %s20, 1
      %s359 = smul.addr %s358, 2
      %s360 = scalar_lea.vmem %s9, %s359
      %v361 = vld [vmem:[%s4] sm:$0xff]
      %v362 = vld [vmem:[%s4 + $0x8] sm:$0xff]
      %v363 = vld [vmem:[%s4 + $0x10] sm:$0xff]
      %v364 = vld [vmem:[%s4 + $0x18] sm:$0xff]
      %v365 = vld [vmem:[%s4 + $0x20] sm:$0xff]
      %v366 = vld [vmem:[%s4 + $0x28] sm:$0xff]
      %v367 = vld [vmem:[%s4 + $0x30] sm:$0xff]
      %v368 = vld [vmem:[%s4 + $0x38] sm:$0xff]
      %v369 = vld [vmem:[%s4 + $0x40] sm:$0xff]
      %v370 = vld [vmem:[%s4 + $0x48] sm:$0xff]
      %v371 = vld [vmem:[%s4 + $0x50] sm:$0xff]
      %v372 = vld [vmem:[%s4 + $0x58] sm:$0xff]
      %v373 = vld [vmem:[%s3] sm:$0x7]
      %v374 = vld [vmem:[%s2] sm:$0xff]
      %v375 = vld [vmem:[%s2 + $0x8] sm:$0xff]
      %v376 = vld [vmem:[%s2 + $0x10] sm:$0xff]
      %v377 = vld [vmem:[%s2 + $0x18] sm:$0xff]
      %v378 = vld [vmem:[%s2 + $0x20] sm:$0xff]
      %v379 = vld [vmem:[%s2 + $0x28] sm:$0xff]
      %v380 = vld [vmem:[%s2 + $0x30] sm:$0xff]
      %v381 = vld [vmem:[%s2 + $0x38] sm:$0xff]
      %v382 = vld [vmem:[%s2 + $0x40] sm:$0xff]
      %v383 = vld [vmem:[%s2 + $0x48] sm:$0xff]
      %v384 = vld [vmem:[%s2 + $0x50] sm:$0xff]
      %v385 = vld [vmem:[%s2 + $0x58] sm:$0xff]
      %v386 = vld [vmem:[%s348] sm:$0xff]
      %v387 = vld [vmem:[%s348 + $0x8] sm:$0xff]
      %vm390 = vcmask 1046528
      %v391 = vrot.slane %v386, 1
      %v392 = vrot.slane %v387, 1
      %v393 = vsel %vm390, %v391, %v392
      %394 = vrot.lane.b32.xlu0 %v393, 32
      %v395 = vpop.permute.xlu0 %394
      %396 = vrot.lane.b32.xlu0 %v392, 32
      %v397 = vpop.permute.xlu0 %396
      %vm400 = vcmask 1045504
      %v401 = vrot.slane %v386, 2
      %v402 = vrot.slane %v387, 2
      %v403 = vsel %vm400, %v401, %v402
      %404 = vrot.lane.b32.xlu0 %v403, 64
      %v405 = vpop.permute.xlu0 %404
      %406 = vrot.lane.b32.xlu0 %v402, 64
      %v407 = vpop.permute.xlu0 %406
      %vm410 = vcmask 261120
      %v411 = vsel %vm410, %v386, %v395
      %v412 = vsel %vm410, %v387, %v397
      %vm413 = vcmask 523264
      %v414 = vsel %vm413, %v411, %v405
      %v415 = vsel %vm413, %v412, %v407
      %s416 = scalar_lea.vmem %s348, 16
      %v417 = vld [vmem:[%s416] sm:$0xff]
      %v418 = vld [vmem:[%s416 + $0x8] sm:$0xff]
      %v421 = vrot.slane %v417, 1
      %v422 = vrot.slane %v418, 1
      %v423 = vsel %vm390, %v421, %v422
      %424 = vrot.lane.b32.xlu0 %v423, 32
      %v425 = vpop.permute.xlu0 %424
      %426 = vrot.lane.b32.xlu0 %v422, 32
      %v427 = vpop.permute.xlu0 %426
      %v430 = vrot.slane %v417, 2
      %v431 = vrot.slane %v418, 2
      %v432 = vsel %vm400, %v430, %v431
      %433 = vrot.lane.b32.xlu0 %v432, 64
      %v434 = vpop.permute.xlu0 %433
      %435 = vrot.lane.b32.xlu0 %v431, 64
      %v436 = vpop.permute.xlu0 %435
      %v439 = vsel %vm410, %v417, %v425
      %v440 = vsel %vm410, %v418, %v427
      %v441 = vsel %vm413, %v439, %v434
      %v442 = vsel %vm413, %v440, %v436
      %v445 = vrot.slane %v441, 2
      %v446 = vrot.slane %v442, 2
      %v447 = vsel %vm400, %v445, %v446
      %v449 = vsel %vm400, %v415, %v445
      %v450 = vlaneseq
      %v451 = vshrl.u32 %v450, 7
      %v452 = vsub.s32 0, %v451
      %v453 = vrot.slane %v373, %v452
      %vm454 = vcmask 785408
      %v456 = vsel %vm454, %v414, 0
      %v459 = vsel %vm454, %v449, 0
      %v461 = vsel %vm454, %v447, 0
      %v463 = vsel %vm454, %v446, 0
      %465 = vmatprep.subr.mxu0 0.0
      %466 = vmatpush1.msra.mxu0 %v374
      %467 = vmatprep.subr.mxu0 0.0
      %468 = vmatpush1.msra.mxu0 %v375
      %469 = vmatprep.subr.mxu0 0.0
      %470 = vmatpush1.msra.mxu0 %v376
      %471 = vmatprep.subr.mxu0 0.0
      %472 = vmatpush1.msra.mxu0 %v377
      %473 = vmatprep.subr.mxu0 0.0
      %474 = vmatpush1.msra.mxu0 %v378
      %475 = vmatprep.subr.mxu0 0.0
      %476 = vmatpush1.msra.mxu0 %v379
      %477 = vmatprep.subr.mxu0 0.0
      %478 = vmatpush1.msra.mxu0 %v380
      %479 = vmatprep.subr.mxu0 0.0
      %480 = vmatpush1.msra.mxu0 %v381
      %481 = vmatprep.subr.mxu0 0.0
      %482 = vmatpush1.msra.mxu0 %v382
      %483 = vmatprep.subr.mxu0 0.0
      %484 = vmatpush1.msra.mxu0 %v383
      %485 = vmatprep.subr.mxu0 0.0
      %486 = vmatpush1.msra.mxu0 %v384
      %487 = vmatprep.subr.mxu0 0.0
      %488 = vmatpush1.msra.mxu0 %v385
      %489 = vmatprep.subr.mxu0 0.0
      %490 = vmatpush1.msra.mxu0 0.0
      %491 = vmatprep.subr.mxu0 0.0
      %492 = vmatpush1.msra.mxu0 0.0
      %493 = vmatprep.subr.mxu0 0.0
      %494 = vmatpush1.msra.mxu0 0.0
      %495 = vmatprep.subr.mxu0 0.0
      %496 = vmatpush1.msra.mxu0 0.0
      %497 = vmatprep.subr.mxu0 0.0
      %498 = vmatpush1.msra.mxu0 0.0
      %499 = vmatprep.subr.mxu0 0.0
      %500 = vmatpush1.msra.mxu0 0.0
      %501 = vmatprep.subr.mxu0 0.0
      %502 = vmatpush1.msra.mxu0 0.0
      %503 = vmatprep.subr.mxu0 0.0
      %504 = vmatpush1.msra.mxu0 0.0
      %505 = vmatprep.subr.mxu0 0.0
      %506 = vmatpush1.msra.mxu0 0.0
      %507 = vmatprep.subr.mxu0 0.0
      %508 = vmatpush1.msra.mxu0 0.0
      %509 = vmatprep.subr.mxu0 0.0
      %510 = vmatpush1.msra.mxu0 0.0
      %511 = vmatprep.subr.mxu0 0.0
      %512 = vmatpush1.msra.mxu0 0.0
      %513 = vmatprep.subr.mxu0 0.0
      %514 = vmatpush1.msra.mxu0 0.0
      %515 = vmatprep.subr.mxu0 0.0
      %516 = vmatpush1.msra.mxu0 0.0
      %517 = vmatprep.subr.mxu0 0.0
      %518 = vmatpush1.msra.mxu0 0.0
      %519 = vmatprep.subr.mxu0 0.0
      %520 = vmatpush1.msra.mxu0 0.0
      %521 = vmatprep.subr.mxu0 0.0
      %522 = vmatpush1.msra.mxu0 0.0
      %523 = vmatprep.subr.mxu0 0.0
      %524 = vmatpush1.msra.mxu0 0.0
      %525 = vmatprep.subr.mxu0 0.0
      %526 = vmatpush1.msra.mxu0 0.0
      %527 = vmatprep.subr.mxu0 0.0
      %528 = vmatpush1.msra.mxu0 0.0
      %529 = vmatprep.mubr.f32.mxu0 0.0
      %530 = vmatmul.mubr.f32.gmra.mrb[0].mxu0 %v456
      %v531 = vpop.f32.mrb[0].mxu0
      %v532 = vadd.f32 %v453, %v531
      %v533 = vpop.f32.mrb[0].mxu0
      %534 = vmatprep.mubr.f32.mxu0 0.0
      %535 = vmatmul.mubr.f32.gmra.mrb[0].mxu0 %v459
      %v536 = vpop.f32.mrb[0].mxu0
      %v537 = vadd.f32 %v453, %v536
      %v538 = vpop.f32.mrb[0].mxu0
      %539 = vmatprep.mubr.f32.mxu0 0.0
      %540 = vmatmul.mubr.f32.gmra.mrb[0].mxu0 %v461
      %v541 = vpop.f32.mrb[0].mxu0
      %v542 = vadd.f32 %v453, %v541
      %v543 = vpop.f32.mrb[0].mxu0
      %544 = vmatprep.mubr.f32.mxu0 0.0
      %545 = vmatmul.mubr.f32.gmra.mrb[0].mxu0 %v463
      %v546 = vpop.f32.mrb[0].mxu0
      %v547 = vadd.f32 %v453, %v546
      %v548 = vpop.f32.mrb[0].mxu0
      %549 = vdwg.mxu0
      %v550 = vmax.f32 %v532, 0.0
      %v551 = vmax.f32 %v537, 0.0
      %v552 = vmax.f32 %v542, 0.0
      %v553 = vmax.f32 %v547, 0.0
      %vm558 = vcmask 1040384
      %v559 = vrot.slane %v550, 7
      %v560 = vrot.slane %v551, 7
      %v561 = vsel %vm558, %v559, %v560
      %v562 = vrot.slane %v552, 7
      %v563 = vsel %vm558, %v560, %v562
      %v564 = vrot.slane %v553, 7
      %v565 = vsel %vm558, %v562, %v564
      %v570 = vsel %vm558, 0.0, %v559
      %vm571 = vcmask 1044480
      %v572 = vsel %vm571, %v565, 0.0
      %v573 = vlaneseq
      %v574 = vshrl.u32 %v573, 7
      %v575 = vadd.s32 %v574, 8
      %v576 = vadd.s32 %v574, 16
      %v577 = vadd.s32 %v574, 24
      %vm578 = vcmp.ne.s32.totalorder %v574, 0
      %vm579 = vcmp.ne.s32.totalorder %v575, 0
      %vm580 = vcmp.ne.s32.totalorder %v576, 0
      %vm581 = vcmp.ne.s32.totalorder %v577, 0
      %v582 = vsel %vm578, 1, 0
      %v583 = vsel %vm579, 1, 0
      %v584 = vsel %vm580, 1, 0
      %v585 = vsel %vm581, 1, 0
      %v586 = vcvt.s32.f32 %v582
      %v587 = vcvt.s32.f32 %v583
      %v588 = vcvt.s32.f32 %v584
      %v589 = vcvt.s32.f32 %v585
      %vm590 = vcmp.ne.s32.totalorder %v574, 13
      %vm591 = vcmp.ne.s32.totalorder %v575, 13
      %vm592 = vcmp.ne.s32.totalorder %v576, 13
      %vm593 = vcmp.ne.s32.totalorder %v577, 13
      %v594 = vsel %vm590, 1, 0
      %v595 = vsel %vm591, 1, 0
      %v596 = vsel %vm592, 1, 0
      %v597 = vsel %vm593, 1, 0
      %v598 = vcvt.s32.f32 %v594
      %v599 = vcvt.s32.f32 %v595
      %v600 = vcvt.s32.f32 %v596
      %v601 = vcvt.s32.f32 %v597
      %vm602 = vcmp.ne.s32.totalorder %v574, 14
      %vm603 = vcmp.ne.s32.totalorder %v575, 14
      %vm604 = vcmp.ne.s32.totalorder %v576, 14
      %vm605 = vcmp.ne.s32.totalorder %v577, 14
      %v606 = vsel %vm602, 1, 0
      %v607 = vsel %vm603, 1, 0
      %v608 = vsel %vm604, 1, 0
      %v609 = vsel %vm605, 1, 0
      %v610 = vcvt.s32.f32 %v606
      %v611 = vcvt.s32.f32 %v607
      %v612 = vcvt.s32.f32 %v608
      %v613 = vcvt.s32.f32 %v609
      %v614 = vmul.f32 %v586, %v610
      %v615 = vmul.f32 %v587, %v611
      %v616 = vmul.f32 %v588, %v612
      %v617 = vmul.f32 %v589, %v613
      %vm618 = vcmp.ne.s32.totalorder %v574, 27
      %vm619 = vcmp.ne.s32.totalorder %v575, 27
      %vm620 = vcmp.ne.s32.totalorder %v576, 27
      %vm621 = vcmp.ne.s32.totalorder %v577, 27
      %v622 = vsel %vm618, 1, 0
      %v623 = vsel %vm619, 1, 0
      %v624 = vsel %vm620, 1, 0
      %v625 = vsel %vm621, 1, 0
      %v626 = vcvt.s32.f32 %v622
      %v627 = vcvt.s32.f32 %v623
      %v628 = vcvt.s32.f32 %v624
      %v629 = vcvt.s32.f32 %v625
      %v630 = vmul.f32 %v598, %v626
      %v631 = vmul.f32 %v599, %v627
      %v632 = vmul.f32 %v600, %v628
      %v633 = vmul.f32 %v601, %v629
      %v634 = vmul.f32 %v570, %v614
      %v635 = vmul.f32 %v561, %v615
      %v636 = vmul.f32 %v563, %v616
      %v637 = vmul.f32 %v572, %v617
      %vm642 = vcmask 1041408
      %v643 = vrot.slane %v630, 6
      %v644 = vrot.slane %v631, 6
      %v645 = vsel %vm642, %v643, %v644
      %v646 = vrot.slane %v632, 6
      %v647 = vsel %vm642, %v644, %v646
      %v648 = vrot.slane %v633, 6
      %v649 = vsel %vm642, %v646, %v648
      %v654 = vmul.f32 %v570, %v643
      %v655 = vmul.f32 %v561, %v645
      %v656 = vmul.f32 %v563, %v647
      %v657 = vmul.f32 %v572, %v649
      %658 = vrot.lane.b32.xlu0 %v550, 32
      %v659 = vpop.permute.xlu0 %658
      %660 = vrot.lane.b32.xlu0 %v551, 32
      %v661 = vpop.permute.xlu0 %660
      %662 = vrot.lane.b32.xlu0 %v552, 32
      %v663 = vpop.permute.xlu0 %662
      %664 = vrot.lane.b32.xlu0 %v553, 32
      %v665 = vpop.permute.xlu0 %664
      %v674 = vrot.slane %v654, 2
      %v675 = vrot.slane %v655, 2
      %v676 = vsel %vm400, %v674, %v675
      %v677 = vrot.slane %v656, 2
      %v678 = vsel %vm400, %v675, %v677
      %v679 = vrot.slane %v657, 2
      %v680 = vsel %vm400, %v677, %v679
      %681 = vrot.lane.b32.xlu0 %v676, 64
      %v682 = vpop.permute.xlu0 %681
      %683 = vrot.lane.b32.xlu0 %v678, 64
      %v684 = vpop.permute.xlu0 %683
      %685 = vrot.lane.b32.xlu0 %v680, 64
      %v686 = vpop.permute.xlu0 %685
      %687 = vrot.lane.b32.xlu0 %v679, 64
      %v688 = vpop.permute.xlu0 %687
      %v693 = vsel %vm410, %v634, %v659
      %v694 = vsel %vm410, %v635, %v661
      %v695 = vsel %vm410, %v636, %v663
      %v696 = vsel %vm410, %v637, %v665
      %v697 = vsel %vm413, %v693, %v682
      %v698 = vsel %vm413, %v694, %v684
      %v699 = vsel %vm413, %v695, %v686
      %v700 = vsel %vm413, %v696, %v688
      %v701 = vlaneseq
      %v702 = vshrl.u32 %v701, 7
      %v703 = vsub.s32 2, %v702
      %v704 = vrot.slane %v373, %v703
      %v706 = vsel %vm454, %v697, 0
      %v709 = vsel %vm454, %v698, 0
      %v712 = vsel %vm454, %v699, 0
      %v715 = vsel %vm454, %v700, 0
      %717 = vmatprep.subr.mxu0 0.0
      %718 = vmatpush1.msra.mxu0 %v361
      %719 = vmatprep.subr.mxu0 0.0
      %720 = vmatpush1.msra.mxu0 %v362
      %721 = vmatprep.subr.mxu0 0.0
      %722 = vmatpush1.msra.mxu0 %v363
      %723 = vmatprep.subr.mxu0 0.0
      %724 = vmatpush1.msra.mxu0 %v364
      %725 = vmatprep.subr.mxu0 0.0
      %726 = vmatpush1.msra.mxu0 %v365
      %727 = vmatprep.subr.mxu0 0.0
      %728 = vmatpush1.msra.mxu0 %v366
      %729 = vmatprep.subr.mxu0 0.0
      %730 = vmatpush1.msra.mxu0 %v367
      %731 = vmatprep.subr.mxu0 0.0
      %732 = vmatpush1.msra.mxu0 %v368
      %733 = vmatprep.subr.mxu0 0.0
      %734 = vmatpush1.msra.mxu0 %v369
      %735 = vmatprep.subr.mxu0 0.0
      %736 = vmatpush1.msra.mxu0 %v370
      %737 = vmatprep.subr.mxu0 0.0
      %738 = vmatpush1.msra.mxu0 %v371
      %739 = vmatprep.subr.mxu0 0.0
      %740 = vmatpush1.msra.mxu0 %v372
      %741 = vmatprep.subr.mxu0 0.0
      %742 = vmatpush1.msra.mxu0 0.0
      %743 = vmatprep.subr.mxu0 0.0
      %744 = vmatpush1.msra.mxu0 0.0
      %745 = vmatprep.subr.mxu0 0.0
      %746 = vmatpush1.msra.mxu0 0.0
      %747 = vmatprep.subr.mxu0 0.0
      %748 = vmatpush1.msra.mxu0 0.0
      %749 = vmatprep.subr.mxu0 0.0
      %750 = vmatpush1.msra.mxu0 0.0
      %751 = vmatprep.subr.mxu0 0.0
      %752 = vmatpush1.msra.mxu0 0.0
      %753 = vmatprep.subr.mxu0 0.0
      %754 = vmatpush1.msra.mxu0 0.0
      %755 = vmatprep.subr.mxu0 0.0
      %756 = vmatpush1.msra.mxu0 0.0
      %757 = vmatprep.subr.mxu0 0.0
      %758 = vmatpush1.msra.mxu0 0.0
      %759 = vmatprep.subr.mxu0 0.0
      %760 = vmatpush1.msra.mxu0 0.0
      %761 = vmatprep.subr.mxu0 0.0
      %762 = vmatpush1.msra.mxu0 0.0
      %763 = vmatprep.subr.mxu0 0.0
      %764 = vmatpush1.msra.mxu0 0.0
      %765 = vmatprep.subr.mxu0 0.0
      %766 = vmatpush1.msra.mxu0 0.0
      %767 = vmatprep.subr.mxu0 0.0
      %768 = vmatpush1.msra.mxu0 0.0
      %769 = vmatprep.subr.mxu0 0.0
      %770 = vmatpush1.msra.mxu0 0.0
      %771 = vmatprep.subr.mxu0 0.0
      %772 = vmatpush1.msra.mxu0 0.0
      %773 = vmatprep.subr.mxu0 0.0
      %774 = vmatpush1.msra.mxu0 0.0
      %775 = vmatprep.subr.mxu0 0.0
      %776 = vmatpush1.msra.mxu0 0.0
      %777 = vmatprep.subr.mxu0 0.0
      %778 = vmatpush1.msra.mxu0 0.0
      %779 = vmatprep.subr.mxu0 0.0
      %780 = vmatpush1.msra.mxu0 0.0
      %781 = vmatprep.mubr.f32.mxu0 0.0
      %782 = vmatmul.mubr.f32.gmra.mrb[0].mxu0 %v706
      %v783 = vpop.f32.mrb[0].mxu0
      %v784 = vadd.f32 %v704, %v783
      %v785 = vpop.f32.mrb[0].mxu0
      %786 = vmatprep.mubr.f32.mxu0 0.0
      %787 = vmatmul.mubr.f32.gmra.mrb[0].mxu0 %v709
      %v788 = vpop.f32.mrb[0].mxu0
      %v789 = vadd.f32 %v704, %v788
      %v790 = vpop.f32.mrb[0].mxu0
      %791 = vmatprep.mubr.f32.mxu0 0.0
      %792 = vmatmul.mubr.f32.gmra.mrb[0].mxu0 %v712
      %v793 = vpop.f32.mrb[0].mxu0
      %v794 = vadd.f32 %v704, %v793
      %v795 = vpop.f32.mrb[0].mxu0
      %796 = vmatprep.mubr.f32.mxu0 0.0
      %797 = vmatmul.mubr.f32.gmra.mrb[0].mxu0 %v715
      %v798 = vpop.f32.mrb[0].mxu0
      %v799 = vadd.f32 %v704, %v798
      %v800 = vpop.f32.mrb[0].mxu0
      %801 = vdwg.mxu0
      %v802 = vmax.f32 %v784, 0.0
      %v803 = vmax.f32 %v789, 0.0
      %v804 = vmax.f32 %v794, 0.0
      %v805 = vmax.f32 %v799, 0.0
      %v810 = vrot.slane %v802, 7
      %v811 = vrot.slane %v803, 7
      %v812 = vsel %vm558, %v810, %v811
      %v813 = vrot.slane %v804, 7
      %v814 = vsel %vm558, %v811, %v813
      %v815 = vrot.slane %v805, 7
      %v816 = vsel %vm558, %v813, %v815
      %v821 = vsel %vm558, 0.0, %v810
      %v822 = vsel %vm571, %v816, 0.0
      %v823 = vmul.f32 %v821, %v614
      %v824 = vmul.f32 %v812, %v615
      %v825 = vmul.f32 %v814, %v616
      %v826 = vmul.f32 %v822, %v617
      %v827 = vmul.f32 %v821, %v643
      %v828 = vmul.f32 %v812, %v645
      %v829 = vmul.f32 %v814, %v647
      %v830 = vmul.f32 %v822, %v649
      %831 = vrot.lane.b32.xlu0 %v802, 32
      %v832 = vpop.permute.xlu0 %831
      %833 = vrot.lane.b32.xlu0 %v803, 32
      %v834 = vpop.permute.xlu0 %833
      %835 = vrot.lane.b32.xlu0 %v804, 32
      %v836 = vpop.permute.xlu0 %835
      %837 = vrot.lane.b32.xlu0 %v805, 32
      %v838 = vpop.permute.xlu0 %837
      %v847 = vrot.slane %v827, 2
      %v848 = vrot.slane %v828, 2
      %v849 = vsel %vm400, %v847, %v848
      %v850 = vrot.slane %v829, 2
      %v851 = vsel %vm400, %v848, %v850
      %v852 = vrot.slane %v830, 2
      %v853 = vsel %vm400, %v850, %v852
      %854 = vrot.lane.b32.xlu0 %v849, 64
      %v855 = vpop.permute.xlu0 %854
      %856 = vrot.lane.b32.xlu0 %v851, 64
      %v857 = vpop.permute.xlu0 %856
      %858 = vrot.lane.b32.xlu0 %v853, 64
      %v859 = vpop.permute.xlu0 %858
      %860 = vrot.lane.b32.xlu0 %v852, 64
      %v861 = vpop.permute.xlu0 %860
      %v866 = vsel %vm410, %v823, %v832
      %v867 = vsel %vm410, %v824, %v834
      %v868 = vsel %vm410, %v825, %v836
      %v869 = vsel %vm410, %v826, %v838
      %v870 = vsel %vm413, %v866, %v855
      %v871 = vsel %vm413, %v867, %v857
      %v872 = vsel %vm413, %v868, %v859
      %v873 = vsel %vm413, %v869, %v861
      %v875 = vsel %vm454, %v870, 0
      %v878 = vsel %vm454, %v871, 0
      %v881 = vsel %vm454, %v872, 0
      %v884 = vsel %vm454, %v873, 0
      %886 = vmatprep.subr.mxu0 0.0
      %887 = vmatpush1.msra.mxu0 %v361
      %888 = vmatprep.subr.mxu0 0.0
      %889 = vmatpush1.msra.mxu0 %v362
      %890 = vmatprep.subr.mxu0 0.0
      %891 = vmatpush1.msra.mxu0 %v363
      %892 = vmatprep.subr.mxu0 0.0
      %893 = vmatpush1.msra.mxu0 %v364
      %894 = vmatprep.subr.mxu0 0.0
      %895 = vmatpush1.msra.mxu0 %v365
      %896 = vmatprep.subr.mxu0 0.0
      %897 = vmatpush1.msra.mxu0 %v366
      %898 = vmatprep.subr.mxu0 0.0
      %899 = vmatpush1.msra.mxu0 %v367
      %900 = vmatprep.subr.mxu0 0.0
      %901 = vmatpush1.msra.mxu0 %v368
      %902 = vmatprep.subr.mxu0 0.0
      %903 = vmatpush1.msra.mxu0 %v369
      %904 = vmatprep.subr.mxu0 0.0
      %905 = vmatpush1.msra.mxu0 %v370
      %906 = vmatprep.subr.mxu0 0.0
      %907 = vmatpush1.msra.mxu0 %v371
      %908 = vmatprep.subr.mxu0 0.0
      %909 = vmatpush1.msra.mxu0 %v372
      %910 = vmatprep.subr.mxu0 0.0
      %911 = vmatpush1.msra.mxu0 0.0
      %912 = vmatprep.subr.mxu0 0.0
      %913 = vmatpush1.msra.mxu0 0.0
      %914 = vmatprep.subr.mxu0 0.0
      %915 = vmatpush1.msra.mxu0 0.0
      %916 = vmatprep.subr.mxu0 0.0
      %917 = vmatpush1.msra.mxu0 0.0
      %918 = vmatprep.subr.mxu0 0.0
      %919 = vmatpush1.msra.mxu0 0.0
      %920 = vmatprep.subr.mxu0 0.0
      %921 = vmatpush1.msra.mxu0 0.0
      %922 = vmatprep.subr.mxu0 0.0
      %923 = vmatpush1.msra.mxu0 0.0
      %924 = vmatprep.subr.mxu0 0.0
      %925 = vmatpush1.msra.mxu0 0.0
      %926 = vmatprep.subr.mxu0 0.0
      %927 = vmatpush1.msra.mxu0 0.0
      %928 = vmatprep.subr.mxu0 0.0
      %929 = vmatpush1.msra.mxu0 0.0
      %930 = vmatprep.subr.mxu0 0.0
      %931 = vmatpush1.msra.mxu0 0.0
      %932 = vmatprep.subr.mxu0 0.0
      %933 = vmatpush1.msra.mxu0 0.0
      %934 = vmatprep.subr.mxu0 0.0
      %935 = vmatpush1.msra.mxu0 0.0
      %936 = vmatprep.subr.mxu0 0.0
      %937 = vmatpush1.msra.mxu0 0.0
      %938 = vmatprep.subr.mxu0 0.0
      %939 = vmatpush1.msra.mxu0 0.0
      %940 = vmatprep.subr.mxu0 0.0
      %941 = vmatpush1.msra.mxu0 0.0
      %942 = vmatprep.subr.mxu0 0.0
      %943 = vmatpush1.msra.mxu0 0.0
      %944 = vmatprep.subr.mxu0 0.0
      %945 = vmatpush1.msra.mxu0 0.0
      %946 = vmatprep.subr.mxu0 0.0
      %947 = vmatpush1.msra.mxu0 0.0
      %948 = vmatprep.subr.mxu0 0.0
      %949 = vmatpush1.msra.mxu0 0.0
      %950 = vmatprep.mubr.f32.mxu0 0.0
      %951 = vmatmul.mubr.f32.gmra.mrb[0].mxu0 %v875
      %v952 = vpop.f32.mrb[0].mxu0
      %v953 = vadd.f32 %v704, %v952
      %v954 = vpop.f32.mrb[0].mxu0
      %955 = vmatprep.mubr.f32.mxu0 0.0
      %956 = vmatmul.mubr.f32.gmra.mrb[0].mxu0 %v878
      %v957 = vpop.f32.mrb[0].mxu0
      %v958 = vadd.f32 %v704, %v957
      %v959 = vpop.f32.mrb[0].mxu0
      %960 = vmatprep.mubr.f32.mxu0 0.0
      %961 = vmatmul.mubr.f32.gmra.mrb[0].mxu0 %v881
      %v962 = vpop.f32.mrb[0].mxu0
      %v963 = vadd.f32 %v704, %v962
      %v964 = vpop.f32.mrb[0].mxu0
      %965 = vmatprep.mubr.f32.mxu0 0.0
      %966 = vmatmul.mubr.f32.gmra.mrb[0].mxu0 %v884
      %v967 = vpop.f32.mrb[0].mxu0
      %v968 = vadd.f32 %v704, %v967
      %v969 = vpop.f32.mrb[0].mxu0
      %970 = vdwg.mxu0
      %v971 = vlaneseq
      %v972 = vand.u32 %v971, 127
      %v973 = vmul.u32 %v574, 2
      %vm974 = vcmp.eq.s32.totalorder %v972, %v973
      %vm975 = vcmp.lt.s32.totalorder %v973, 14
      %vm976 = vmand %vm974, %vm975
      %v977 = vsel %vm976, 1, 0
      %v978 = vcvt.s32.f32 %v977
      %v979 = vadd.s32 %v973, 14
      %vm980 = vcmp.eq.s32.totalorder %v972, %v979
      %vm981 = vmand %vm980, %vm975
      %v982 = vsel %vm981, 1, 0
      %v983 = vcvt.s32.f32 %v982
      %v984 = vadd.s32 %v973, 1
      %vm985 = vcmp.eq.s32.totalorder %v972, %v984
      %vm986 = vcmp.lt.s32.totalorder %v984, 14
      %vm987 = vmand %vm985, %vm986
      %v988 = vsel %vm987, 1, 0
      %v989 = vcvt.s32.f32 %v988
      %v990 = vadd.s32 %v979, 1
      %vm991 = vcmp.eq.s32.totalorder %v972, %v990
      %vm992 = vmand %vm991, %vm986
      %v993 = vsel %vm992, 1, 0
      %v994 = vcvt.s32.f32 %v993
      %v995 = vadd.s32 %v973, 2
      %vm996 = vcmp.eq.s32.totalorder %v972, %v995
      %vm997 = vcmp.lt.s32.totalorder %v995, 14
      %vm998 = vmand %vm996, %vm997
      %v999 = vsel %vm998, 1, 0
      %v1000 = vcvt.s32.f32 %v999
      %v1001 = vadd.s32 %v979, 2
      %vm1002 = vcmp.eq.s32.totalorder %v972, %v1001
      %vm1003 = vmand %vm1002, %vm997
      %v1004 = vsel %vm1003, 1, 0
      %v1005 = vcvt.s32.f32 %v1004
      %v1007 = vrot.slane %v983, 1
      %v1010 = vrot.slane %v989, 2
      %v1013 = vrot.slane %v994, 3
      %v1016 = vrot.slane %v1000, 4
      %v1019 = vrot.slane %v1005, 5
      %v1021 = vsel %vm390, %v978, %v1007
      %v1022 = vsel %vm400, %v1007, %v1010
      %v1023 = vsel %vm571, %v1010, %v1013
      %vm1024 = vcmask 1043456
      %v1025 = vsel %vm1024, %v1013, %v1016
      %vm1026 = vcmask 1042432
      %v1027 = vsel %vm1026, %v1016, %v1019
      %vm1028 = vcmask 228352
      %v1030 = vsel %vm1028, %v1021, 0
      %v1033 = vsel %vm1028, %v1022, 0
      %v1036 = vsel %vm1028, %v1023, 0
      %v1039 = vsel %vm1028, %v1025, 0
      %v1042 = vsel %vm1028, %v1027, 0
      %v1044 = vsel %vm1028, %v1019, 0
      %v1047 = vsel %vm1024, %v968, 0
      %1049 = vmatprep.subr.mxu0 0.0
      %1050 = vmatpush1.msra.mxu0 %v953
      %1051 = vmatprep.subr.mxu0 0.0
      %1052 = vmatpush1.msra.mxu0 %v958
      %1053 = vmatprep.subr.mxu0 0.0
      %1054 = vmatpush1.msra.mxu0 %v963
      %1055 = vmatprep.subr.mxu0 0.0
      %1056 = vmatpush1.msra.mxu0 %v1047
      %1057 = vmatprep.subr.mxu0 0.0
      %1058 = vmatpush1.msra.mxu0 0.0
      %1059 = vmatprep.subr.mxu0 0.0
      %1060 = vmatpush1.msra.mxu0 0.0
      %1061 = vmatprep.subr.mxu0 0.0
      %1062 = vmatpush1.msra.mxu0 0.0
      %1063 = vmatprep.subr.mxu0 0.0
      %1064 = vmatpush1.msra.mxu0 0.0
      %1065 = vmatprep.subr.mxu0 0.0
      %1066 = vmatpush1.msra.mxu0 0.0
      %1067 = vmatprep.subr.mxu0 0.0
      %1068 = vmatpush1.msra.mxu0 0.0
      %1069 = vmatprep.subr.mxu0 0.0
      %1070 = vmatpush1.msra.mxu0 0.0
      %1071 = vmatprep.subr.mxu0 0.0
      %1072 = vmatpush1.msra.mxu0 0.0
      %1073 = vmatprep.subr.mxu0 0.0
      %1074 = vmatpush1.msra.mxu0 0.0
      %1075 = vmatprep.subr.mxu0 0.0
      %1076 = vmatpush1.msra.mxu0 0.0
      %1077 = vmatprep.subr.mxu0 0.0
      %1078 = vmatpush1.msra.mxu0 0.0
      %1079 = vmatprep.subr.mxu0 0.0
      %1080 = vmatpush1.msra.mxu0 0.0
      %1081 = vmatprep.subr.mxu0 0.0
      %1082 = vmatpush1.msra.mxu0 0.0
      %1083 = vmatprep.subr.mxu0 0.0
      %1084 = vmatpush1.msra.mxu0 0.0
      %1085 = vmatprep.subr.mxu0 0.0
      %1086 = vmatpush1.msra.mxu0 0.0
      %1087 = vmatprep.subr.mxu0 0.0
      %1088 = vmatpush1.msra.mxu0 0.0
      %1089 = vmatprep.subr.mxu0 0.0
      %1090 = vmatpush1.msra.mxu0 0.0
      %1091 = vmatprep.subr.mxu0 0.0
      %1092 = vmatpush1.msra.mxu0 0.0
      %1093 = vmatprep.subr.mxu0 0.0
      %1094 = vmatpush1.msra.mxu0 0.0
      %1095 = vmatprep.subr.mxu0 0.0
      %1096 = vmatpush1.msra.mxu0 0.0
      %1097 = vmatprep.subr.mxu0 0.0
      %1098 = vmatpush1.msra.mxu0 0.0
      %1099 = vmatprep.subr.mxu0 0.0
      %1100 = vmatpush1.msra.mxu0 0.0
      %1101 = vmatprep.subr.mxu0 0.0
      %1102 = vmatpush1.msra.mxu0 0.0
      %1103 = vmatprep.subr.mxu0 0.0
      %1104 = vmatpush1.msra.mxu0 0.0
      %1105 = vmatprep.subr.mxu0 0.0
      %1106 = vmatpush1.msra.mxu0 0.0
      %1107 = vmatprep.subr.mxu0 0.0
      %1108 = vmatpush1.msra.mxu0 0.0
      %1109 = vmatprep.subr.mxu0 0.0
      %1110 = vmatpush1.msra.mxu0 0.0
      %1111 = vmatprep.subr.mxu0 0.0
      %1112 = vmatpush1.msra.mxu0 0.0
      %1113 = vmatprep.mubr.f32.mxu0 0.0
      %1114 = vmatmul.mubr.f32.gmra.mrb[0].mxu0 %v1030
      %v1115 = vpop.f32.mrb[0].mxu0
      %v1116 = vadd.f32 0.0, %v1115
      %v1117 = vpop.f32.mrb[0].mxu0
      %1118 = vmatprep.mubr.f32.mxu0 0.0
      %1119 = vmatmul.mubr.f32.gmra.mrb[0].mxu0 %v1033
      %v1120 = vpop.f32.mrb[0].mxu0
      %v1121 = vadd.f32 0.0, %v1120
      %v1122 = vpop.f32.mrb[0].mxu0
      %1123 = vmatprep.mubr.f32.mxu0 0.0
      %1124 = vmatmul.mubr.f32.gmra.mrb[0].mxu0 %v1036
      %v1125 = vpop.f32.mrb[0].mxu0
      %v1126 = vadd.f32 0.0, %v1125
      %v1127 = vpop.f32.mrb[0].mxu0
      %1128 = vmatprep.mubr.f32.mxu0 0.0
      %1129 = vmatmul.mubr.f32.gmra.mrb[0].mxu0 %v1039
      %v1130 = vpop.f32.mrb[0].mxu0
      %v1131 = vadd.f32 0.0, %v1130
      %v1132 = vpop.f32.mrb[0].mxu0
      %1133 = vmatprep.mubr.f32.mxu0 0.0
      %1134 = vmatmul.mubr.f32.gmra.mrb[0].mxu0 %v1042
      %v1135 = vpop.f32.mrb[0].mxu0
      %v1136 = vadd.f32 0.0, %v1135
      %v1137 = vpop.f32.mrb[0].mxu0
      %1138 = vmatprep.mubr.f32.mxu0 0.0
      %1139 = vmatmul.mubr.f32.gmra.mrb[0].mxu0 %v1044
      %v1140 = vpop.f32.mrb[0].mxu0
      %v1141 = vadd.f32 0.0, %v1140
      %v1142 = vpop.f32.mrb[0].mxu0
      %1143 = vdwg.mxu0
      %v1147 = vrot.slane %v1121, 6
      %v1148 = vrot.slane %v1126, 6
      %v1149 = vsel %vm642, %v1147, %v1148
      %v1150 = vrot.slane %v1131, 6
      %v1151 = vsel %vm642, %v1148, %v1150
      %v1154 = vmax.f32 %v1116, %v1149
      %v1155 = vmax.f32 %v1121, %v1151
      %v1158 = vrot.slane %v1131, 4
      %v1159 = vrot.slane %v1136, 4
      %v1160 = vsel %vm1024, %v1158, %v1159
      %v1161 = vrot.slane %v1141, 4
      %v1162 = vsel %vm1024, %v1159, %v1161
      %v1165 = vmax.f32 %v1154, %v1160
      %v1166 = vmax.f32 %v1155, %v1162
      %v1167 = vmax.f32 %v1165, 0.0
      %v1168 = vmax.f32 %v1166, 0.0
      %v1171 = vrot.slane %v1167, 7
      %v1172 = vrot.slane %v1168, 7
      %v1173 = vsel %vm558, %v1171, %v1172
      %v1176 = vsel %vm558, 0.0, %v1171
      %v1177 = vsel %vm390, %v1173, 0.0
      %vm1178 = vcmp.ne.s32.totalorder %v574, 6
      %vm1179 = vcmp.ne.s32.totalorder %v575, 6
      %v1180 = vsel %vm1178, 1, 0
      %v1181 = vsel %vm1179, 1, 0
      %v1182 = vcvt.s32.f32 %v1180
      %v1183 = vcvt.s32.f32 %v1181
      %vm1184 = vcmp.ne.s32.totalorder %v574, 7
      %vm1185 = vcmp.ne.s32.totalorder %v575, 7
      %v1186 = vsel %vm1184, 1, 0
      %v1187 = vsel %vm1185, 1, 0
      %v1188 = vcvt.s32.f32 %v1186
      %v1189 = vcvt.s32.f32 %v1187
      %v1190 = vmul.f32 %v586, %v1188
      %v1191 = vmul.f32 %v587, %v1189
      %v1192 = vmul.f32 %v1182, %v598
      %v1193 = vmul.f32 %v1183, %v599
      %v1194 = vmul.f32 %v1176, %v1190
      %v1195 = vmul.f32 %v1177, %v1191
      %v1198 = vrot.slane %v1192, 6
      %v1199 = vrot.slane %v1193, 6
      %v1200 = vsel %vm642, %v1198, %v1199
      %v1203 = vmul.f32 %v1176, %v1198
      %v1204 = vmul.f32 %v1177, %v1200
      %1205 = vrot.lane.b32.xlu0 %v1167, 32
      %v1206 = vpop.permute.xlu0 %1205
      %1207 = vrot.lane.b32.xlu0 %v1168, 32
      %v1208 = vpop.permute.xlu0 %1207
      %v1213 = vrot.slane %v1203, 2
      %v1214 = vrot.slane %v1204, 2
      %v1215 = vsel %vm400, %v1213, %v1214
      %1216 = vrot.lane.b32.xlu0 %v1215, 64
      %v1217 = vpop.permute.xlu0 %1216
      %1218 = vrot.lane.b32.xlu0 %v1214, 64
      %v1219 = vpop.permute.xlu0 %1218
      %v1222 = vsel %vm410, %v1194, %v1206
      %v1223 = vsel %vm410, %v1195, %v1208
      %v1224 = vsel %vm413, %v1222, %v1217
      %v1225 = vsel %vm413, %v1223, %v1219
      %v1227 = vsel %vm454, %v1224, 0
      %v1230 = vsel %vm454, %v1225, 0
      %1232 = vmatprep.subr.mxu0 0.0
      %1233 = vmatpush1.msra.mxu0 %v361
      %1234 = vmatprep.subr.mxu0 0.0
      %1235 = vmatpush1.msra.mxu0 %v362
      %1236 = vmatprep.subr.mxu0 0.0
      %1237 = vmatpush1.msra.mxu0 %v363
      %1238 = vmatprep.subr.mxu0 0.0
      %1239 = vmatpush1.msra.mxu0 %v364
      %1240 = vmatprep.subr.mxu0 0.0
      %1241 = vmatpush1.msra.mxu0 %v365
      %1242 = vmatprep.subr.mxu0 0.0
      %1243 = vmatpush1.msra.mxu0 %v366
      %1244 = vmatprep.subr.mxu0 0.0
      %1245 = vmatpush1.msra.mxu0 %v367
      %1246 = vmatprep.subr.mxu0 0.0
      %1247 = vmatpush1.msra.mxu0 %v368
      %1248 = vmatprep.subr.mxu0 0.0
      %1249 = vmatpush1.msra.mxu0 %v369
      %1250 = vmatprep.subr.mxu0 0.0
      %1251 = vmatpush1.msra.mxu0 %v370
      %1252 = vmatprep.subr.mxu0 0.0
      %1253 = vmatpush1.msra.mxu0 %v371
      %1254 = vmatprep.subr.mxu0 0.0
      %1255 = vmatpush1.msra.mxu0 %v372
      %1256 = vmatprep.subr.mxu0 0.0
      %1257 = vmatpush1.msra.mxu0 0.0
      %1258 = vmatprep.subr.mxu0 0.0
      %1259 = vmatpush1.msra.mxu0 0.0
      %1260 = vmatprep.subr.mxu0 0.0
      %1261 = vmatpush1.msra.mxu0 0.0
      %1262 = vmatprep.subr.mxu0 0.0
      %1263 = vmatpush1.msra.mxu0 0.0
      %1264 = vmatprep.subr.mxu0 0.0
      %1265 = vmatpush1.msra.mxu0 0.0
      %1266 = vmatprep.subr.mxu0 0.0
      %1267 = vmatpush1.msra.mxu0 0.0
      %1268 = vmatprep.subr.mxu0 0.0
      %1269 = vmatpush1.msra.mxu0 0.0
      %1270 = vmatprep.subr.mxu0 0.0
      %1271 = vmatpush1.msra.mxu0 0.0
      %1272 = vmatprep.subr.mxu0 0.0
      %1273 = vmatpush1.msra.mxu0 0.0
      %1274 = vmatprep.subr.mxu0 0.0
      %1275 = vmatpush1.msra.mxu0 0.0
      %1276 = vmatprep.subr.mxu0 0.0
      %1277 = vmatpush1.msra.mxu0 0.0
      %1278 = vmatprep.subr.mxu0 0.0
      %1279 = vmatpush1.msra.mxu0 0.0
      %1280 = vmatprep.subr.mxu0 0.0
      %1281 = vmatpush1.msra.mxu0 0.0
      %1282 = vmatprep.subr.mxu0 0.0
      %1283 = vmatpush1.msra.mxu0 0.0
      %1284 = vmatprep.subr.mxu0 0.0
      %1285 = vmatpush1.msra.mxu0 0.0
      %1286 = vmatprep.subr.mxu0 0.0
      %1287 = vmatpush1.msra.mxu0 0.0
      %1288 = vmatprep.subr.mxu0 0.0
      %1289 = vmatpush1.msra.mxu0 0.0
      %1290 = vmatprep.subr.mxu0 0.0
      %1291 = vmatpush1.msra.mxu0 0.0
      %1292 = vmatprep.subr.mxu0 0.0
      %1293 = vmatpush1.msra.mxu0 0.0
      %1294 = vmatprep.subr.mxu0 0.0
      %1295 = vmatpush1.msra.mxu0 0.0
      %1296 = vmatprep.mubr.f32.mxu0 0.0
      %1297 = vmatmul.mubr.f32.gmra.mrb[0].mxu0 %v1227
      %v1298 = vpop.f32.mrb[0].mxu0
      %v1299 = vadd.f32 %v704, %v1298
      %v1300 = vpop.f32.mrb[0].mxu0
      %1301 = vmatprep.mubr.f32.mxu0 0.0
      %1302 = vmatmul.mubr.f32.gmra.mrb[0].mxu0 %v1230
      %v1303 = vpop.f32.mrb[0].mxu0
      %v1304 = vadd.f32 %v704, %v1303
      %v1305 = vpop.f32.mrb[0].mxu0
      %1306 = vdwg.mxu0
      %v1307 = vmax.f32 %v1299, 0.0
      %v1308 = vmax.f32 %v1304, 0.0
      %v1311 = vrot.slane %v1307, 7
      %v1312 = vrot.slane %v1308, 7
      %v1313 = vsel %vm558, %v1311, %v1312
      %v1316 = vsel %vm558, 0.0, %v1311
      %v1317 = vsel %vm390, %v1313, 0.0
      %v1318 = vmul.f32 %v1316, %v1190
      %v1319 = vmul.f32 %v1317, %v1191
      %v1320 = vmul.f32 %v1316, %v1198
      %v1321 = vmul.f32 %v1317, %v1200
      %1322 = vrot.lane.b32.xlu0 %v1307, 32
      %v1323 = vpop.permute.xlu0 %1322
      %1324 = vrot.lane.b32.xlu0 %v1308, 32
      %v1325 = vpop.permute.xlu0 %1324
      %v1330 = vrot.slane %v1320, 2
      %v1331 = vrot.slane %v1321, 2
      %v1332 = vsel %vm400, %v1330, %v1331
      %1333 = vrot.lane.b32.xlu0 %v1332, 64
      %v1334 = vpop.permute.xlu0 %1333
      %1335 = vrot.lane.b32.xlu0 %v1331, 64
      %v1336 = vpop.permute.xlu0 %1335
      %v1339 = vsel %vm410, %v1318, %v1323
      %v1340 = vsel %vm410, %v1319, %v1325
      %v1341 = vsel %vm413, %v1339, %v1334
      %v1342 = vsel %vm413, %v1340, %v1336
      %v1344 = vsel %vm454, %v1341, 0
      %v1347 = vsel %vm454, %v1342, 0
      %1349 = vmatprep.subr.mxu0 0.0
      %1350 = vmatpush1.msra.mxu0 %v361
      %1351 = vmatprep.subr.mxu0 0.0
      %1352 = vmatpush1.msra.mxu0 %v362
      %1353 = vmatprep.subr.mxu0 0.0
      %1354 = vmatpush1.msra.mxu0 %v363
      %1355 = vmatprep.subr.mxu0 0.0
      %1356 = vmatpush1.msra.mxu0 %v364
      %1357 = vmatprep.subr.mxu0 0.0
      %1358 = vmatpush1.msra.mxu0 %v365
      %1359 = vmatprep.subr.mxu0 0.0
      %1360 = vmatpush1.msra.mxu0 %v366
      %1361 = vmatprep.subr.mxu0 0.0
      %1362 = vmatpush1.msra.mxu0 %v367
      %1363 = vmatprep.subr.mxu0 0.0
      %1364 = vmatpush1.msra.mxu0 %v368
      %1365 = vmatprep.subr.mxu0 0.0
      %1366 = vmatpush1.msra.mxu0 %v369
      %1367 = vmatprep.subr.mxu0 0.0
      %1368 = vmatpush1.msra.mxu0 %v370
      %1369 = vmatprep.subr.mxu0 0.0
      %1370 = vmatpush1.msra.mxu0 %v371
      %1371 = vmatprep.subr.mxu0 0.0
      %1372 = vmatpush1.msra.mxu0 %v372
      %1373 = vmatprep.subr.mxu0 0.0
      %1374 = vmatpush1.msra.mxu0 0.0
      %1375 = vmatprep.subr.mxu0 0.0
      %1376 = vmatpush1.msra.mxu0 0.0
      %1377 = vmatprep.subr.mxu0 0.0
      %1378 = vmatpush1.msra.mxu0 0.0
      %1379 = vmatprep.subr.mxu0 0.0
      %1380 = vmatpush1.msra.mxu0 0.0
      %1381 = vmatprep.subr.mxu0 0.0
      %1382 = vmatpush1.msra.mxu0 0.0
      %1383 = vmatprep.subr.mxu0 0.0
      %1384 = vmatpush1.msra.mxu0 0.0
      %1385 = vmatprep.subr.mxu0 0.0
      %1386 = vmatpush1.msra.mxu0 0.0
      %1387 = vmatprep.subr.mxu0 0.0
      %1388 = vmatpush1.msra.mxu0 0.0
      %1389 = vmatprep.subr.mxu0 0.0
      %1390 = vmatpush1.msra.mxu0 0.0
      %1391 = vmatprep.subr.mxu0 0.0
      %1392 = vmatpush1.msra.mxu0 0.0
      %1393 = vmatprep.subr.mxu0 0.0
      %1394 = vmatpush1.msra.mxu0 0.0
      %1395 = vmatprep.subr.mxu0 0.0
      %1396 = vmatpush1.msra.mxu0 0.0
      %1397 = vmatprep.subr.mxu0 0.0
      %1398 = vmatpush1.msra.mxu0 0.0
      %1399 = vmatprep.subr.mxu0 0.0
      %1400 = vmatpush1.msra.mxu0 0.0
      %1401 = vmatprep.subr.mxu0 0.0
      %1402 = vmatpush1.msra.mxu0 0.0
      %1403 = vmatprep.subr.mxu0 0.0
      %1404 = vmatpush1.msra.mxu0 0.0
      %1405 = vmatprep.subr.mxu0 0.0
      %1406 = vmatpush1.msra.mxu0 0.0
      %1407 = vmatprep.subr.mxu0 0.0
      %1408 = vmatpush1.msra.mxu0 0.0
      %1409 = vmatprep.subr.mxu0 0.0
      %1410 = vmatpush1.msra.mxu0 0.0
      %1411 = vmatprep.subr.mxu0 0.0
      %1412 = vmatpush1.msra.mxu0 0.0
      %1413 = vmatprep.mubr.f32.mxu0 0.0
      %1414 = vmatmul.mubr.f32.gmra.mrb[0].mxu0 %v1344
      %v1415 = vpop.f32.mrb[0].mxu0
      %v1416 = vadd.f32 %v704, %v1415
      %v1417 = vpop.f32.mrb[0].mxu0
      %1418 = vmatprep.mubr.f32.mxu0 0.0
      %1419 = vmatmul.mubr.f32.gmra.mrb[0].mxu0 %v1347
      %v1420 = vpop.f32.mrb[0].mxu0
      %v1421 = vadd.f32 %v704, %v1420
      %v1422 = vpop.f32.mrb[0].mxu0
      %1423 = vdwg.mxu0
      %v1424 = vadd.f32 %v1416, %v1165
      %v1425 = vadd.f32 %v1421, %v1166
      %vm1426 = vcmp.lt.s32.totalorder %v973, 7
      %vm1427 = vmand %vm974, %vm1426
      %v1428 = vsel %vm1427, 1, 0
      %v1429 = vcvt.s32.f32 %v1428
      %v1430 = vadd.s32 %v973, 7
      %vm1431 = vcmp.eq.s32.totalorder %v972, %v1430
      %vm1432 = vmand %vm1431, %vm1426
      %v1433 = vsel %vm1432, 1, 0
      %v1434 = vcvt.s32.f32 %v1433
      %vm1435 = vcmp.lt.s32.totalorder %v984, 7
      %vm1436 = vmand %vm985, %vm1435
      %v1437 = vsel %vm1436, 1, 0
      %v1438 = vcvt.s32.f32 %v1437
      %v1439 = vadd.s32 %v1430, 1
      %vm1440 = vcmp.eq.s32.totalorder %v972, %v1439
      %vm1441 = vmand %vm1440, %vm1435
      %v1442 = vsel %vm1441, 1, 0
      %v1443 = vcvt.s32.f32 %v1442
      %vm1444 = vcmp.lt.s32.totalorder %v995, 7
      %vm1445 = vmand %vm996, %vm1444
      %v1446 = vsel %vm1445, 1, 0
      %v1447 = vcvt.s32.f32 %v1446
      %v1448 = vadd.s32 %v1430, 2
      %vm1449 = vcmp.eq.s32.totalorder %v972, %v1448
      %vm1450 = vmand %vm1449, %vm1444
      %v1451 = vsel %vm1450, 1, 0
      %v1452 = vcvt.s32.f32 %v1451
      %v1454 = vrot.slane %v1434, 5
      %v1457 = vrot.slane %v1438, 2
      %v1460 = vrot.slane %v1443, 7
      %v1463 = vrot.slane %v1447, 4
      %v1466 = vrot.slane %v1452, 1
      %v1468 = vsel %vm1026, %v1429, %v1454
      %v1469 = vsel %vm400, %v1468, %v1457
      %v1470 = vsel %vm558, %v1457, %v1460
      %v1471 = vsel %vm1024, %v1470, %v1463
      %v1472 = vsel %vm390, %v1471, %v1466
      %vm1473 = vcmask 113664
      %v1475 = vsel %vm1473, %v1469, 0
      %v1478 = vsel %vm1473, %v1472, 0
      %v1480 = vsel %vm1473, %v1466, 0
      %v1483 = vsel %vm400, %v1425, 0
      %1485 = vmatprep.subr.mxu0 0.0
      %1486 = vmatpush1.msra.mxu0 %v1424
      %1487 = vmatprep.subr.mxu0 0.0
      %1488 = vmatpush1.msra.mxu0 %v1483
      %1489 = vmatprep.subr.mxu0 0.0
      %1490 = vmatpush1.msra.mxu0 0.0
      %1491 = vmatprep.subr.mxu0 0.0
      %1492 = vmatpush1.msra.mxu0 0.0
      %1493 = vmatprep.subr.mxu0 0.0
      %1494 = vmatpush1.msra.mxu0 0.0
      %1495 = vmatprep.subr.mxu0 0.0
      %1496 = vmatpush1.msra.mxu0 0.0
      %1497 = vmatprep.subr.mxu0 0.0
      %1498 = vmatpush1.msra.mxu0 0.0
      %1499 = vmatprep.subr.mxu0 0.0
      %1500 = vmatpush1.msra.mxu0 0.0
      %1501 = vmatprep.subr.mxu0 0.0
      %1502 = vmatpush1.msra.mxu0 0.0
      %1503 = vmatprep.subr.mxu0 0.0
      %1504 = vmatpush1.msra.mxu0 0.0
      %1505 = vmatprep.subr.mxu0 0.0
      %1506 = vmatpush1.msra.mxu0 0.0
      %1507 = vmatprep.subr.mxu0 0.0
      %1508 = vmatpush1.msra.mxu0 0.0
      %1509 = vmatprep.subr.mxu0 0.0
      %1510 = vmatpush1.msra.mxu0 0.0
      %1511 = vmatprep.subr.mxu0 0.0
      %1512 = vmatpush1.msra.mxu0 0.0
      %1513 = vmatprep.subr.mxu0 0.0
      %1514 = vmatpush1.msra.mxu0 0.0
      %1515 = vmatprep.subr.mxu0 0.0
      %1516 = vmatpush1.msra.mxu0 0.0
      %1517 = vmatprep.subr.mxu0 0.0
      %1518 = vmatpush1.msra.mxu0 0.0
      %1519 = vmatprep.subr.mxu0 0.0
      %1520 = vmatpush1.msra.mxu0 0.0
      %1521 = vmatprep.subr.mxu0 0.0
      %1522 = vmatpush1.msra.mxu0 0.0
      %1523 = vmatprep.subr.mxu0 0.0
      %1524 = vmatpush1.msra.mxu0 0.0
      %1525 = vmatprep.subr.mxu0 0.0
      %1526 = vmatpush1.msra.mxu0 0.0
      %1527 = vmatprep.subr.mxu0 0.0
      %1528 = vmatpush1.msra.mxu0 0.0
      %1529 = vmatprep.subr.mxu0 0.0
      %1530 = vmatpush1.msra.mxu0 0.0
      %1531 = vmatprep.subr.mxu0 0.0
      %1532 = vmatpush1.msra.mxu0 0.0
      %1533 = vmatprep.subr.mxu0 0.0
      %1534 = vmatpush1.msra.mxu0 0.0
      %1535 = vmatprep.subr.mxu0 0.0
      %1536 = vmatpush1.msra.mxu0 0.0
      %1537 = vmatprep.subr.mxu0 0.0
      %1538 = vmatpush1.msra.mxu0 0.0
      %1539 = vmatprep.subr.mxu0 0.0
      %1540 = vmatpush1.msra.mxu0 0.0
      %1541 = vmatprep.subr.mxu0 0.0
      %1542 = vmatpush1.msra.mxu0 0.0
      %1543 = vmatprep.subr.mxu0 0.0
      %1544 = vmatpush1.msra.mxu0 0.0
      %1545 = vmatprep.subr.mxu0 0.0
      %1546 = vmatpush1.msra.mxu0 0.0
      %1547 = vmatprep.subr.mxu0 0.0
      %1548 = vmatpush1.msra.mxu0 0.0
      %1549 = vmatprep.mubr.f32.mxu0 0.0
      %1550 = vmatmul.mubr.f32.gmra.mrb[0].mxu0 %v1475
      %v1551 = vpop.f32.mrb[0].mxu0
      %v1552 = vadd.f32 0.0, %v1551
      %v1553 = vpop.f32.mrb[0].mxu0
      %1554 = vmatprep.mubr.f32.mxu0 0.0
      %1555 = vmatmul.mubr.f32.gmra.mrb[0].mxu0 %v1478
      %v1556 = vpop.f32.mrb[0].mxu0
      %v1557 = vadd.f32 0.0, %v1556
      %v1558 = vpop.f32.mrb[0].mxu0
      %1559 = vmatprep.mubr.f32.mxu0 0.0
      %1560 = vmatmul.mubr.f32.gmra.mrb[0].mxu0 %v1480
      %v1561 = vpop.f32.mrb[0].mxu0
      %v1562 = vadd.f32 0.0, %v1561
      %v1563 = vpop.f32.mrb[0].mxu0
      %1564 = vdwg.mxu0
      %v1567 = vrot.slane %v1552, 6
      %v1568 = vrot.slane %v1557, 6
      %v1569 = vsel %vm642, %v1567, %v1568
      %v1571 = vmax.f32 %v1552, %v1569
      %v1573 = vrot.slane %v1557, 4
      %v1574 = vrot.slane %v1562, 4
      %v1575 = vsel %vm1024, %v1573, %v1574
      %v1577 = vmax.f32 %v1571, %v1575
      %v1578 = vmax.f32 %v1577, 0.0
      %v1580 = vrot.slane %v1578, 7
      %v1582 = vsel %vm558, 0.0, %v1580
      %v1583 = vsel %vm390, %v1582, 0.0
      %vm1584 = vcmp.ne.s32.totalorder %v574, 2
      %v1585 = vsel %vm1584, 1, 0
      %v1586 = vcvt.s32.f32 %v1585
      %vm1587 = vcmp.ne.s32.totalorder %v574, 3
      %v1588 = vsel %vm1587, 1, 0
      %v1589 = vcvt.s32.f32 %v1588
      %v1590 = vmul.f32 %v586, %v1589
      %vm1591 = vcmp.ne.s32.totalorder %v574, 5
      %v1592 = vsel %vm1591, 1, 0
      %v1593 = vcvt.s32.f32 %v1592
      %v1594 = vmul.f32 %v1586, %v1593
      %v1595 = vmul.f32 %v1583, %v1590
      %v1597 = vrot.slane %v1594, 6
      %v1599 = vmul.f32 %v1583, %v1597
      %1600 = vrot.lane.b32.xlu0 %v1578, 32
      %v1601 = vpop.permute.xlu0 %1600
      %v1604 = vrot.slane %v1599, 2
      %1605 = vrot.lane.b32.xlu0 %v1604, 64
      %v1606 = vpop.permute.xlu0 %1605
      %v1608 = vsel %vm410, %v1595, %v1601
      %v1609 = vsel %vm413, %v1608, %v1606
      %v1611 = vsel %vm454, %v1609, 0
      %1613 = vmatprep.subr.mxu0 0.0
      %1614 = vmatpush1.msra.mxu0 %v361
      %1615 = vmatprep.subr.mxu0 0.0
      %1616 = vmatpush1.msra.mxu0 %v362
      %1617 = vmatprep.subr.mxu0 0.0
      %1618 = vmatpush1.msra.mxu0 %v363
      %1619 = vmatprep.subr.mxu0 0.0
      %1620 = vmatpush1.msra.mxu0 %v364
      %1621 = vmatprep.subr.mxu0 0.0
      %1622 = vmatpush1.msra.mxu0 %v365
      %1623 = vmatprep.subr.mxu0 0.0
      %1624 = vmatpush1.msra.mxu0 %v366
      %1625 = vmatprep.subr.mxu0 0.0
      %1626 = vmatpush1.msra.mxu0 %v367
      %1627 = vmatprep.subr.mxu0 0.0
      %1628 = vmatpush1.msra.mxu0 %v368
      %1629 = vmatprep.subr.mxu0 0.0
      %1630 = vmatpush1.msra.mxu0 %v369
      %1631 = vmatprep.subr.mxu0 0.0
      %1632 = vmatpush1.msra.mxu0 %v370
      %1633 = vmatprep.subr.mxu0 0.0
      %1634 = vmatpush1.msra.mxu0 %v371
      %1635 = vmatprep.subr.mxu0 0.0
      %1636 = vmatpush1.msra.mxu0 %v372
      %1637 = vmatprep.subr.mxu0 0.0
      %1638 = vmatpush1.msra.mxu0 0.0
      %1639 = vmatprep.subr.mxu0 0.0
      %1640 = vmatpush1.msra.mxu0 0.0
      %1641 = vmatprep.subr.mxu0 0.0
      %1642 = vmatpush1.msra.mxu0 0.0
      %1643 = vmatprep.subr.mxu0 0.0
      %1644 = vmatpush1.msra.mxu0 0.0
      %1645 = vmatprep.subr.mxu0 0.0
      %1646 = vmatpush1.msra.mxu0 0.0
      %1647 = vmatprep.subr.mxu0 0.0
      %1648 = vmatpush1.msra.mxu0 0.0
      %1649 = vmatprep.subr.mxu0 0.0
      %1650 = vmatpush1.msra.mxu0 0.0
      %1651 = vmatprep.subr.mxu0 0.0
      %1652 = vmatpush1.msra.mxu0 0.0
      %1653 = vmatprep.subr.mxu0 0.0
      %1654 = vmatpush1.msra.mxu0 0.0
      %1655 = vmatprep.subr.mxu0 0.0
      %1656 = vmatpush1.msra.mxu0 0.0
      %1657 = vmatprep.subr.mxu0 0.0
      %1658 = vmatpush1.msra.mxu0 0.0
      %1659 = vmatprep.subr.mxu0 0.0
      %1660 = vmatpush1.msra.mxu0 0.0
      %1661 = vmatprep.subr.mxu0 0.0
      %1662 = vmatpush1.msra.mxu0 0.0
      %1663 = vmatprep.subr.mxu0 0.0
      %1664 = vmatpush1.msra.mxu0 0.0
      %1665 = vmatprep.subr.mxu0 0.0
      %1666 = vmatpush1.msra.mxu0 0.0
      %1667 = vmatprep.subr.mxu0 0.0
      %1668 = vmatpush1.msra.mxu0 0.0
      %1669 = vmatprep.subr.mxu0 0.0
      %1670 = vmatpush1.msra.mxu0 0.0
      %1671 = vmatprep.subr.mxu0 0.0
      %1672 = vmatpush1.msra.mxu0 0.0
      %1673 = vmatprep.subr.mxu0 0.0
      %1674 = vmatpush1.msra.mxu0 0.0
      %1675 = vmatprep.subr.mxu0 0.0
      %1676 = vmatpush1.msra.mxu0 0.0
      %1677 = vmatprep.mubr.f32.mxu0 0.0
      %1678 = vmatmul.mubr.f32.gmra.mrb[0].mxu0 %v1611
      %v1679 = vpop.f32.mrb[0].mxu0
      %v1680 = vadd.f32 %v704, %v1679
      %v1681 = vpop.f32.mrb[0].mxu0
      %1682 = vdwg.mxu0
      %v1683 = vmax.f32 %v1680, 0.0
      %v1685 = vrot.slane %v1683, 7
      %v1687 = vsel %vm558, 0.0, %v1685
      %v1688 = vsel %vm390, %v1687, 0.0
      %v1689 = vmul.f32 %v1688, %v1590
      %v1690 = vmul.f32 %v1688, %v1597
      %1691 = vrot.lane.b32.xlu0 %v1683, 32
      %v1692 = vpop.permute.xlu0 %1691
      %v1695 = vrot.slane %v1690, 2
      %1696 = vrot.lane.b32.xlu0 %v1695, 64
      %v1697 = vpop.permute.xlu0 %1696
      %v1699 = vsel %vm410, %v1689, %v1692
      %v1700 = vsel %vm413, %v1699, %v1697
      %v1702 = vsel %vm454, %v1700, 0
      %1704 = vmatprep.subr.mxu0 0.0
      %1705 = vmatpush1.msra.mxu0 %v361
      %1706 = vmatprep.subr.mxu0 0.0
      %1707 = vmatpush1.msra.mxu0 %v362
      %1708 = vmatprep.subr.mxu0 0.0
      %1709 = vmatpush1.msra.mxu0 %v363
      %1710 = vmatprep.subr.mxu0 0.0
      %1711 = vmatpush1.msra.mxu0 %v364
      %1712 = vmatprep.subr.mxu0 0.0
      %1713 = vmatpush1.msra.mxu0 %v365
      %1714 = vmatprep.subr.mxu0 0.0
      %1715 = vmatpush1.msra.mxu0 %v366
      %1716 = vmatprep.subr.mxu0 0.0
      %1717 = vmatpush1.msra.mxu0 %v367
      %1718 = vmatprep.subr.mxu0 0.0
      %1719 = vmatpush1.msra.mxu0 %v368
      %1720 = vmatprep.subr.mxu0 0.0
      %1721 = vmatpush1.msra.mxu0 %v369
      %1722 = vmatprep.subr.mxu0 0.0
      %1723 = vmatpush1.msra.mxu0 %v370
      %1724 = vmatprep.subr.mxu0 0.0
      %1725 = vmatpush1.msra.mxu0 %v371
      %1726 = vmatprep.subr.mxu0 0.0
      %1727 = vmatpush1.msra.mxu0 %v372
      %1728 = vmatprep.subr.mxu0 0.0
      %1729 = vmatpush1.msra.mxu0 0.0
      %1730 = vmatprep.subr.mxu0 0.0
      %1731 = vmatpush1.msra.mxu0 0.0
      %1732 = vmatprep.subr.mxu0 0.0
      %1733 = vmatpush1.msra.mxu0 0.0
      %1734 = vmatprep.subr.mxu0 0.0
      %1735 = vmatpush1.msra.mxu0 0.0
      %1736 = vmatprep.subr.mxu0 0.0
      %1737 = vmatpush1.msra.mxu0 0.0
      %1738 = vmatprep.subr.mxu0 0.0
      %1739 = vmatpush1.msra.mxu0 0.0
      %1740 = vmatprep.subr.mxu0 0.0
      %1741 = vmatpush1.msra.mxu0 0.0
      %1742 = vmatprep.subr.mxu0 0.0
      %1743 = vmatpush1.msra.mxu0 0.0
      %1744 = vmatprep.subr.mxu0 0.0
      %1745 = vmatpush1.msra.mxu0 0.0
      %1746 = vmatprep.subr.mxu0 0.0
      %1747 = vmatpush1.msra.mxu0 0.0
      %1748 = vmatprep.subr.mxu0 0.0
      %1749 = vmatpush1.msra.mxu0 0.0
      %1750 = vmatprep.subr.mxu0 0.0
      %1751 = vmatpush1.msra.mxu0 0.0
      %1752 = vmatprep.subr.mxu0 0.0
      %1753 = vmatpush1.msra.mxu0 0.0
      %1754 = vmatprep.subr.mxu0 0.0
      %1755 = vmatpush1.msra.mxu0 0.0
      %1756 = vmatprep.subr.mxu0 0.0
      %1757 = vmatpush1.msra.mxu0 0.0
      %1758 = vmatprep.subr.mxu0 0.0
      %1759 = vmatpush1.msra.mxu0 0.0
      %1760 = vmatprep.subr.mxu0 0.0
      %1761 = vmatpush1.msra.mxu0 0.0
      %1762 = vmatprep.subr.mxu0 0.0
      %1763 = vmatpush1.msra.mxu0 0.0
      %1764 = vmatprep.subr.mxu0 0.0
      %1765 = vmatpush1.msra.mxu0 0.0
      %1766 = vmatprep.subr.mxu0 0.0
      %1767 = vmatpush1.msra.mxu0 0.0
      %1768 = vmatprep.mubr.f32.mxu0 0.0
      %1769 = vmatmul.mubr.f32.gmra.mrb[0].mxu0 %v1702
      %v1770 = vpop.f32.mrb[0].mxu0
      %v1771 = vadd.f32 %v704, %v1770
      %v1772 = vpop.f32.mrb[0].mxu0
      %1773 = vdwg.mxu0
      %v1774 = vadd.f32 %v1771, %v1577
      %vm1775 = vcmp.lt.s32.totalorder %v973, 3
      %vm1776 = vmand %vm974, %vm1775
      %v1777 = vsel %vm1776, 1, 0
      %v1778 = vcvt.s32.f32 %v1777
      %v1779 = vadd.s32 %v973, 3
      %vm1780 = vcmp.eq.s32.totalorder %v972, %v1779
      %vm1781 = vmand %vm1780, %vm1775
      %v1782 = vsel %vm1781, 1, 0
      %v1783 = vcvt.s32.f32 %v1782
      %vm1784 = vcmp.lt.s32.totalorder %v984, 3
      %vm1785 = vmand %vm985, %vm1784
      %v1786 = vsel %vm1785, 1, 0
      %v1787 = vcvt.s32.f32 %v1786
      %v1788 = vadd.s32 %v1779, 1
      %vm1789 = vcmp.eq.s32.totalorder %v972, %v1788
      %vm1790 = vmand %vm1789, %vm1784
      %v1791 = vsel %vm1790, 1, 0
      %v1792 = vcvt.s32.f32 %v1791
      %vm1793 = vcmp.lt.s32.totalorder %v995, 3
      %vm1794 = vmand %vm996, %vm1793
      %v1795 = vsel %vm1794, 1, 0
      %v1796 = vcvt.s32.f32 %v1795
      %v1797 = vadd.s32 %v1779, 2
      %vm1798 = vcmp.eq.s32.totalorder %v972, %v1797
      %vm1799 = vmand %vm1798, %vm1793
      %v1800 = vsel %vm1799, 1, 0
      %v1801 = vcvt.s32.f32 %v1800
      %v1803 = vrot.slane %v1783, 7
      %v1806 = vrot.slane %v1787, 6
      %v1809 = vrot.slane %v1792, 5
      %v1812 = vrot.slane %v1796, 4
      %v1815 = vrot.slane %v1801, 3
      %v1817 = vsel %vm558, %v1778, %v1803
      %v1818 = vsel %vm642, %v1817, %v1806
      %v1819 = vsel %vm1026, %v1818, %v1809
      %v1820 = vsel %vm1024, %v1819, %v1812
      %v1821 = vsel %vm571, %v1820, %v1815
      %vm1822 = vcmask 48128
      %v1824 = vsel %vm1822, %v1821, 0
      %v1827 = vsel %vm400, %v1774, 0
      %1829 = vmatprep.subr.mxu0 0.0
      %1830 = vmatpush1.msra.mxu0 %v1827
      %1831 = vmatprep.subr.mxu0 0.0
      %1832 = vmatpush1.msra.mxu0 0.0
      %1833 = vmatprep.subr.mxu0 0.0
      %1834 = vmatpush1.msra.mxu0 0.0
      %1835 = vmatprep.subr.mxu0 0.0
      %1836 = vmatpush1.msra.mxu0 0.0
      %1837 = vmatprep.subr.mxu0 0.0
      %1838 = vmatpush1.msra.mxu0 0.0
      %1839 = vmatprep.subr.mxu0 0.0
      %1840 = vmatpush1.msra.mxu0 0.0
      %1841 = vmatprep.subr.mxu0 0.0
      %1842 = vmatpush1.msra.mxu0 0.0
      %1843 = vmatprep.subr.mxu0 0.0
      %1844 = vmatpush1.msra.mxu0 0.0
      %1845 = vmatprep.subr.mxu0 0.0
      %1846 = vmatpush1.msra.mxu0 0.0
      %1847 = vmatprep.subr.mxu0 0.0
      %1848 = vmatpush1.msra.mxu0 0.0
      %1849 = vmatprep.subr.mxu0 0.0
      %1850 = vmatpush1.msra.mxu0 0.0
      %1851 = vmatprep.subr.mxu0 0.0
      %1852 = vmatpush1.msra.mxu0 0.0
      %1853 = vmatprep.subr.mxu0 0.0
      %1854 = vmatpush1.msra.mxu0 0.0
      %1855 = vmatprep.subr.mxu0 0.0
      %1856 = vmatpush1.msra.mxu0 0.0
      %1857 = vmatprep.subr.mxu0 0.0
      %1858 = vmatpush1.msra.mxu0 0.0
      %1859 = vmatprep.subr.mxu0 0.0
      %1860 = vmatpush1.msra.mxu0 0.0
      %1861 = vmatprep.subr.mxu0 0.0
      %1862 = vmatpush1.msra.mxu0 0.0
      %1863 = vmatprep.subr.mxu0 0.0
      %1864 = vmatpush1.msra.mxu0 0.0
      %1865 = vmatprep.subr.mxu0 0.0
      %1866 = vmatpush1.msra.mxu0 0.0
      %1867 = vmatprep.subr.mxu0 0.0
      %1868 = vmatpush1.msra.mxu0 0.0
      %1869 = vmatprep.subr.mxu0 0.0
      %1870 = vmatpush1.msra.mxu0 0.0
      %1871 = vmatprep.subr.mxu0 0.0
      %1872 = vmatpush1.msra.mxu0 0.0
      %1873 = vmatprep.subr.mxu0 0.0
      %1874 = vmatpush1.msra.mxu0 0.0
      %1875 = vmatprep.subr.mxu0 0.0
      %1876 = vmatpush1.msra.mxu0 0.0
      %1877 = vmatprep.subr.mxu0 0.0
      %1878 = vmatpush1.msra.mxu0 0.0
      %1879 = vmatprep.subr.mxu0 0.0
      %1880 = vmatpush1.msra.mxu0 0.0
      %1881 = vmatprep.subr.mxu0 0.0
      %1882 = vmatpush1.msra.mxu0 0.0
      %1883 = vmatprep.subr.mxu0 0.0
      %1884 = vmatpush1.msra.mxu0 0.0
      %1885 = vmatprep.subr.mxu0 0.0
      %1886 = vmatpush1.msra.mxu0 0.0
      %1887 = vmatprep.subr.mxu0 0.0
      %1888 = vmatpush1.msra.mxu0 0.0
      %1889 = vmatprep.subr.mxu0 0.0
      %1890 = vmatpush1.msra.mxu0 0.0
      %1891 = vmatprep.subr.mxu0 0.0
      %1892 = vmatpush1.msra.mxu0 0.0
      %1893 = vmatprep.mubr.f32.mxu0 0.0
      %1894 = vmatmul.mubr.f32.gmra.mrb[0].mxu0 %v1824
      %v1895 = vpop.f32.mrb[0].mxu0
      %v1896 = vadd.f32 0.0, %v1895
      %v1897 = vpop.f32.mrb[0].mxu0
      %1898 = vdwg.mxu0
      %v1900 = vrot.slane %v1896, 2
      %v1902 = vmax.f32 %v1896, %v1900
      %v1903 = vrot.slane %v1896, 4
      %v1905 = vmax.f32 %v1902, %v1903
      %v1906 = vmax.f32 %v1905, 0.0
      %v1908 = vsel %vm410, %v1906, 0
      %1910 = vmatprep.subr.mxu0 0.0
      %1911 = vmatpush1.msra.mxu0 %v365
      %1912 = vmatprep.subr.mxu0 0.0
      %1913 = vmatpush1.msra.mxu0 %v366
      %1914 = vmatprep.subr.mxu0 0.0
      %1915 = vmatpush1.msra.mxu0 %v367
      %1916 = vmatprep.subr.mxu0 0.0
      %1917 = vmatpush1.msra.mxu0 %v368
      %1918 = vmatprep.subr.mxu0 0.0
      %1919 = vmatpush1.msra.mxu0 0.0
      %1920 = vmatprep.subr.mxu0 0.0
      %1921 = vmatpush1.msra.mxu0 0.0
      %1922 = vmatprep.subr.mxu0 0.0
      %1923 = vmatpush1.msra.mxu0 0.0
      %1924 = vmatprep.subr.mxu0 0.0
      %1925 = vmatpush1.msra.mxu0 0.0
      %1926 = vmatprep.subr.mxu0 0.0
      %1927 = vmatpush1.msra.mxu0 0.0
      %1928 = vmatprep.subr.mxu0 0.0
      %1929 = vmatpush1.msra.mxu0 0.0
      %1930 = vmatprep.subr.mxu0 0.0
      %1931 = vmatpush1.msra.mxu0 0.0
      %1932 = vmatprep.subr.mxu0 0.0
      %1933 = vmatpush1.msra.mxu0 0.0
      %1934 = vmatprep.subr.mxu0 0.0
      %1935 = vmatpush1.msra.mxu0 0.0
      %1936 = vmatprep.subr.mxu0 0.0
      %1937 = vmatpush1.msra.mxu0 0.0
      %1938 = vmatprep.subr.mxu0 0.0
      %1939 = vmatpush1.msra.mxu0 0.0
      %1940 = vmatprep.subr.mxu0 0.0
      %1941 = vmatpush1.msra.mxu0 0.0
      %1942 = vmatprep.subr.mxu0 0.0
      %1943 = vmatpush1.msra.mxu0 0.0
      %1944 = vmatprep.subr.mxu0 0.0
      %1945 = vmatpush1.msra.mxu0 0.0
      %1946 = vmatprep.subr.mxu0 0.0
      %1947 = vmatpush1.msra.mxu0 0.0
      %1948 = vmatprep.subr.mxu0 0.0
      %1949 = vmatpush1.msra.mxu0 0.0
      %1950 = vmatprep.subr.mxu0 0.0
      %1951 = vmatpush1.msra.mxu0 0.0
      %1952 = vmatprep.subr.mxu0 0.0
      %1953 = vmatpush1.msra.mxu0 0.0
      %1954 = vmatprep.subr.mxu0 0.0
      %1955 = vmatpush1.msra.mxu0 0.0
      %1956 = vmatprep.subr.mxu0 0.0
      %1957 = vmatpush1.msra.mxu0 0.0
      %1958 = vmatprep.subr.mxu0 0.0
      %1959 = vmatpush1.msra.mxu0 0.0
      %1960 = vmatprep.subr.mxu0 0.0
      %1961 = vmatpush1.msra.mxu0 0.0
      %1962 = vmatprep.subr.mxu0 0.0
      %1963 = vmatpush1.msra.mxu0 0.0
      %1964 = vmatprep.subr.mxu0 0.0
      %1965 = vmatpush1.msra.mxu0 0.0
      %1966 = vmatprep.subr.mxu0 0.0
      %1967 = vmatpush1.msra.mxu0 0.0
      %1968 = vmatprep.subr.mxu0 0.0
      %1969 = vmatpush1.msra.mxu0 0.0
      %1970 = vmatprep.subr.mxu0 0.0
      %1971 = vmatpush1.msra.mxu0 0.0
      %1972 = vmatprep.subr.mxu0 0.0
      %1973 = vmatpush1.msra.mxu0 0.0
      %1974 = vmatprep.mubr.f32.mxu0 0.0
      %1975 = vmatmul.mubr.f32.gmra.mrb[0].mxu0 %v1908
      %v1976 = vpop.f32.mrb[0].mxu0
      %v1977 = vadd.f32 %v704, %v1976
      %v1978 = vpop.f32.mrb[0].mxu0
      %1979 = vdwg.mxu0
      %v1980 = vmax.f32 %v1977, 0.0
      %v1982 = vsel %vm410, %v1980, 0
      %1984 = vmatprep.subr.mxu0 0.0
      %1985 = vmatpush1.msra.mxu0 %v365
      %1986 = vmatprep.subr.mxu0 0.0
      %1987 = vmatpush1.msra.mxu0 %v366
      %1988 = vmatprep.subr.mxu0 0.0
      %1989 = vmatpush1.msra.mxu0 %v367
      %1990 = vmatprep.subr.mxu0 0.0
      %1991 = vmatpush1.msra.mxu0 %v368
      %1992 = vmatprep.subr.mxu0 0.0
      %1993 = vmatpush1.msra.mxu0 0.0
      %1994 = vmatprep.subr.mxu0 0.0
      %1995 = vmatpush1.msra.mxu0 0.0
      %1996 = vmatprep.subr.mxu0 0.0
      %1997 = vmatpush1.msra.mxu0 0.0
      %1998 = vmatprep.subr.mxu0 0.0
      %1999 = vmatpush1.msra.mxu0 0.0
      %2000 = vmatprep.subr.mxu0 0.0
      %2001 = vmatpush1.msra.mxu0 0.0
      %2002 = vmatprep.subr.mxu0 0.0
      %2003 = vmatpush1.msra.mxu0 0.0
      %2004 = vmatprep.subr.mxu0 0.0
      %2005 = vmatpush1.msra.mxu0 0.0
      %2006 = vmatprep.subr.mxu0 0.0
      %2007 = vmatpush1.msra.mxu0 0.0
      %2008 = vmatprep.subr.mxu0 0.0
      %2009 = vmatpush1.msra.mxu0 0.0
      %2010 = vmatprep.subr.mxu0 0.0
      %2011 = vmatpush1.msra.mxu0 0.0
      %2012 = vmatprep.subr.mxu0 0.0
      %2013 = vmatpush1.msra.mxu0 0.0
      %2014 = vmatprep.subr.mxu0 0.0
      %2015 = vmatpush1.msra.mxu0 0.0
      %2016 = vmatprep.subr.mxu0 0.0
      %2017 = vmatpush1.msra.mxu0 0.0
      %2018 = vmatprep.subr.mxu0 0.0
      %2019 = vmatpush1.msra.mxu0 0.0
      %2020 = vmatprep.subr.mxu0 0.0
      %2021 = vmatpush1.msra.mxu0 0.0
      %2022 = vmatprep.subr.mxu0 0.0
      %2023 = vmatpush1.msra.mxu0 0.0
      %2024 = vmatprep.subr.mxu0 0.0
      %2025 = vmatpush1.msra.mxu0 0.0
      %2026 = vmatprep.subr.mxu0 0.0
      %2027 = vmatpush1.msra.mxu0 0.0
      %2028 = vmatprep.subr.mxu0 0.0
      %2029 = vmatpush1.msra.mxu0 0.0
      %2030 = vmatprep.subr.mxu0 0.0
      %2031 = vmatpush1.msra.mxu0 0.0
      %2032 = vmatprep.subr.mxu0 0.0
      %2033 = vmatpush1.msra.mxu0 0.0
      %2034 = vmatprep.subr.mxu0 0.0
      %2035 = vmatpush1.msra.mxu0 0.0
      %2036 = vmatprep.subr.mxu0 0.0
      %2037 = vmatpush1.msra.mxu0 0.0
      %2038 = vmatprep.subr.mxu0 0.0
      %2039 = vmatpush1.msra.mxu0 0.0
      %2040 = vmatprep.subr.mxu0 0.0
      %2041 = vmatpush1.msra.mxu0 0.0
      %2042 = vmatprep.subr.mxu0 0.0
      %2043 = vmatpush1.msra.mxu0 0.0
      %2044 = vmatprep.subr.mxu0 0.0
      %2045 = vmatpush1.msra.mxu0 0.0
      %2046 = vmatprep.subr.mxu0 0.0
      %2047 = vmatpush1.msra.mxu0 0.0
      %2048 = vmatprep.mubr.f32.mxu0 0.0
      %2049 = vmatmul.mubr.f32.gmra.mrb[0].mxu0 %v1982
      %v2050 = vpop.f32.mrb[0].mxu0
      %v2051 = vadd.f32 %v704, %v2050
      %v2052 = vpop.f32.mrb[0].mxu0
      %2053 = vdwg.mxu0
      %v2054 = vadd.f32 %v2051, %v1905
      %s2055 = scalar_lea.vmem %s2, 96
      %v2056 = vld [vmem:[%s2055] sm:$0xff]
      %v2057 = vld [vmem:[%s2055 + $0x8] sm:$0xff]
      %v2058 = vld [vmem:[%s2055 + $0x10] sm:$0xff]
      %v2059 = vld [vmem:[%s2055 + $0x18] sm:$0xff]
      %v2060 = vld [vmem:[%s2055 + $0x20] sm:$0xff]
      %v2061 = vld [vmem:[%s2055 + $0x28] sm:$0xff]
      %v2062 = vld [vmem:[%s2055 + $0x30] sm:$0xff]
      %v2063 = vld [vmem:[%s2055 + $0x38] sm:$0xff]
      %v2064 = vld [vmem:[%s2055 + $0x40] sm:$0xff]
      %v2065 = vld [vmem:[%s2055 + $0x48] sm:$0xff]
      %v2066 = vld [vmem:[%s2055 + $0x50] sm:$0xff]
      %v2067 = vld [vmem:[%s2055 + $0x58] sm:$0xff]
      %v2068 = vld [vmem:[%s355] sm:$0xff]
      %v2069 = vld [vmem:[%s355 + $0x8] sm:$0xff]
      %v2070 = vld [vmem:[%s355 + $0x10] sm:$0xf]
      %v2074 = vrot.slane %v2068, 1
      %v2075 = vrot.slane %v2069, 1
      %v2076 = vsel %vm390, %v2074, %v2075
      %v2077 = vrot.slane %v2070, 1
      %v2078 = vsel %vm390, %v2075, %v2077
      %2079 = vrot.lane.b32.xlu0 %v2076, 32
      %v2080 = vpop.permute.xlu0 %2079
      %2081 = vrot.lane.b32.xlu0 %v2078, 32
      %v2082 = vpop.permute.xlu0 %2081
      %2083 = vrot.lane.b32.xlu0 %v2077, 32
      %v2084 = vpop.permute.xlu0 %2083
      %v2088 = vrot.slane %v2068, 2
      %v2089 = vrot.slane %v2069, 2
      %v2090 = vsel %vm400, %v2088, %v2089
      %v2091 = vrot.slane %v2070, 2
      %v2092 = vsel %vm400, %v2089, %v2091
      %2093 = vrot.lane.b32.xlu0 %v2090, 64
      %v2094 = vpop.permute.xlu0 %2093
      %2095 = vrot.lane.b32.xlu0 %v2092, 64
      %v2096 = vpop.permute.xlu0 %2095
      %2097 = vrot.lane.b32.xlu0 %v2091, 64
      %v2098 = vpop.permute.xlu0 %2097
      %v2102 = vsel %vm410, %v2068, %v2080
      %v2103 = vsel %vm410, %v2069, %v2082
      %v2104 = vsel %vm410, %v2070, %v2084
      %v2105 = vsel %vm413, %v2102, %v2094
      %v2106 = vsel %vm413, %v2103, %v2096
      %v2107 = vsel %vm413, %v2104, %v2098
      %s2108 = scalar_lea.vmem %s355, 24
      %v2109 = vld [vmem:[%s2108] sm:$0xff]
      %v2110 = vld [vmem:[%s2108 + $0x8] sm:$0xff]
      %v2111 = vld [vmem:[%s2108 + $0x10] sm:$0xf]
      %v2115 = vrot.slane %v2109, 1
      %v2116 = vrot.slane %v2110, 1
      %v2117 = vsel %vm390, %v2115, %v2116
      %v2118 = vrot.slane %v2111, 1
      %v2119 = vsel %vm390, %v2116, %v2118
      %2120 = vrot.lane.b32.xlu0 %v2117, 32
      %v2121 = vpop.permute.xlu0 %2120
      %2122 = vrot.lane.b32.xlu0 %v2119, 32
      %v2123 = vpop.permute.xlu0 %2122
      %2124 = vrot.lane.b32.xlu0 %v2118, 32
      %v2125 = vpop.permute.xlu0 %2124
      %v2129 = vrot.slane %v2109, 2
      %v2130 = vrot.slane %v2110, 2
      %v2131 = vsel %vm400, %v2129, %v2130
      %v2132 = vrot.slane %v2111, 2
      %v2133 = vsel %vm400, %v2130, %v2132
      %2134 = vrot.lane.b32.xlu0 %v2131, 64
      %v2135 = vpop.permute.xlu0 %2134
      %2136 = vrot.lane.b32.xlu0 %v2133, 64
      %v2137 = vpop.permute.xlu0 %2136
      %2138 = vrot.lane.b32.xlu0 %v2132, 64
      %v2139 = vpop.permute.xlu0 %2138
      %v2143 = vsel %vm410, %v2109, %v2121
      %v2144 = vsel %vm410, %v2110, %v2123
      %v2145 = vsel %vm410, %v2111, %v2125
      %v2146 = vsel %vm413, %v2143, %v2135
      %v2147 = vsel %vm413, %v2144, %v2137
      %v2148 = vsel %vm413, %v2145, %v2139
      %v2152 = vrot.slane %v2146, 6
      %v2153 = vrot.slane %v2147, 6
      %v2154 = vsel %vm642, %v2152, %v2153
      %v2155 = vrot.slane %v2148, 6
      %v2156 = vsel %vm642, %v2153, %v2155
      %v2158 = vsel %vm642, %v2107, %v2152
      %v2159 = vlaneseq
      %v2160 = vshrl.u32 %v2159, 7
      %v2161 = vsub.s32 1, %v2160
      %v2162 = vrot.slane %v373, %v2161
      %v2164 = vsel %vm454, %v2105, 0
      %v2167 = vsel %vm454, %v2106, 0
      %v2170 = vsel %vm454, %v2158, 0
      %v2172 = vsel %vm454, %v2154, 0
      %v2174 = vsel %vm454, %v2156, 0
      %2176 = vmatprep.subr.mxu0 0.0
      %2177 = vmatpush1.msra.mxu0 %v2056
      %2178 = vmatprep.subr.mxu0 0.0
      %2179 = vmatpush1.msra.mxu0 %v2057
      %2180 = vmatprep.subr.mxu0 0.0
      %2181 = vmatpush1.msra.mxu0 %v2058
      %2182 = vmatprep.subr.mxu0 0.0
      %2183 = vmatpush1.msra.mxu0 %v2059
      %2184 = vmatprep.subr.mxu0 0.0
      %2185 = vmatpush1.msra.mxu0 %v2060
      %2186 = vmatprep.subr.mxu0 0.0
      %2187 = vmatpush1.msra.mxu0 %v2061
      %2188 = vmatprep.subr.mxu0 0.0
      %2189 = vmatpush1.msra.mxu0 %v2062
      %2190 = vmatprep.subr.mxu0 0.0
      %2191 = vmatpush1.msra.mxu0 %v2063
      %2192 = vmatprep.subr.mxu0 0.0
      %2193 = vmatpush1.msra.mxu0 %v2064
      %2194 = vmatprep.subr.mxu0 0.0
      %2195 = vmatpush1.msra.mxu0 %v2065
      %2196 = vmatprep.subr.mxu0 0.0
      %2197 = vmatpush1.msra.mxu0 %v2066
      %2198 = vmatprep.subr.mxu0 0.0
      %2199 = vmatpush1.msra.mxu0 %v2067
      %2200 = vmatprep.subr.mxu0 0.0
      %2201 = vmatpush1.msra.mxu0 0.0
      %2202 = vmatprep.subr.mxu0 0.0
      %2203 = vmatpush1.msra.mxu0 0.0
      %2204 = vmatprep.subr.mxu0 0.0
      %2205 = vmatpush1.msra.mxu0 0.0
      %2206 = vmatprep.subr.mxu0 0.0
      %2207 = vmatpush1.msra.mxu0 0.0
      %2208 = vmatprep.subr.mxu0 0.0
      %2209 = vmatpush1.msra.mxu0 0.0
      %2210 = vmatprep.subr.mxu0 0.0
      %2211 = vmatpush1.msra.mxu0 0.0
      %2212 = vmatprep.subr.mxu0 0.0
      %2213 = vmatpush1.msra.mxu0 0.0
      %2214 = vmatprep.subr.mxu0 0.0
      %2215 = vmatpush1.msra.mxu0 0.0
      %2216 = vmatprep.subr.mxu0 0.0
      %2217 = vmatpush1.msra.mxu0 0.0
      %2218 = vmatprep.subr.mxu0 0.0
      %2219 = vmatpush1.msra.mxu0 0.0
      %2220 = vmatprep.subr.mxu0 0.0
      %2221 = vmatpush1.msra.mxu0 0.0
      %2222 = vmatprep.subr.mxu0 0.0
      %2223 = vmatpush1.msra.mxu0 0.0
      %2224 = vmatprep.subr.mxu0 0.0
      %2225 = vmatpush1.msra.mxu0 0.0
      %2226 = vmatprep.subr.mxu0 0.0
      %2227 = vmatpush1.msra.mxu0 0.0
      %2228 = vmatprep.subr.mxu0 0.0
      %2229 = vmatpush1.msra.mxu0 0.0
      %2230 = vmatprep.subr.mxu0 0.0
      %2231 = vmatpush1.msra.mxu0 0.0
      %2232 = vmatprep.subr.mxu0 0.0
      %2233 = vmatpush1.msra.mxu0 0.0
      %2234 = vmatprep.subr.mxu0 0.0
      %2235 = vmatpush1.msra.mxu0 0.0
      %2236 = vmatprep.subr.mxu0 0.0
      %2237 = vmatpush1.msra.mxu0 0.0
      %2238 = vmatprep.subr.mxu0 0.0
      %2239 = vmatpush1.msra.mxu0 0.0
      %2240 = vmatprep.mubr.f32.mxu0 0.0
      %2241 = vmatmul.mubr.f32.gmra.mrb[0].mxu0 %v2164
      %v2242 = vpop.f32.mrb[0].mxu0
      %v2243 = vadd.f32 %v2162, %v2242
      %v2244 = vpop.f32.mrb[0].mxu0
      %2245 = vmatprep.mubr.f32.mxu0 0.0
      %2246 = vmatmul.mubr.f32.gmra.mrb[0].mxu0 %v2167
      %v2247 = vpop.f32.mrb[0].mxu0
      %v2248 = vadd.f32 %v2162, %v2247
      %v2249 = vpop.f32.mrb[0].mxu0
      %2250 = vmatprep.mubr.f32.mxu0 0.0
      %2251 = vmatmul.mubr.f32.gmra.mrb[0].mxu0 %v2170
      %v2252 = vpop.f32.mrb[0].mxu0
      %v2253 = vadd.f32 %v2162, %v2252
      %v2254 = vpop.f32.mrb[0].mxu0
      %2255 = vmatprep.mubr.f32.mxu0 0.0
      %2256 = vmatmul.mubr.f32.gmra.mrb[0].mxu0 %v2172
      %v2257 = vpop.f32.mrb[0].mxu0
      %v2258 = vadd.f32 %v2162, %v2257
      %v2259 = vpop.f32.mrb[0].mxu0
      %2260 = vmatprep.mubr.f32.mxu0 0.0
      %2261 = vmatmul.mubr.f32.gmra.mrb[0].mxu0 %v2174
      %v2262 = vpop.f32.mrb[0].mxu0
      %v2263 = vadd.f32 %v2162, %v2262
      %v2264 = vpop.f32.mrb[0].mxu0
      %2265 = vdwg.mxu0
      %v2266 = vmax.f32 %v2243, 0.0
      %v2267 = vmax.f32 %v2248, 0.0
      %v2268 = vmax.f32 %v2253, 0.0
      %v2269 = vmax.f32 %v2258, 0.0
      %v2270 = vmax.f32 %v2263, 0.0
      %v2276 = vrot.slane %v2266, 7
      %v2277 = vrot.slane %v2267, 7
      %v2278 = vsel %vm558, %v2276, %v2277
      %v2279 = vrot.slane %v2268, 7
      %v2280 = vsel %vm558, %v2277, %v2279
      %v2281 = vrot.slane %v2269, 7
      %v2282 = vsel %vm558, %v2279, %v2281
      %v2283 = vrot.slane %v2270, 7
      %v2284 = vsel %vm558, %v2281, %v2283
      %v2290 = vsel %vm558, 0.0, %v2276
      %v2291 = vsel %vm571, %v2284, 0.0
      %v2292 = vadd.s32 %v574, 32
      %vm2293 = vcmp.ne.s32.totalorder %v2292, 0
      %v2294 = vsel %vm2293, 1, 0
      %v2295 = vcvt.s32.f32 %v2294
      %vm2296 = vcmp.ne.s32.totalorder %v574, 17
      %vm2297 = vcmp.ne.s32.totalorder %v575, 17
      %vm2298 = vcmp.ne.s32.totalorder %v576, 17
      %vm2299 = vcmp.ne.s32.totalorder %v577, 17
      %vm2300 = vcmp.ne.s32.totalorder %v2292, 17
      %v2301 = vsel %vm2296, 1, 0
      %v2302 = vsel %vm2297, 1, 0
      %v2303 = vsel %vm2298, 1, 0
      %v2304 = vsel %vm2299, 1, 0
      %v2305 = vsel %vm2300, 1, 0
      %v2306 = vcvt.s32.f32 %v2301
      %v2307 = vcvt.s32.f32 %v2302
      %v2308 = vcvt.s32.f32 %v2303
      %v2309 = vcvt.s32.f32 %v2304
      %v2310 = vcvt.s32.f32 %v2305
      %vm2311 = vcmp.ne.s32.totalorder %v574, 18
      %vm2312 = vcmp.ne.s32.totalorder %v575, 18
      %vm2313 = vcmp.ne.s32.totalorder %v576, 18
      %vm2314 = vcmp.ne.s32.totalorder %v577, 18
      %vm2315 = vcmp.ne.s32.totalorder %v2292, 18
      %v2316 = vsel %vm2311, 1, 0
      %v2317 = vsel %vm2312, 1, 0
      %v2318 = vsel %vm2313, 1, 0
      %v2319 = vsel %vm2314, 1, 0
      %v2320 = vsel %vm2315, 1, 0
      %v2321 = vcvt.s32.f32 %v2316
      %v2322 = vcvt.s32.f32 %v2317
      %v2323 = vcvt.s32.f32 %v2318
      %v2324 = vcvt.s32.f32 %v2319
      %v2325 = vcvt.s32.f32 %v2320
      %v2326 = vmul.f32 %v586, %v2321
      %v2327 = vmul.f32 %v587, %v2322
      %v2328 = vmul.f32 %v588, %v2323
      %v2329 = vmul.f32 %v589, %v2324
      %v2330 = vmul.f32 %v2295, %v2325
      %vm2331 = vcmp.ne.s32.totalorder %v574, 35
      %vm2332 = vcmp.ne.s32.totalorder %v575, 35
      %vm2333 = vcmp.ne.s32.totalorder %v576, 35
      %vm2334 = vcmp.ne.s32.totalorder %v577, 35
      %vm2335 = vcmp.ne.s32.totalorder %v2292, 35
      %v2336 = vsel %vm2331, 1, 0
      %v2337 = vsel %vm2332, 1, 0
      %v2338 = vsel %vm2333, 1, 0
      %v2339 = vsel %vm2334, 1, 0
      %v2340 = vsel %vm2335, 1, 0
      %v2341 = vcvt.s32.f32 %v2336
      %v2342 = vcvt.s32.f32 %v2337
      %v2343 = vcvt.s32.f32 %v2338
      %v2344 = vcvt.s32.f32 %v2339
      %v2345 = vcvt.s32.f32 %v2340
      %v2346 = vmul.f32 %v2306, %v2341
      %v2347 = vmul.f32 %v2307, %v2342
      %v2348 = vmul.f32 %v2308, %v2343
      %v2349 = vmul.f32 %v2309, %v2344
      %v2350 = vmul.f32 %v2310, %v2345
      %v2351 = vmul.f32 %v2290, %v2326
      %v2352 = vmul.f32 %v2278, %v2327
      %v2353 = vmul.f32 %v2280, %v2328
      %v2354 = vmul.f32 %v2282, %v2329
      %v2355 = vmul.f32 %v2291, %v2330
      %v2361 = vrot.slane %v2346, 6
      %v2362 = vrot.slane %v2347, 6
      %v2363 = vsel %vm642, %v2361, %v2362
      %v2364 = vrot.slane %v2348, 6
      %v2365 = vsel %vm642, %v2362, %v2364
      %v2366 = vrot.slane %v2349, 6
      %v2367 = vsel %vm642, %v2364, %v2366
      %v2368 = vrot.slane %v2350, 6
      %v2369 = vsel %vm642, %v2366, %v2368
      %v2375 = vmul.f32 %v2290, %v2361
      %v2376 = vmul.f32 %v2278, %v2363
      %v2377 = vmul.f32 %v2280, %v2365
      %v2378 = vmul.f32 %v2282, %v2367
      %v2379 = vmul.f32 %v2291, %v2369
      %2380 = vrot.lane.b32.xlu0 %v2266, 32
      %v2381 = vpop.permute.xlu0 %2380
      %2382 = vrot.lane.b32.xlu0 %v2267, 32
      %v2383 = vpop.permute.xlu0 %2382
      %2384 = vrot.lane.b32.xlu0 %v2268, 32
      %v2385 = vpop.permute.xlu0 %2384
      %2386 = vrot.lane.b32.xlu0 %v2269, 32
      %v2387 = vpop.permute.xlu0 %2386
      %2388 = vrot.lane.b32.xlu0 %v2270, 32
      %v2389 = vpop.permute.xlu0 %2388
      %v2400 = vrot.slane %v2375, 2
      %v2401 = vrot.slane %v2376, 2
      %v2402 = vsel %vm400, %v2400, %v2401
      %v2403 = vrot.slane %v2377, 2
      %v2404 = vsel %vm400, %v2401, %v2403
      %v2405 = vrot.slane %v2378, 2
      %v2406 = vsel %vm400, %v2403, %v2405
      %v2407 = vrot.slane %v2379, 2
      %v2408 = vsel %vm400, %v2405, %v2407
      %2409 = vrot.lane.b32.xlu0 %v2402, 64
      %v2410 = vpop.permute.xlu0 %2409
      %2411 = vrot.lane.b32.xlu0 %v2404, 64
      %v2412 = vpop.permute.xlu0 %2411
      %2413 = vrot.lane.b32.xlu0 %v2406, 64
      %v2414 = vpop.permute.xlu0 %2413
      %2415 = vrot.lane.b32.xlu0 %v2408, 64
      %v2416 = vpop.permute.xlu0 %2415
      %2417 = vrot.lane.b32.xlu0 %v2407, 64
      %v2418 = vpop.permute.xlu0 %2417
      %v2424 = vsel %vm410, %v2351, %v2381
      %v2425 = vsel %vm410, %v2352, %v2383
      %v2426 = vsel %vm410, %v2353, %v2385
      %v2427 = vsel %vm410, %v2354, %v2387
      %v2428 = vsel %vm410, %v2355, %v2389
      %v2429 = vsel %vm413, %v2424, %v2410
      %v2430 = vsel %vm413, %v2425, %v2412
      %v2431 = vsel %vm413, %v2426, %v2414
      %v2432 = vsel %vm413, %v2427, %v2416
      %v2433 = vsel %vm413, %v2428, %v2418
      %v2435 = vsel %vm454, %v2429, 0
      %v2438 = vsel %vm454, %v2430, 0
      %v2441 = vsel %vm454, %v2431, 0
      %v2444 = vsel %vm454, %v2432, 0
      %v2447 = vsel %vm454, %v2433, 0
      %2449 = vmatprep.subr.mxu0 0.0
      %2450 = vmatpush1.msra.mxu0 %v361
      %2451 = vmatprep.subr.mxu0 0.0
      %2452 = vmatpush1.msra.mxu0 %v362
      %2453 = vmatprep.subr.mxu0 0.0
      %2454 = vmatpush1.msra.mxu0 %v363
      %2455 = vmatprep.subr.mxu0 0.0
      %2456 = vmatpush1.msra.mxu0 %v364
      %2457 = vmatprep.subr.mxu0 0.0
      %2458 = vmatpush1.msra.mxu0 %v365
      %2459 = vmatprep.subr.mxu0 0.0
      %2460 = vmatpush1.msra.mxu0 %v366
      %2461 = vmatprep.subr.mxu0 0.0
      %2462 = vmatpush1.msra.mxu0 %v367
      %2463 = vmatprep.subr.mxu0 0.0
      %2464 = vmatpush1.msra.mxu0 %v368
      %2465 = vmatprep.subr.mxu0 0.0
      %2466 = vmatpush1.msra.mxu0 %v369
      %2467 = vmatprep.subr.mxu0 0.0
      %2468 = vmatpush1.msra.mxu0 %v370
      %2469 = vmatprep.subr.mxu0 0.0
      %2470 = vmatpush1.msra.mxu0 %v371
      %2471 = vmatprep.subr.mxu0 0.0
      %2472 = vmatpush1.msra.mxu0 %v372
      %2473 = vmatprep.subr.mxu0 0.0
      %2474 = vmatpush1.msra.mxu0 0.0
      %2475 = vmatprep.subr.mxu0 0.0
      %2476 = vmatpush1.msra.mxu0 0.0
      %2477 = vmatprep.subr.mxu0 0.0
      %2478 = vmatpush1.msra.mxu0 0.0
      %2479 = vmatprep.subr.mxu0 0.0
      %2480 = vmatpush1.msra.mxu0 0.0
      %2481 = vmatprep.subr.mxu0 0.0
      %2482 = vmatpush1.msra.mxu0 0.0
      %2483 = vmatprep.subr.mxu0 0.0
      %2484 = vmatpush1.msra.mxu0 0.0
      %2485 = vmatprep.subr.mxu0 0.0
      %2486 = vmatpush1.msra.mxu0 0.0
      %2487 = vmatprep.subr.mxu0 0.0
      %2488 = vmatpush1.msra.mxu0 0.0
      %2489 = vmatprep.subr.mxu0 0.0
      %2490 = vmatpush1.msra.mxu0 0.0
      %2491 = vmatprep.subr.mxu0 0.0
      %2492 = vmatpush1.msra.mxu0 0.0
      %2493 = vmatprep.subr.mxu0 0.0
      %2494 = vmatpush1.msra.mxu0 0.0
      %2495 = vmatprep.subr.mxu0 0.0
      %2496 = vmatpush1.msra.mxu0 0.0
      %2497 = vmatprep.subr.mxu0 0.0
      %2498 = vmatpush1.msra.mxu0 0.0
      %2499 = vmatprep.subr.mxu0 0.0
      %2500 = vmatpush1.msra.mxu0 0.0
      %2501 = vmatprep.subr.mxu0 0.0
      %2502 = vmatpush1.msra.mxu0 0.0
      %2503 = vmatprep.subr.mxu0 0.0
      %2504 = vmatpush1.msra.mxu0 0.0
      %2505 = vmatprep.subr.mxu0 0.0
      %2506 = vmatpush1.msra.mxu0 0.0
      %2507 = vmatprep.subr.mxu0 0.0
      %2508 = vmatpush1.msra.mxu0 0.0
      %2509 = vmatprep.subr.mxu0 0.0
      %2510 = vmatpush1.msra.mxu0 0.0
      %2511 = vmatprep.subr.mxu0 0.0
      %2512 = vmatpush1.msra.mxu0 0.0
      %2513 = vmatprep.mubr.f32.mxu0 0.0
      %2514 = vmatmul.mubr.f32.gmra.mrb[0].mxu0 %v2435
      %v2515 = vpop.f32.mrb[0].mxu0
      %v2516 = vadd.f32 %v704, %v2515
      %v2517 = vpop.f32.mrb[0].mxu0
      %2518 = vmatprep.mubr.f32.mxu0 0.0
      %2519 = vmatmul.mubr.f32.gmra.mrb[0].mxu0 %v2438
      %v2520 = vpop.f32.mrb[0].mxu0
      %v2521 = vadd.f32 %v704, %v2520
      %v2522 = vpop.f32.mrb[0].mxu0
      %2523 = vmatprep.mubr.f32.mxu0 0.0
      %2524 = vmatmul.mubr.f32.gmra.mrb[0].mxu0 %v2441
      %v2525 = vpop.f32.mrb[0].mxu0
      %v2526 = vadd.f32 %v704, %v2525
      %v2527 = vpop.f32.mrb[0].mxu0
      %2528 = vmatprep.mubr.f32.mxu0 0.0
      %2529 = vmatmul.mubr.f32.gmra.mrb[0].mxu0 %v2444
      %v2530 = vpop.f32.mrb[0].mxu0
      %v2531 = vadd.f32 %v704, %v2530
      %v2532 = vpop.f32.mrb[0].mxu0
      %2533 = vmatprep.mubr.f32.mxu0 0.0
      %2534 = vmatmul.mubr.f32.gmra.mrb[0].mxu0 %v2447
      %v2535 = vpop.f32.mrb[0].mxu0
      %v2536 = vadd.f32 %v704, %v2535
      %v2537 = vpop.f32.mrb[0].mxu0
      %2538 = vdwg.mxu0
      %v2539 = vmax.f32 %v2516, 0.0
      %v2540 = vmax.f32 %v2521, 0.0
      %v2541 = vmax.f32 %v2526, 0.0
      %v2542 = vmax.f32 %v2531, 0.0
      %v2543 = vmax.f32 %v2536, 0.0
      %v2549 = vrot.slane %v2539, 7
      %v2550 = vrot.slane %v2540, 7
      %v2551 = vsel %vm558, %v2549, %v2550
      %v2552 = vrot.slane %v2541, 7
      %v2553 = vsel %vm558, %v2550, %v2552
      %v2554 = vrot.slane %v2542, 7
      %v2555 = vsel %vm558, %v2552, %v2554
      %v2556 = vrot.slane %v2543, 7
      %v2557 = vsel %vm558, %v2554, %v2556
      %v2563 = vsel %vm558, 0.0, %v2549
      %v2564 = vsel %vm571, %v2557, 0.0
      %v2565 = vmul.f32 %v2563, %v2326
      %v2566 = vmul.f32 %v2551, %v2327
      %v2567 = vmul.f32 %v2553, %v2328
      %v2568 = vmul.f32 %v2555, %v2329
      %v2569 = vmul.f32 %v2564, %v2330
      %v2570 = vmul.f32 %v2563, %v2361
      %v2571 = vmul.f32 %v2551, %v2363
      %v2572 = vmul.f32 %v2553, %v2365
      %v2573 = vmul.f32 %v2555, %v2367
      %v2574 = vmul.f32 %v2564, %v2369
      %2575 = vrot.lane.b32.xlu0 %v2539, 32
      %v2576 = vpop.permute.xlu0 %2575
      %2577 = vrot.lane.b32.xlu0 %v2540, 32
      %v2578 = vpop.permute.xlu0 %2577
      %2579 = vrot.lane.b32.xlu0 %v2541, 32
      %v2580 = vpop.permute.xlu0 %2579
      %2581 = vrot.lane.b32.xlu0 %v2542, 32
      %v2582 = vpop.permute.xlu0 %2581
      %2583 = vrot.lane.b32.xlu0 %v2543, 32
      %v2584 = vpop.permute.xlu0 %2583
      %v2595 = vrot.slane %v2570, 2
      %v2596 = vrot.slane %v2571, 2
      %v2597 = vsel %vm400, %v2595, %v2596
      %v2598 = vrot.slane %v2572, 2
      %v2599 = vsel %vm400, %v2596, %v2598
      %v2600 = vrot.slane %v2573, 2
      %v2601 = vsel %vm400, %v2598, %v2600
      %v2602 = vrot.slane %v2574, 2
      %v2603 = vsel %vm400, %v2600, %v2602
      %2604 = vrot.lane.b32.xlu0 %v2597, 64
      %v2605 = vpop.permute.xlu0 %2604
      %2606 = vrot.lane.b32.xlu0 %v2599, 64
      %v2607 = vpop.permute.xlu0 %2606
      %2608 = vrot.lane.b32.xlu0 %v2601, 64
      %v2609 = vpop.permute.xlu0 %2608
      %2610 = vrot.lane.b32.xlu0 %v2603, 64
      %v2611 = vpop.permute.xlu0 %2610
      %2612 = vrot.lane.b32.xlu0 %v2602, 64
      %v2613 = vpop.permute.xlu0 %2612
      %v2619 = vsel %vm410, %v2565, %v2576
      %v2620 = vsel %vm410, %v2566, %v2578
      %v2621 = vsel %vm410, %v2567, %v2580
      %v2622 = vsel %vm410, %v2568, %v2582
      %v2623 = vsel %vm410, %v2569, %v2584
      %v2624 = vsel %vm413, %v2619, %v2605
      %v2625 = vsel %vm413, %v2620, %v2607
      %v2626 = vsel %vm413, %v2621, %v2609
      %v2627 = vsel %vm413, %v2622, %v2611
      %v2628 = vsel %vm413, %v2623, %v2613
      %v2630 = vsel %vm454, %v2624, 0
      %v2633 = vsel %vm454, %v2625, 0
      %v2636 = vsel %vm454, %v2626, 0
      %v2639 = vsel %vm454, %v2627, 0
      %v2642 = vsel %vm454, %v2628, 0
      %2644 = vmatprep.subr.mxu0 0.0
      %2645 = vmatpush1.msra.mxu0 %v361
      %2646 = vmatprep.subr.mxu0 0.0
      %2647 = vmatpush1.msra.mxu0 %v362
      %2648 = vmatprep.subr.mxu0 0.0
      %2649 = vmatpush1.msra.mxu0 %v363
      %2650 = vmatprep.subr.mxu0 0.0
      %2651 = vmatpush1.msra.mxu0 %v364
      %2652 = vmatprep.subr.mxu0 0.0
      %2653 = vmatpush1.msra.mxu0 %v365
      %2654 = vmatprep.subr.mxu0 0.0
      %2655 = vmatpush1.msra.mxu0 %v366
      %2656 = vmatprep.subr.mxu0 0.0
      %2657 = vmatpush1.msra.mxu0 %v367
      %2658 = vmatprep.subr.mxu0 0.0
      %2659 = vmatpush1.msra.mxu0 %v368
      %2660 = vmatprep.subr.mxu0 0.0
      %2661 = vmatpush1.msra.mxu0 %v369
      %2662 = vmatprep.subr.mxu0 0.0
      %2663 = vmatpush1.msra.mxu0 %v370
      %2664 = vmatprep.subr.mxu0 0.0
      %2665 = vmatpush1.msra.mxu0 %v371
      %2666 = vmatprep.subr.mxu0 0.0
      %2667 = vmatpush1.msra.mxu0 %v372
      %2668 = vmatprep.subr.mxu0 0.0
      %2669 = vmatpush1.msra.mxu0 0.0
      %2670 = vmatprep.subr.mxu0 0.0
      %2671 = vmatpush1.msra.mxu0 0.0
      %2672 = vmatprep.subr.mxu0 0.0
      %2673 = vmatpush1.msra.mxu0 0.0
      %2674 = vmatprep.subr.mxu0 0.0
      %2675 = vmatpush1.msra.mxu0 0.0
      %2676 = vmatprep.subr.mxu0 0.0
      %2677 = vmatpush1.msra.mxu0 0.0
      %2678 = vmatprep.subr.mxu0 0.0
      %2679 = vmatpush1.msra.mxu0 0.0
      %2680 = vmatprep.subr.mxu0 0.0
      %2681 = vmatpush1.msra.mxu0 0.0
      %2682 = vmatprep.subr.mxu0 0.0
      %2683 = vmatpush1.msra.mxu0 0.0
      %2684 = vmatprep.subr.mxu0 0.0
      %2685 = vmatpush1.msra.mxu0 0.0
      %2686 = vmatprep.subr.mxu0 0.0
      %2687 = vmatpush1.msra.mxu0 0.0
      %2688 = vmatprep.subr.mxu0 0.0
      %2689 = vmatpush1.msra.mxu0 0.0
      %2690 = vmatprep.subr.mxu0 0.0
      %2691 = vmatpush1.msra.mxu0 0.0
      %2692 = vmatprep.subr.mxu0 0.0
      %2693 = vmatpush1.msra.mxu0 0.0
      %2694 = vmatprep.subr.mxu0 0.0
      %2695 = vmatpush1.msra.mxu0 0.0
      %2696 = vmatprep.subr.mxu0 0.0
      %2697 = vmatpush1.msra.mxu0 0.0
      %2698 = vmatprep.subr.mxu0 0.0
      %2699 = vmatpush1.msra.mxu0 0.0
      %2700 = vmatprep.subr.mxu0 0.0
      %2701 = vmatpush1.msra.mxu0 0.0
      %2702 = vmatprep.subr.mxu0 0.0
      %2703 = vmatpush1.msra.mxu0 0.0
      %2704 = vmatprep.subr.mxu0 0.0
      %2705 = vmatpush1.msra.mxu0 0.0
      %2706 = vmatprep.subr.mxu0 0.0
      %2707 = vmatpush1.msra.mxu0 0.0
      %2708 = vmatprep.mubr.f32.mxu0 0.0
      %2709 = vmatmul.mubr.f32.gmra.mrb[0].mxu0 %v2630
      %v2710 = vpop.f32.mrb[0].mxu0
      %v2711 = vadd.f32 %v704, %v2710
      %v2712 = vpop.f32.mrb[0].mxu0
      %2713 = vmatprep.mubr.f32.mxu0 0.0
      %2714 = vmatmul.mubr.f32.gmra.mrb[0].mxu0 %v2633
      %v2715 = vpop.f32.mrb[0].mxu0
      %v2716 = vadd.f32 %v704, %v2715
      %v2717 = vpop.f32.mrb[0].mxu0
      %2718 = vmatprep.mubr.f32.mxu0 0.0
      %2719 = vmatmul.mubr.f32.gmra.mrb[0].mxu0 %v2636
      %v2720 = vpop.f32.mrb[0].mxu0
      %v2721 = vadd.f32 %v704, %v2720
      %v2722 = vpop.f32.mrb[0].mxu0
      %2723 = vmatprep.mubr.f32.mxu0 0.0
      %2724 = vmatmul.mubr.f32.gmra.mrb[0].mxu0 %v2639
      %v2725 = vpop.f32.mrb[0].mxu0
      %v2726 = vadd.f32 %v704, %v2725
      %v2727 = vpop.f32.mrb[0].mxu0
      %2728 = vmatprep.mubr.f32.mxu0 0.0
      %2729 = vmatmul.mubr.f32.gmra.mrb[0].mxu0 %v2642
      %v2730 = vpop.f32.mrb[0].mxu0
      %v2731 = vadd.f32 %v704, %v2730
      %v2732 = vpop.f32.mrb[0].mxu0
      %2733 = vdwg.mxu0
      %v2734 = vmul.u32 %v575, 2
      %vm2735 = vcmp.eq.s32.totalorder %v972, %v2734
      %vm2736 = vcmp.lt.s32.totalorder %v973, 18
      %vm2737 = vcmp.lt.s32.totalorder %v2734, 18
      %vm2738 = vmand %vm974, %vm2736
      %vm2739 = vmand %vm2735, %vm2737
      %v2740 = vsel %vm2738, 1, 0
      %v2741 = vsel %vm2739, 1, 0
      %v2742 = vcvt.s32.f32 %v2740
      %v2743 = vcvt.s32.f32 %v2741
      %v2744 = vadd.s32 %v973, 18
      %v2745 = vadd.s32 %v2734, 18
      %vm2746 = vcmp.eq.s32.totalorder %v972, %v2744
      %vm2747 = vcmp.eq.s32.totalorder %v972, %v2745
      %vm2748 = vmand %vm2746, %vm2736
      %vm2749 = vmand %vm2747, %vm2737
      %v2750 = vsel %vm2748, 1, 0
      %v2751 = vsel %vm2749, 1, 0
      %v2752 = vcvt.s32.f32 %v2750
      %v2753 = vcvt.s32.f32 %v2751
      %v2754 = vadd.s32 %v2734, 1
      %vm2755 = vcmp.eq.s32.totalorder %v972, %v2754
      %vm2756 = vcmp.lt.s32.totalorder %v984, 18
      %vm2757 = vcmp.lt.s32.totalorder %v2754, 18
      %vm2758 = vmand %vm985, %vm2756
      %vm2759 = vmand %vm2755, %vm2757
      %v2760 = vsel %vm2758, 1, 0
      %v2761 = vsel %vm2759, 1, 0
      %v2762 = vcvt.s32.f32 %v2760
      %v2763 = vcvt.s32.f32 %v2761
      %v2764 = vadd.s32 %v2744, 1
      %v2765 = vadd.s32 %v2745, 1
      %vm2766 = vcmp.eq.s32.totalorder %v972, %v2764
      %vm2767 = vcmp.eq.s32.totalorder %v972, %v2765
      %vm2768 = vmand %vm2766, %vm2756
      %vm2769 = vmand %vm2767, %vm2757
      %v2770 = vsel %vm2768, 1, 0
      %v2771 = vsel %vm2769, 1, 0
      %v2772 = vcvt.s32.f32 %v2770
      %v2773 = vcvt.s32.f32 %v2771
      %v2774 = vadd.s32 %v2734, 2
      %vm2775 = vcmp.eq.s32.totalorder %v972, %v2774
      %vm2776 = vcmp.lt.s32.totalorder %v995, 18
      %vm2777 = vcmp.lt.s32.totalorder %v2774, 18
      %vm2778 = vmand %vm996, %vm2776
      %vm2779 = vmand %vm2775, %vm2777
      %v2780 = vsel %vm2778, 1, 0
      %v2781 = vsel %vm2779, 1, 0
      %v2782 = vcvt.s32.f32 %v2780
      %v2783 = vcvt.s32.f32 %v2781
      %v2784 = vadd.s32 %v2744, 2
      %v2785 = vadd.s32 %v2745, 2
      %vm2786 = vcmp.eq.s32.totalorder %v972, %v2784
      %vm2787 = vcmp.eq.s32.totalorder %v972, %v2785
      %vm2788 = vmand %vm2786, %vm2776
      %vm2789 = vmand %vm2787, %vm2777
      %v2790 = vsel %vm2788, 1, 0
      %v2791 = vsel %vm2789, 1, 0
      %v2792 = vcvt.s32.f32 %v2790
      %v2793 = vcvt.s32.f32 %v2791
      %v2796 = vrot.slane %v2752, 7
      %v2797 = vrot.slane %v2753, 7
      %v2798 = vsel %vm558, %v2796, %v2797
      %v2803 = vrot.slane %v2762, 6
      %v2804 = vrot.slane %v2763, 6
      %v2805 = vsel %vm642, %v2803, %v2804
      %v2810 = vrot.slane %v2772, 5
      %v2811 = vrot.slane %v2773, 5
      %v2812 = vsel %vm1026, %v2810, %v2811
      %v2817 = vrot.slane %v2782, 4
      %v2818 = vrot.slane %v2783, 4
      %v2819 = vsel %vm1024, %v2817, %v2818
      %v2824 = vrot.slane %v2792, 3
      %v2825 = vrot.slane %v2793, 3
      %v2826 = vsel %vm571, %v2824, %v2825
      %v2828 = vsel %vm558, %v2743, %v2796
      %v2829 = vsel %vm642, %v2798, %v2803
      %v2830 = vsel %vm1026, %v2805, %v2810
      %v2831 = vsel %vm1024, %v2812, %v2817
      %v2832 = vsel %vm571, %v2819, %v2824
      %vm2833 = vcmask 293888
      %v2835 = vsel %vm2833, %v2742, 0
      %v2838 = vsel %vm2833, %v2828, 0
      %v2841 = vsel %vm2833, %v2829, 0
      %v2844 = vsel %vm2833, %v2830, 0
      %v2847 = vsel %vm2833, %v2831, 0
      %v2850 = vsel %vm2833, %v2832, 0
      %v2852 = vsel %vm2833, %v2826, 0
      %v2855 = vsel %vm1024, %v2731, 0
      %2857 = vmatprep.subr.mxu0 0.0
      %2858 = vmatpush1.msra.mxu0 %v2711
      %2859 = vmatprep.subr.mxu0 0.0
      %2860 = vmatpush1.msra.mxu0 %v2716
      %2861 = vmatprep.subr.mxu0 0.0
      %2862 = vmatpush1.msra.mxu0 %v2721
      %2863 = vmatprep.subr.mxu0 0.0
      %2864 = vmatpush1.msra.mxu0 %v2726
      %2865 = vmatprep.subr.mxu0 0.0
      %2866 = vmatpush1.msra.mxu0 %v2855
      %2867 = vmatprep.subr.mxu0 0.0
      %2868 = vmatpush1.msra.mxu0 0.0
      %2869 = vmatprep.subr.mxu0 0.0
      %2870 = vmatpush1.msra.mxu0 0.0
      %2871 = vmatprep.subr.mxu0 0.0
      %2872 = vmatpush1.msra.mxu0 0.0
      %2873 = vmatprep.subr.mxu0 0.0
      %2874 = vmatpush1.msra.mxu0 0.0
      %2875 = vmatprep.subr.mxu0 0.0
      %2876 = vmatpush1.msra.mxu0 0.0
      %2877 = vmatprep.subr.mxu0 0.0
      %2878 = vmatpush1.msra.mxu0 0.0
      %2879 = vmatprep.subr.mxu0 0.0
      %2880 = vmatpush1.msra.mxu0 0.0
      %2881 = vmatprep.subr.mxu0 0.0
      %2882 = vmatpush1.msra.mxu0 0.0
      %2883 = vmatprep.subr.mxu0 0.0
      %2884 = vmatpush1.msra.mxu0 0.0
      %2885 = vmatprep.subr.mxu0 0.0
      %2886 = vmatpush1.msra.mxu0 0.0
      %2887 = vmatprep.subr.mxu0 0.0
      %2888 = vmatpush1.msra.mxu0 0.0
      %2889 = vmatprep.subr.mxu0 0.0
      %2890 = vmatpush1.msra.mxu0 0.0
      %2891 = vmatprep.subr.mxu0 0.0
      %2892 = vmatpush1.msra.mxu0 0.0
      %2893 = vmatprep.subr.mxu0 0.0
      %2894 = vmatpush1.msra.mxu0 0.0
      %2895 = vmatprep.subr.mxu0 0.0
      %2896 = vmatpush1.msra.mxu0 0.0
      %2897 = vmatprep.subr.mxu0 0.0
      %2898 = vmatpush1.msra.mxu0 0.0
      %2899 = vmatprep.subr.mxu0 0.0
      %2900 = vmatpush1.msra.mxu0 0.0
      %2901 = vmatprep.subr.mxu0 0.0
      %2902 = vmatpush1.msra.mxu0 0.0
      %2903 = vmatprep.subr.mxu0 0.0
      %2904 = vmatpush1.msra.mxu0 0.0
      %2905 = vmatprep.subr.mxu0 0.0
      %2906 = vmatpush1.msra.mxu0 0.0
      %2907 = vmatprep.subr.mxu0 0.0
      %2908 = vmatpush1.msra.mxu0 0.0
      %2909 = vmatprep.subr.mxu0 0.0
      %2910 = vmatpush1.msra.mxu0 0.0
      %2911 = vmatprep.subr.mxu0 0.0
      %2912 = vmatpush1.msra.mxu0 0.0
      %2913 = vmatprep.subr.mxu0 0.0
      %2914 = vmatpush1.msra.mxu0 0.0
      %2915 = vmatprep.subr.mxu0 0.0
      %2916 = vmatpush1.msra.mxu0 0.0
      %2917 = vmatprep.subr.mxu0 0.0
      %2918 = vmatpush1.msra.mxu0 0.0
      %2919 = vmatprep.subr.mxu0 0.0
      %2920 = vmatpush1.msra.mxu0 0.0
      %2921 = vmatprep.mubr.f32.mxu0 0.0
      %2922 = vmatmul.mubr.f32.gmra.mrb[0].mxu0 %v2835
      %v2923 = vpop.f32.mrb[0].mxu0
      %v2924 = vadd.f32 0.0, %v2923
      %v2925 = vpop.f32.mrb[0].mxu0
      %2926 = vmatprep.mubr.f32.mxu0 0.0
      %2927 = vmatmul.mubr.f32.gmra.mrb[0].mxu0 %v2838
      %v2928 = vpop.f32.mrb[0].mxu0
      %v2929 = vadd.f32 0.0, %v2928
      %v2930 = vpop.f32.mrb[0].mxu0
      %2931 = vmatprep.mubr.f32.mxu0 0.0
      %2932 = vmatmul.mubr.f32.gmra.mrb[0].mxu0 %v2841
      %v2933 = vpop.f32.mrb[0].mxu0
      %v2934 = vadd.f32 0.0, %v2933
      %v2935 = vpop.f32.mrb[0].mxu0
      %2936 = vmatprep.mubr.f32.mxu0 0.0
      %2937 = vmatmul.mubr.f32.gmra.mrb[0].mxu0 %v2844
      %v2938 = vpop.f32.mrb[0].mxu0
      %v2939 = vadd.f32 0.0, %v2938
      %v2940 = vpop.f32.mrb[0].mxu0
      %2941 = vmatprep.mubr.f32.mxu0 0.0
      %2942 = vmatmul.mubr.f32.gmra.mrb[0].mxu0 %v2847
      %v2943 = vpop.f32.mrb[0].mxu0
      %v2944 = vadd.f32 0.0, %v2943
      %v2945 = vpop.f32.mrb[0].mxu0
      %2946 = vmatprep.mubr.f32.mxu0 0.0
      %2947 = vmatmul.mubr.f32.gmra.mrb[0].mxu0 %v2850
      %v2948 = vpop.f32.mrb[0].mxu0
      %v2949 = vadd.f32 0.0, %v2948
      %v2950 = vpop.f32.mrb[0].mxu0
      %2951 = vmatprep.mubr.f32.mxu0 0.0
      %2952 = vmatmul.mubr.f32.gmra.mrb[0].mxu0 %v2852
      %v2953 = vpop.f32.mrb[0].mxu0
      %v2954 = vadd.f32 0.0, %v2953
      %v2955 = vpop.f32.mrb[0].mxu0
      %2956 = vdwg.mxu0
      %v2960 = vrot.slane %v2934, 2
      %v2961 = vrot.slane %v2939, 2
      %v2962 = vsel %vm400, %v2960, %v2961
      %v2963 = vrot.slane %v2944, 2
      %v2964 = vsel %vm400, %v2961, %v2963
      %v2968 = vmax.f32 %v2924, %v2962
      %v2969 = vmax.f32 %v2929, %v2964
      %v2970 = vmax.f32 %v2934, %v2963
      %v2973 = vrot.slane %v2944, 4
      %v2974 = vrot.slane %v2949, 4
      %v2975 = vsel %vm1024, %v2973, %v2974
      %v2976 = vrot.slane %v2954, 4
      %v2977 = vsel %vm1024, %v2974, %v2976
      %v2981 = vmax.f32 %v2968, %v2975
      %v2982 = vmax.f32 %v2969, %v2977
      %v2983 = vmax.f32 %v2970, %v2976
      %v2984 = vmax.f32 %v2981, 0.0
      %v2985 = vmax.f32 %v2982, 0.0
      %v2986 = vmax.f32 %v2983, 0.0
      %v2990 = vrot.slane %v2984, 7
      %v2991 = vrot.slane %v2985, 7
      %v2992 = vsel %vm558, %v2990, %v2991
      %v2993 = vrot.slane %v2986, 7
      %v2994 = vsel %vm558, %v2991, %v2993
      %v2998 = vsel %vm558, 0.0, %v2990
      %v2999 = vsel %vm1026, %v2994, 0.0
      %vm3000 = vcmp.ne.s32.totalorder %v574, 8
      %vm3001 = vcmp.ne.s32.totalorder %v575, 8
      %vm3002 = vcmp.ne.s32.totalorder %v576, 8
      %v3003 = vsel %vm3000, 1, 0
      %v3004 = vsel %vm3001, 1, 0
      %v3005 = vsel %vm3002, 1, 0
      %v3006 = vcvt.s32.f32 %v3003
      %v3007 = vcvt.s32.f32 %v3004
      %v3008 = vcvt.s32.f32 %v3005
      %vm3009 = vcmp.ne.s32.totalorder %v574, 9
      %vm3010 = vcmp.ne.s32.totalorder %v575, 9
      %vm3011 = vcmp.ne.s32.totalorder %v576, 9
      %v3012 = vsel %vm3009, 1, 0
      %v3013 = vsel %vm3010, 1, 0
      %v3014 = vsel %vm3011, 1, 0
      %v3015 = vcvt.s32.f32 %v3012
      %v3016 = vcvt.s32.f32 %v3013
      %v3017 = vcvt.s32.f32 %v3014
      %v3018 = vmul.f32 %v586, %v3015
      %v3019 = vmul.f32 %v587, %v3016
      %v3020 = vmul.f32 %v588, %v3017
      %v3021 = vmul.f32 %v3006, %v2306
      %v3022 = vmul.f32 %v3007, %v2307
      %v3023 = vmul.f32 %v3008, %v2308
      %v3024 = vmul.f32 %v2998, %v3018
      %v3025 = vmul.f32 %v2992, %v3019
      %v3026 = vmul.f32 %v2999, %v3020
      %v3030 = vrot.slane %v3021, 6
      %v3031 = vrot.slane %v3022, 6
      %v3032 = vsel %vm642, %v3030, %v3031
      %v3033 = vrot.slane %v3023, 6
      %v3034 = vsel %vm642, %v3031, %v3033
      %v3038 = vmul.f32 %v2998, %v3030
      %v3039 = vmul.f32 %v2992, %v3032
      %v3040 = vmul.f32 %v2999, %v3034
      %3041 = vrot.lane.b32.xlu0 %v2984, 32
      %v3042 = vpop.permute.xlu0 %3041
      %3043 = vrot.lane.b32.xlu0 %v2985, 32
      %v3044 = vpop.permute.xlu0 %3043
      %3045 = vrot.lane.b32.xlu0 %v2986, 32
      %v3046 = vpop.permute.xlu0 %3045
      %v3053 = vrot.slane %v3038, 2
      %v3054 = vrot.slane %v3039, 2
      %v3055 = vsel %vm400, %v3053, %v3054
      %v3056 = vrot.slane %v3040, 2
      %v3057 = vsel %vm400, %v3054, %v3056
      %3058 = vrot.lane.b32.xlu0 %v3055, 64
      %v3059 = vpop.permute.xlu0 %3058
      %3060 = vrot.lane.b32.xlu0 %v3057, 64
      %v3061 = vpop.permute.xlu0 %3060
      %3062 = vrot.lane.b32.xlu0 %v3056, 64
      %v3063 = vpop.permute.xlu0 %3062
      %v3067 = vsel %vm410, %v3024, %v3042
      %v3068 = vsel %vm410, %v3025, %v3044
      %v3069 = vsel %vm410, %v3026, %v3046
      %v3070 = vsel %vm413, %v3067, %v3059
      %v3071 = vsel %vm413, %v3068, %v3061
      %v3072 = vsel %vm413, %v3069, %v3063
      %v3074 = vsel %vm454, %v3070, 0
      %v3077 = vsel %vm454, %v3071, 0
      %v3080 = vsel %vm454, %v3072, 0
      %3082 = vmatprep.subr.mxu0 0.0
      %3083 = vmatpush1.msra.mxu0 %v361
      %3084 = vmatprep.subr.mxu0 0.0
      %3085 = vmatpush1.msra.mxu0 %v362
      %3086 = vmatprep.subr.mxu0 0.0
      %3087 = vmatpush1.msra.mxu0 %v363
      %3088 = vmatprep.subr.mxu0 0.0
      %3089 = vmatpush1.msra.mxu0 %v364
      %3090 = vmatprep.subr.mxu0 0.0
      %3091 = vmatpush1.msra.mxu0 %v365
      %3092 = vmatprep.subr.mxu0 0.0
      %3093 = vmatpush1.msra.mxu0 %v366
      %3094 = vmatprep.subr.mxu0 0.0
      %3095 = vmatpush1.msra.mxu0 %v367
      %3096 = vmatprep.subr.mxu0 0.0
      %3097 = vmatpush1.msra.mxu0 %v368
      %3098 = vmatprep.subr.mxu0 0.0
      %3099 = vmatpush1.msra.mxu0 %v369
      %3100 = vmatprep.subr.mxu0 0.0
      %3101 = vmatpush1.msra.mxu0 %v370
      %3102 = vmatprep.subr.mxu0 0.0
      %3103 = vmatpush1.msra.mxu0 %v371
      %3104 = vmatprep.subr.mxu0 0.0
      %3105 = vmatpush1.msra.mxu0 %v372
      %3106 = vmatprep.subr.mxu0 0.0
      %3107 = vmatpush1.msra.mxu0 0.0
      %3108 = vmatprep.subr.mxu0 0.0
      %3109 = vmatpush1.msra.mxu0 0.0
      %3110 = vmatprep.subr.mxu0 0.0
      %3111 = vmatpush1.msra.mxu0 0.0
      %3112 = vmatprep.subr.mxu0 0.0
      %3113 = vmatpush1.msra.mxu0 0.0
      %3114 = vmatprep.subr.mxu0 0.0
      %3115 = vmatpush1.msra.mxu0 0.0
      %3116 = vmatprep.subr.mxu0 0.0
      %3117 = vmatpush1.msra.mxu0 0.0
      %3118 = vmatprep.subr.mxu0 0.0
      %3119 = vmatpush1.msra.mxu0 0.0
      %3120 = vmatprep.subr.mxu0 0.0
      %3121 = vmatpush1.msra.mxu0 0.0
      %3122 = vmatprep.subr.mxu0 0.0
      %3123 = vmatpush1.msra.mxu0 0.0
      %3124 = vmatprep.subr.mxu0 0.0
      %3125 = vmatpush1.msra.mxu0 0.0
      %3126 = vmatprep.subr.mxu0 0.0
      %3127 = vmatpush1.msra.mxu0 0.0
      %3128 = vmatprep.subr.mxu0 0.0
      %3129 = vmatpush1.msra.mxu0 0.0
      %3130 = vmatprep.subr.mxu0 0.0
      %3131 = vmatpush1.msra.mxu0 0.0
      %3132 = vmatprep.subr.mxu0 0.0
      %3133 = vmatpush1.msra.mxu0 0.0
      %3134 = vmatprep.subr.mxu0 0.0
      %3135 = vmatpush1.msra.mxu0 0.0
      %3136 = vmatprep.subr.mxu0 0.0
      %3137 = vmatpush1.msra.mxu0 0.0
      %3138 = vmatprep.subr.mxu0 0.0
      %3139 = vmatpush1.msra.mxu0 0.0
      %3140 = vmatprep.subr.mxu0 0.0
      %3141 = vmatpush1.msra.mxu0 0.0
      %3142 = vmatprep.subr.mxu0 0.0
      %3143 = vmatpush1.msra.mxu0 0.0
      %3144 = vmatprep.subr.mxu0 0.0
      %3145 = vmatpush1.msra.mxu0 0.0
      %3146 = vmatprep.mubr.f32.mxu0 0.0
      %3147 = vmatmul.mubr.f32.gmra.mrb[0].mxu0 %v3074
      %v3148 = vpop.f32.mrb[0].mxu0
      %v3149 = vadd.f32 %v704, %v3148
      %v3150 = vpop.f32.mrb[0].mxu0
      %3151 = vmatprep.mubr.f32.mxu0 0.0
      %3152 = vmatmul.mubr.f32.gmra.mrb[0].mxu0 %v3077
      %v3153 = vpop.f32.mrb[0].mxu0
      %v3154 = vadd.f32 %v704, %v3153
      %v3155 = vpop.f32.mrb[0].mxu0
      %3156 = vmatprep.mubr.f32.mxu0 0.0
      %3157 = vmatmul.mubr.f32.gmra.mrb[0].mxu0 %v3080
      %v3158 = vpop.f32.mrb[0].mxu0
      %v3159 = vadd.f32 %v704, %v3158
      %v3160 = vpop.f32.mrb[0].mxu0
      %3161 = vdwg.mxu0
      %v3162 = vmax.f32 %v3149, 0.0
      %v3163 = vmax.f32 %v3154, 0.0
      %v3164 = vmax.f32 %v3159, 0.0
      %v3168 = vrot.slane %v3162, 7
      %v3169 = vrot.slane %v3163, 7
      %v3170 = vsel %vm558, %v3168, %v3169
      %v3171 = vrot.slane %v3164, 7
      %v3172 = vsel %vm558, %v3169, %v3171
      %v3176 = vsel %vm558, 0.0, %v3168
      %v3177 = vsel %vm1026, %v3172, 0.0
      %v3178 = vmul.f32 %v3176, %v3018
      %v3179 = vmul.f32 %v3170, %v3019
      %v3180 = vmul.f32 %v3177, %v3020
      %v3181 = vmul.f32 %v3176, %v3030
      %v3182 = vmul.f32 %v3170, %v3032
      %v3183 = vmul.f32 %v3177, %v3034
      %3184 = vrot.lane.b32.xlu0 %v3162, 32
      %v3185 = vpop.permute.xlu0 %3184
      %3186 = vrot.lane.b32.xlu0 %v3163, 32
      %v3187 = vpop.permute.xlu0 %3186
      %3188 = vrot.lane.b32.xlu0 %v3164, 32
      %v3189 = vpop.permute.xlu0 %3188
      %v3196 = vrot.slane %v3181, 2
      %v3197 = vrot.slane %v3182, 2
      %v3198 = vsel %vm400, %v3196, %v3197
      %v3199 = vrot.slane %v3183, 2
      %v3200 = vsel %vm400, %v3197, %v3199
      %3201 = vrot.lane.b32.xlu0 %v3198, 64
      %v3202 = vpop.permute.xlu0 %3201
      %3203 = vrot.lane.b32.xlu0 %v3200, 64
      %v3204 = vpop.permute.xlu0 %3203
      %3205 = vrot.lane.b32.xlu0 %v3199, 64
      %v3206 = vpop.permute.xlu0 %3205
      %v3210 = vsel %vm410, %v3178, %v3185
      %v3211 = vsel %vm410, %v3179, %v3187
      %v3212 = vsel %vm410, %v3180, %v3189
      %v3213 = vsel %vm413, %v3210, %v3202
      %v3214 = vsel %vm413, %v3211, %v3204
      %v3215 = vsel %vm413, %v3212, %v3206
      %v3217 = vsel %vm454, %v3213, 0
      %v3220 = vsel %vm454, %v3214, 0
      %v3223 = vsel %vm454, %v3215, 0
      %3225 = vmatprep.subr.mxu0 0.0
      %3226 = vmatpush1.msra.mxu0 %v361
      %3227 = vmatprep.subr.mxu0 0.0
      %3228 = vmatpush1.msra.mxu0 %v362
      %3229 = vmatprep.subr.mxu0 0.0
      %3230 = vmatpush1.msra.mxu0 %v363
      %3231 = vmatprep.subr.mxu0 0.0
      %3232 = vmatpush1.msra.mxu0 %v364
      %3233 = vmatprep.subr.mxu0 0.0
      %3234 = vmatpush1.msra.mxu0 %v365
      %3235 = vmatprep.subr.mxu0 0.0
      %3236 = vmatpush1.msra.mxu0 %v366
      %3237 = vmatprep.subr.mxu0 0.0
      %3238 = vmatpush1.msra.mxu0 %v367
      %3239 = vmatprep.subr.mxu0 0.0
      %3240 = vmatpush1.msra.mxu0 %v368
      %3241 = vmatprep.subr.mxu0 0.0
      %3242 = vmatpush1.msra.mxu0 %v369
      %3243 = vmatprep.subr.mxu0 0.0
      %3244 = vmatpush1.msra.mxu0 %v370
      %3245 = vmatprep.subr.mxu0 0.0
      %3246 = vmatpush1.msra.mxu0 %v371
      %3247 = vmatprep.subr.mxu0 0.0
      %3248 = vmatpush1.msra.mxu0 %v372
      %3249 = vmatprep.subr.mxu0 0.0
      %3250 = vmatpush1.msra.mxu0 0.0
      %3251 = vmatprep.subr.mxu0 0.0
      %3252 = vmatpush1.msra.mxu0 0.0
      %3253 = vmatprep.subr.mxu0 0.0
      %3254 = vmatpush1.msra.mxu0 0.0
      %3255 = vmatprep.subr.mxu0 0.0
      %3256 = vmatpush1.msra.mxu0 0.0
      %3257 = vmatprep.subr.mxu0 0.0
      %3258 = vmatpush1.msra.mxu0 0.0
      %3259 = vmatprep.subr.mxu0 0.0
      %3260 = vmatpush1.msra.mxu0 0.0
      %3261 = vmatprep.subr.mxu0 0.0
      %3262 = vmatpush1.msra.mxu0 0.0
      %3263 = vmatprep.subr.mxu0 0.0
      %3264 = vmatpush1.msra.mxu0 0.0
      %3265 = vmatprep.subr.mxu0 0.0
      %3266 = vmatpush1.msra.mxu0 0.0
      %3267 = vmatprep.subr.mxu0 0.0
      %3268 = vmatpush1.msra.mxu0 0.0
      %3269 = vmatprep.subr.mxu0 0.0
      %3270 = vmatpush1.msra.mxu0 0.0
      %3271 = vmatprep.subr.mxu0 0.0
      %3272 = vmatpush1.msra.mxu0 0.0
      %3273 = vmatprep.subr.mxu0 0.0
      %3274 = vmatpush1.msra.mxu0 0.0
      %3275 = vmatprep.subr.mxu0 0.0
      %3276 = vmatpush1.msra.mxu0 0.0
      %3277 = vmatprep.subr.mxu0 0.0
      %3278 = vmatpush1.msra.mxu0 0.0
      %3279 = vmatprep.subr.mxu0 0.0
      %3280 = vmatpush1.msra.mxu0 0.0
      %3281 = vmatprep.subr.mxu0 0.0
      %3282 = vmatpush1.msra.mxu0 0.0
      %3283 = vmatprep.subr.mxu0 0.0
      %3284 = vmatpush1.msra.mxu0 0.0
      %3285 = vmatprep.subr.mxu0 0.0
      %3286 = vmatpush1.msra.mxu0 0.0
      %3287 = vmatprep.subr.mxu0 0.0
      %3288 = vmatpush1.msra.mxu0 0.0
      %3289 = vmatprep.mubr.f32.mxu0 0.0
      %3290 = vmatmul.mubr.f32.gmra.mrb[0].mxu0 %v3217
      %v3291 = vpop.f32.mrb[0].mxu0
      %v3292 = vadd.f32 %v704, %v3291
      %v3293 = vpop.f32.mrb[0].mxu0
      %3294 = vmatprep.mubr.f32.mxu0 0.0
      %3295 = vmatmul.mubr.f32.gmra.mrb[0].mxu0 %v3220
      %v3296 = vpop.f32.mrb[0].mxu0
      %v3297 = vadd.f32 %v704, %v3296
      %v3298 = vpop.f32.mrb[0].mxu0
      %3299 = vmatprep.mubr.f32.mxu0 0.0
      %3300 = vmatmul.mubr.f32.gmra.mrb[0].mxu0 %v3223
      %v3301 = vpop.f32.mrb[0].mxu0
      %v3302 = vadd.f32 %v704, %v3301
      %v3303 = vpop.f32.mrb[0].mxu0
      %3304 = vdwg.mxu0
      %v3305 = vadd.f32 %v3292, %v2981
      %v3306 = vadd.f32 %v3297, %v2982
      %v3307 = vadd.f32 %v3302, %v2983
      %vm3308 = vcmp.lt.s32.totalorder %v973, 9
      %vm3309 = vmand %vm974, %vm3308
      %v3310 = vsel %vm3309, 1, 0
      %v3311 = vcvt.s32.f32 %v3310
      %v3312 = vadd.s32 %v973, 9
      %vm3313 = vcmp.eq.s32.totalorder %v972, %v3312
      %vm3314 = vmand %vm3313, %vm3308
      %v3315 = vsel %vm3314, 1, 0
      %v3316 = vcvt.s32.f32 %v3315
      %vm3317 = vcmp.lt.s32.totalorder %v984, 9
      %vm3318 = vmand %vm985, %vm3317
      %v3319 = vsel %vm3318, 1, 0
      %v3320 = vcvt.s32.f32 %v3319
      %v3321 = vadd.s32 %v3312, 1
      %vm3322 = vcmp.eq.s32.totalorder %v972, %v3321
      %vm3323 = vmand %vm3322, %vm3317
      %v3324 = vsel %vm3323, 1, 0
      %v3325 = vcvt.s32.f32 %v3324
      %vm3326 = vcmp.lt.s32.totalorder %v995, 9
      %vm3327 = vmand %vm996, %vm3326
      %v3328 = vsel %vm3327, 1, 0
      %v3329 = vcvt.s32.f32 %v3328
      %v3330 = vadd.s32 %v3312, 2
      %vm3331 = vcmp.eq.s32.totalorder %v972, %v3330
      %vm3332 = vmand %vm3331, %vm3326
      %v3333 = vsel %vm3332, 1, 0
      %v3334 = vcvt.s32.f32 %v3333
      %v3336 = vrot.slane %v3316, 4
      %v3339 = vrot.slane %v3325, 4
      %v3342 = vrot.slane %v3334, 4
      %v3344 = vsel %vm1024, %v3311, %v3336
      %v3345 = vsel %vm1024, %v3320, %v3339
      %v3346 = vsel %vm1024, %v3329, %v3342
      %vm3347 = vcmask 146432
      %v3349 = vsel %vm3347, %v3344, 0
      %v3352 = vsel %vm3347, %v3345, 0
      %v3355 = vsel %vm3347, %v3346, 0
      %v3358 = vsel %vm642, %v3307, 0
      %3360 = vmatprep.subr.mxu0 0.0
      %3361 = vmatpush1.msra.mxu0 %v3305
      %3362 = vmatprep.subr.mxu0 0.0
      %3363 = vmatpush1.msra.mxu0 %v3306
      %3364 = vmatprep.subr.mxu0 0.0
      %3365 = vmatpush1.msra.mxu0 %v3358
      %3366 = vmatprep.subr.mxu0 0.0
      %3367 = vmatpush1.msra.mxu0 0.0
      %3368 = vmatprep.subr.mxu0 0.0
      %3369 = vmatpush1.msra.mxu0 0.0
      %3370 = vmatprep.subr.mxu0 0.0
      %3371 = vmatpush1.msra.mxu0 0.0
      %3372 = vmatprep.subr.mxu0 0.0
      %3373 = vmatpush1.msra.mxu0 0.0
      %3374 = vmatprep.subr.mxu0 0.0
      %3375 = vmatpush1.msra.mxu0 0.0
      %3376 = vmatprep.subr.mxu0 0.0
      %3377 = vmatpush1.msra.mxu0 0.0
      %3378 = vmatprep.subr.mxu0 0.0
      %3379 = vmatpush1.msra.mxu0 0.0
      %3380 = vmatprep.subr.mxu0 0.0
      %3381 = vmatpush1.msra.mxu0 0.0
      %3382 = vmatprep.subr.mxu0 0.0
      %3383 = vmatpush1.msra.mxu0 0.0
      %3384 = vmatprep.subr.mxu0 0.0
      %3385 = vmatpush1.msra.mxu0 0.0
      %3386 = vmatprep.subr.mxu0 0.0
      %3387 = vmatpush1.msra.mxu0 0.0
      %3388 = vmatprep.subr.mxu0 0.0
      %3389 = vmatpush1.msra.mxu0 0.0
      %3390 = vmatprep.subr.mxu0 0.0
      %3391 = vmatpush1.msra.mxu0 0.0
      %3392 = vmatprep.subr.mxu0 0.0
      %3393 = vmatpush1.msra.mxu0 0.0
      %3394 = vmatprep.subr.mxu0 0.0
      %3395 = vmatpush1.msra.mxu0 0.0
      %3396 = vmatprep.subr.mxu0 0.0
      %3397 = vmatpush1.msra.mxu0 0.0
      %3398 = vmatprep.subr.mxu0 0.0
      %3399 = vmatpush1.msra.mxu0 0.0
      %3400 = vmatprep.subr.mxu0 0.0
      %3401 = vmatpush1.msra.mxu0 0.0
      %3402 = vmatprep.subr.mxu0 0.0
      %3403 = vmatpush1.msra.mxu0 0.0
      %3404 = vmatprep.subr.mxu0 0.0
      %3405 = vmatpush1.msra.mxu0 0.0
      %3406 = vmatprep.subr.mxu0 0.0
      %3407 = vmatpush1.msra.mxu0 0.0
      %3408 = vmatprep.subr.mxu0 0.0
      %3409 = vmatpush1.msra.mxu0 0.0
      %3410 = vmatprep.subr.mxu0 0.0
      %3411 = vmatpush1.msra.mxu0 0.0
      %3412 = vmatprep.subr.mxu0 0.0
      %3413 = vmatpush1.msra.mxu0 0.0
      %3414 = vmatprep.subr.mxu0 0.0
      %3415 = vmatpush1.msra.mxu0 0.0
      %3416 = vmatprep.subr.mxu0 0.0
      %3417 = vmatpush1.msra.mxu0 0.0
      %3418 = vmatprep.subr.mxu0 0.0
      %3419 = vmatpush1.msra.mxu0 0.0
      %3420 = vmatprep.subr.mxu0 0.0
      %3421 = vmatpush1.msra.mxu0 0.0
      %3422 = vmatprep.subr.mxu0 0.0
      %3423 = vmatpush1.msra.mxu0 0.0
      %3424 = vmatprep.mubr.f32.mxu0 0.0
      %3425 = vmatmul.mubr.f32.gmra.mrb[0].mxu0 %v3349
      %v3426 = vpop.f32.mrb[0].mxu0
      %v3427 = vadd.f32 0.0, %v3426
      %v3428 = vpop.f32.mrb[0].mxu0
      %3429 = vmatprep.mubr.f32.mxu0 0.0
      %3430 = vmatmul.mubr.f32.gmra.mrb[0].mxu0 %v3352
      %v3431 = vpop.f32.mrb[0].mxu0
      %v3432 = vadd.f32 0.0, %v3431
      %v3433 = vpop.f32.mrb[0].mxu0
      %3434 = vmatprep.mubr.f32.mxu0 0.0
      %3435 = vmatmul.mubr.f32.gmra.mrb[0].mxu0 %v3355
      %v3436 = vpop.f32.mrb[0].mxu0
      %v3437 = vadd.f32 0.0, %v3436
      %v3438 = vpop.f32.mrb[0].mxu0
      %3439 = vdwg.mxu0
      %v3440 = vmax.f32 %v3427, %v3432
      %v3441 = vmax.f32 %v3440, %v3437
      %v3442 = vmax.f32 %v3441, 0.0
      %v3444 = vrot.slane %v3442, 7
      %v3446 = vsel %vm558, 0.0, %v3444
      %v3447 = vsel %vm558, %v3444, 0.0
      %vm3448 = vcmp.ne.s32.totalorder %v574, 4
      %v3449 = vsel %vm3448, 1, 0
      %v3450 = vcvt.s32.f32 %v3449
      %v3451 = vmul.f32 %v586, %v3450
      %v3452 = vmul.f32 %v1589, %v1188
      %v3453 = vmul.f32 %v3446, %v3451
      %v3455 = vrot.slane %v3452, 6
      %v3457 = vmul.f32 %v3446, %v3455
      %v3458 = vmul.f32 %v3447, %v3455
      %3459 = vrot.lane.b32.xlu0 %v3442, 32
      %v3460 = vpop.permute.xlu0 %3459
      %v3464 = vrot.slane %v3457, 2
      %v3465 = vrot.slane %v3458, 2
      %v3466 = vsel %vm400, %v3464, %v3465
      %3467 = vrot.lane.b32.xlu0 %v3466, 64
      %v3468 = vpop.permute.xlu0 %3467
      %v3470 = vsel %vm410, %v3453, %v3460
      %v3471 = vsel %vm413, %v3470, %v3468
      %v3473 = vsel %vm454, %v3471, 0
      %3475 = vmatprep.subr.mxu0 0.0
      %3476 = vmatpush1.msra.mxu0 %v361
      %3477 = vmatprep.subr.mxu0 0.0
      %3478 = vmatpush1.msra.mxu0 %v362
      %3479 = vmatprep.subr.mxu0 0.0
      %3480 = vmatpush1.msra.mxu0 %v363
      %3481 = vmatprep.subr.mxu0 0.0
      %3482 = vmatpush1.msra.mxu0 %v364
      %3483 = vmatprep.subr.mxu0 0.0
      %3484 = vmatpush1.msra.mxu0 %v365
      %3485 = vmatprep.subr.mxu0 0.0
      %3486 = vmatpush1.msra.mxu0 %v366
      %3487 = vmatprep.subr.mxu0 0.0
      %3488 = vmatpush1.msra.mxu0 %v367
      %3489 = vmatprep.subr.mxu0 0.0
      %3490 = vmatpush1.msra.mxu0 %v368
      %3491 = vmatprep.subr.mxu0 0.0
      %3492 = vmatpush1.msra.mxu0 %v369
      %3493 = vmatprep.subr.mxu0 0.0
      %3494 = vmatpush1.msra.mxu0 %v370
      %3495 = vmatprep.subr.mxu0 0.0
      %3496 = vmatpush1.msra.mxu0 %v371
      %3497 = vmatprep.subr.mxu0 0.0
      %3498 = vmatpush1.msra.mxu0 %v372
      %3499 = vmatprep.subr.mxu0 0.0
      %3500 = vmatpush1.msra.mxu0 0.0
      %3501 = vmatprep.subr.mxu0 0.0
      %3502 = vmatpush1.msra.mxu0 0.0
      %3503 = vmatprep.subr.mxu0 0.0
      %3504 = vmatpush1.msra.mxu0 0.0
      %3505 = vmatprep.subr.mxu0 0.0
      %3506 = vmatpush1.msra.mxu0 0.0
      %3507 = vmatprep.subr.mxu0 0.0
      %3508 = vmatpush1.msra.mxu0 0.0
      %3509 = vmatprep.subr.mxu0 0.0
      %3510 = vmatpush1.msra.mxu0 0.0
      %3511 = vmatprep.subr.mxu0 0.0
      %3512 = vmatpush1.msra.mxu0 0.0
      %3513 = vmatprep.subr.mxu0 0.0
      %3514 = vmatpush1.msra.mxu0 0.0
      %3515 = vmatprep.subr.mxu0 0.0
      %3516 = vmatpush1.msra.mxu0 0.0
      %3517 = vmatprep.subr.mxu0 0.0
      %3518 = vmatpush1.msra.mxu0 0.0
      %3519 = vmatprep.subr.mxu0 0.0
      %3520 = vmatpush1.msra.mxu0 0.0
      %3521 = vmatprep.subr.mxu0 0.0
      %3522 = vmatpush1.msra.mxu0 0.0
      %3523 = vmatprep.subr.mxu0 0.0
      %3524 = vmatpush1.msra.mxu0 0.0
      %3525 = vmatprep.subr.mxu0 0.0
      %3526 = vmatpush1.msra.mxu0 0.0
      %3527 = vmatprep.subr.mxu0 0.0
      %3528 = vmatpush1.msra.mxu0 0.0
      %3529 = vmatprep.subr.mxu0 0.0
      %3530 = vmatpush1.msra.mxu0 0.0
      %3531 = vmatprep.subr.mxu0 0.0
      %3532 = vmatpush1.msra.mxu0 0.0
      %3533 = vmatprep.subr.mxu0 0.0
      %3534 = vmatpush1.msra.mxu0 0.0
      %3535 = vmatprep.subr.mxu0 0.0
      %3536 = vmatpush1.msra.mxu0 0.0
      %3537 = vmatprep.subr.mxu0 0.0
      %3538 = vmatpush1.msra.mxu0 0.0
      %3539 = vmatprep.mubr.f32.mxu0 0.0
      %3540 = vmatmul.mubr.f32.gmra.mrb[0].mxu0 %v3473
      %v3541 = vpop.f32.mrb[0].mxu0
      %v3542 = vadd.f32 %v704, %v3541
      %v3543 = vpop.f32.mrb[0].mxu0
      %3544 = vdwg.mxu0
      %v3545 = vmax.f32 %v3542, 0.0
      %v3547 = vrot.slane %v3545, 7
      %v3549 = vsel %vm558, 0.0, %v3547
      %v3550 = vsel %vm558, %v3547, 0.0
      %v3551 = vmul.f32 %v3549, %v3451
      %v3552 = vmul.f32 %v3549, %v3455
      %v3553 = vmul.f32 %v3550, %v3455
      %3554 = vrot.lane.b32.xlu0 %v3545, 32
      %v3555 = vpop.permute.xlu0 %3554
      %v3559 = vrot.slane %v3552, 2
      %v3560 = vrot.slane %v3553, 2
      %v3561 = vsel %vm400, %v3559, %v3560
      %3562 = vrot.lane.b32.xlu0 %v3561, 64
      %v3563 = vpop.permute.xlu0 %3562
      %v3565 = vsel %vm410, %v3551, %v3555
      %v3566 = vsel %vm413, %v3565, %v3563
      %v3568 = vsel %vm454, %v3566, 0
      %3570 = vmatprep.subr.mxu0 0.0
      %3571 = vmatpush1.msra.mxu0 %v361
      %3572 = vmatprep.subr.mxu0 0.0
      %3573 = vmatpush1.msra.mxu0 %v362
      %3574 = vmatprep.subr.mxu0 0.0
      %3575 = vmatpush1.msra.mxu0 %v363
      %3576 = vmatprep.subr.mxu0 0.0
      %3577 = vmatpush1.msra.mxu0 %v364
      %3578 = vmatprep.subr.mxu0 0.0
      %3579 = vmatpush1.msra.mxu0 %v365
      %3580 = vmatprep.subr.mxu0 0.0
      %3581 = vmatpush1.msra.mxu0 %v366
      %3582 = vmatprep.subr.mxu0 0.0
      %3583 = vmatpush1.msra.mxu0 %v367
      %3584 = vmatprep.subr.mxu0 0.0
      %3585 = vmatpush1.msra.mxu0 %v368
      %3586 = vmatprep.subr.mxu0 0.0
      %3587 = vmatpush1.msra.mxu0 %v369
      %3588 = vmatprep.subr.mxu0 0.0
      %3589 = vmatpush1.msra.mxu0 %v370
      %3590 = vmatprep.subr.mxu0 0.0
      %3591 = vmatpush1.msra.mxu0 %v371
      %3592 = vmatprep.subr.mxu0 0.0
      %3593 = vmatpush1.msra.mxu0 %v372
      %3594 = vmatprep.subr.mxu0 0.0
      %3595 = vmatpush1.msra.mxu0 0.0
      %3596 = vmatprep.subr.mxu0 0.0
      %3597 = vmatpush1.msra.mxu0 0.0
      %3598 = vmatprep.subr.mxu0 0.0
      %3599 = vmatpush1.msra.mxu0 0.0
      %3600 = vmatprep.subr.mxu0 0.0
      %3601 = vmatpush1.msra.mxu0 0.0
      %3602 = vmatprep.subr.mxu0 0.0
      %3603 = vmatpush1.msra.mxu0 0.0
      %3604 = vmatprep.subr.mxu0 0.0
      %3605 = vmatpush1.msra.mxu0 0.0
      %3606 = vmatprep.subr.mxu0 0.0
      %3607 = vmatpush1.msra.mxu0 0.0
      %3608 = vmatprep.subr.mxu0 0.0
      %3609 = vmatpush1.msra.mxu0 0.0
      %3610 = vmatprep.subr.mxu0 0.0
      %3611 = vmatpush1.msra.mxu0 0.0
      %3612 = vmatprep.subr.mxu0 0.0
      %3613 = vmatpush1.msra.mxu0 0.0
      %3614 = vmatprep.subr.mxu0 0.0
      %3615 = vmatpush1.msra.mxu0 0.0
      %3616 = vmatprep.subr.mxu0 0.0
      %3617 = vmatpush1.msra.mxu0 0.0
      %3618 = vmatprep.subr.mxu0 0.0
      %3619 = vmatpush1.msra.mxu0 0.0
      %3620 = vmatprep.subr.mxu0 0.0
      %3621 = vmatpush1.msra.mxu0 0.0
      %3622 = vmatprep.subr.mxu0 0.0
      %3623 = vmatpush1.msra.mxu0 0.0
      %3624 = vmatprep.subr.mxu0 0.0
      %3625 = vmatpush1.msra.mxu0 0.0
      %3626 = vmatprep.subr.mxu0 0.0
      %3627 = vmatpush1.msra.mxu0 0.0
      %3628 = vmatprep.subr.mxu0 0.0
      %3629 = vmatpush1.msra.mxu0 0.0
      %3630 = vmatprep.subr.mxu0 0.0
      %3631 = vmatpush1.msra.mxu0 0.0
      %3632 = vmatprep.subr.mxu0 0.0
      %3633 = vmatpush1.msra.mxu0 0.0
      %3634 = vmatprep.mubr.f32.mxu0 0.0
      %3635 = vmatmul.mubr.f32.gmra.mrb[0].mxu0 %v3568
      %v3636 = vpop.f32.mrb[0].mxu0
      %v3637 = vadd.f32 %v704, %v3636
      %v3638 = vpop.f32.mrb[0].mxu0
      %3639 = vdwg.mxu0
      %v3640 = vadd.f32 %v3637, %v3441
      %vm3641 = vcmp.lt.s32.totalorder %v973, 4
      %vm3642 = vmand %vm974, %vm3641
      %v3643 = vsel %vm3642, 1, 0
      %v3644 = vcvt.s32.f32 %v3643
      %v3645 = vadd.s32 %v973, 4
      %vm3646 = vcmp.eq.s32.totalorder %v972, %v3645
      %vm3647 = vmand %vm3646, %vm3641
      %v3648 = vsel %vm3647, 1, 0
      %v3649 = vcvt.s32.f32 %v3648
      %vm3650 = vcmp.lt.s32.totalorder %v984, 4
      %vm3651 = vmand %vm985, %vm3650
      %v3652 = vsel %vm3651, 1, 0
      %v3653 = vcvt.s32.f32 %v3652
      %v3654 = vadd.s32 %v3645, 1
      %vm3655 = vcmp.eq.s32.totalorder %v972, %v3654
      %vm3656 = vmand %vm3655, %vm3650
      %v3657 = vsel %vm3656, 1, 0
      %v3658 = vcvt.s32.f32 %v3657
      %vm3659 = vcmp.lt.s32.totalorder %v995, 4
      %vm3660 = vmand %vm996, %vm3659
      %v3661 = vsel %vm3660, 1, 0
      %v3662 = vcvt.s32.f32 %v3661
      %v3663 = vadd.s32 %v3645, 2
      %vm3664 = vcmp.eq.s32.totalorder %v972, %v3663
      %vm3665 = vmand %vm3664, %vm3659
      %v3666 = vsel %vm3665, 1, 0
      %v3667 = vcvt.s32.f32 %v3666
      %v3669 = vrot.slane %v3649, 6
      %v3672 = vrot.slane %v3653, 4
      %v3675 = vrot.slane %v3658, 2
      %v3678 = vrot.slane %v3667, 6
      %v3680 = vsel %vm642, %v3644, %v3669
      %v3681 = vsel %vm1024, %v3680, %v3672
      %v3682 = vsel %vm400, %v3681, %v3675
      %v3683 = vsel %vm642, %v3662, %v3678
      %vm3684 = vcmask 64512
      %v3686 = vsel %vm3684, %v3682, 0
      %v3689 = vsel %vm3684, %v3683, 0
      %3691 = vmatprep.subr.mxu0 0.0
      %3692 = vmatpush1.msra.mxu0 %v3640
      %3693 = vmatprep.subr.mxu0 0.0
      %3694 = vmatpush1.msra.mxu0 0.0
      %3695 = vmatprep.subr.mxu0 0.0
      %3696 = vmatpush1.msra.mxu0 0.0
      %3697 = vmatprep.subr.mxu0 0.0
      %3698 = vmatpush1.msra.mxu0 0.0
      %3699 = vmatprep.subr.mxu0 0.0
      %3700 = vmatpush1.msra.mxu0 0.0
      %3701 = vmatprep.subr.mxu0 0.0
      %3702 = vmatpush1.msra.mxu0 0.0
      %3703 = vmatprep.subr.mxu0 0.0
      %3704 = vmatpush1.msra.mxu0 0.0
      %3705 = vmatprep.subr.mxu0 0.0
      %3706 = vmatpush1.msra.mxu0 0.0
      %3707 = vmatprep.subr.mxu0 0.0
      %3708 = vmatpush1.msra.mxu0 0.0
      %3709 = vmatprep.subr.mxu0 0.0
      %3710 = vmatpush1.msra.mxu0 0.0
      %3711 = vmatprep.subr.mxu0 0.0
      %3712 = vmatpush1.msra.mxu0 0.0
      %3713 = vmatprep.subr.mxu0 0.0
      %3714 = vmatpush1.msra.mxu0 0.0
      %3715 = vmatprep.subr.mxu0 0.0
      %3716 = vmatpush1.msra.mxu0 0.0
      %3717 = vmatprep.subr.mxu0 0.0
      %3718 = vmatpush1.msra.mxu0 0.0
      %3719 = vmatprep.subr.mxu0 0.0
      %3720 = vmatpush1.msra.mxu0 0.0
      %3721 = vmatprep.subr.mxu0 0.0
      %3722 = vmatpush1.msra.mxu0 0.0
      %3723 = vmatprep.subr.mxu0 0.0
      %3724 = vmatpush1.msra.mxu0 0.0
      %3725 = vmatprep.subr.mxu0 0.0
      %3726 = vmatpush1.msra.mxu0 0.0
      %3727 = vmatprep.subr.mxu0 0.0
      %3728 = vmatpush1.msra.mxu0 0.0
      %3729 = vmatprep.subr.mxu0 0.0
      %3730 = vmatpush1.msra.mxu0 0.0
      %3731 = vmatprep.subr.mxu0 0.0
      %3732 = vmatpush1.msra.mxu0 0.0
      %3733 = vmatprep.subr.mxu0 0.0
      %3734 = vmatpush1.msra.mxu0 0.0
      %3735 = vmatprep.subr.mxu0 0.0
      %3736 = vmatpush1.msra.mxu0 0.0
      %3737 = vmatprep.subr.mxu0 0.0
      %3738 = vmatpush1.msra.mxu0 0.0
      %3739 = vmatprep.subr.mxu0 0.0
      %3740 = vmatpush1.msra.mxu0 0.0
      %3741 = vmatprep.subr.mxu0 0.0
      %3742 = vmatpush1.msra.mxu0 0.0
      %3743 = vmatprep.subr.mxu0 0.0
      %3744 = vmatpush1.msra.mxu0 0.0
      %3745 = vmatprep.subr.mxu0 0.0
      %3746 = vmatpush1.msra.mxu0 0.0
      %3747 = vmatprep.subr.mxu0 0.0
      %3748 = vmatpush1.msra.mxu0 0.0
      %3749 = vmatprep.subr.mxu0 0.0
      %3750 = vmatpush1.msra.mxu0 0.0
      %3751 = vmatprep.subr.mxu0 0.0
      %3752 = vmatpush1.msra.mxu0 0.0
      %3753 = vmatprep.subr.mxu0 0.0
      %3754 = vmatpush1.msra.mxu0 0.0
      %3755 = vmatprep.mubr.f32.mxu0 0.0
      %3756 = vmatmul.mubr.f32.gmra.mrb[0].mxu0 %v3686
      %v3757 = vpop.f32.mrb[0].mxu0
      %v3758 = vadd.f32 0.0, %v3757
      %v3759 = vpop.f32.mrb[0].mxu0
      %3760 = vmatprep.mubr.f32.mxu0 0.0
      %3761 = vmatmul.mubr.f32.gmra.mrb[0].mxu0 %v3689
      %v3762 = vpop.f32.mrb[0].mxu0
      %v3763 = vadd.f32 0.0, %v3762
      %v3764 = vpop.f32.mrb[0].mxu0
      %3765 = vdwg.mxu0
      %v3767 = vrot.slane %v3758, 4
      %v3769 = vmax.f32 %v3758, %v3767
      %v3770 = vmax.f32 %v3769, %v3763
      %v3771 = vmax.f32 %v3770, 0.0
      %v3773 = vrot.slane %v3771, 7
      %v3775 = vsel %vm558, 0.0, %v3773
      %v3776 = vsel %vm571, %v3775, 0.0
      %vm3777 = vcmp.ne.s32.totalorder %v574, 1
      %v3778 = vsel %vm3777, 1, 0
      %v3779 = vcvt.s32.f32 %v3778
      %v3780 = vmul.f32 %v586, %v1586
      %v3781 = vmul.f32 %v3779, %v1589
      %v3782 = vmul.f32 %v3776, %v3780
      %v3784 = vrot.slane %v3781, 6
      %v3786 = vmul.f32 %v3776, %v3784
      %3787 = vrot.lane.b32.xlu0 %v3771, 32
      %v3788 = vpop.permute.xlu0 %3787
      %v3791 = vrot.slane %v3786, 2
      %3792 = vrot.lane.b32.xlu0 %v3791, 64
      %v3793 = vpop.permute.xlu0 %3792
      %v3795 = vsel %vm410, %v3782, %v3788
      %v3796 = vsel %vm413, %v3795, %v3793
      %v3798 = vsel %vm454, %v3796, 0
      %3800 = vmatprep.subr.mxu0 0.0
      %3801 = vmatpush1.msra.mxu0 %v361
      %3802 = vmatprep.subr.mxu0 0.0
      %3803 = vmatpush1.msra.mxu0 %v362
      %3804 = vmatprep.subr.mxu0 0.0
      %3805 = vmatpush1.msra.mxu0 %v363
      %3806 = vmatprep.subr.mxu0 0.0
      %3807 = vmatpush1.msra.mxu0 %v364
      %3808 = vmatprep.subr.mxu0 0.0
      %3809 = vmatpush1.msra.mxu0 %v365
      %3810 = vmatprep.subr.mxu0 0.0
      %3811 = vmatpush1.msra.mxu0 %v366
      %3812 = vmatprep.subr.mxu0 0.0
      %3813 = vmatpush1.msra.mxu0 %v367
      %3814 = vmatprep.subr.mxu0 0.0
      %3815 = vmatpush1.msra.mxu0 %v368
      %3816 = vmatprep.subr.mxu0 0.0
      %3817 = vmatpush1.msra.mxu0 %v369
      %3818 = vmatprep.subr.mxu0 0.0
      %3819 = vmatpush1.msra.mxu0 %v370
      %3820 = vmatprep.subr.mxu0 0.0
      %3821 = vmatpush1.msra.mxu0 %v371
      %3822 = vmatprep.subr.mxu0 0.0
      %3823 = vmatpush1.msra.mxu0 %v372
      %3824 = vmatprep.subr.mxu0 0.0
      %3825 = vmatpush1.msra.mxu0 0.0
      %3826 = vmatprep.subr.mxu0 0.0
      %3827 = vmatpush1.msra.mxu0 0.0
      %3828 = vmatprep.subr.mxu0 0.0
      %3829 = vmatpush1.msra.mxu0 0.0
      %3830 = vmatprep.subr.mxu0 0.0
      %3831 = vmatpush1.msra.mxu0 0.0
      %3832 = vmatprep.subr.mxu0 0.0
      %3833 = vmatpush1.msra.mxu0 0.0
      %3834 = vmatprep.subr.mxu0 0.0
      %3835 = vmatpush1.msra.mxu0 0.0
      %3836 = vmatprep.subr.mxu0 0.0
      %3837 = vmatpush1.msra.mxu0 0.0
      %3838 = vmatprep.subr.mxu0 0.0
      %3839 = vmatpush1.msra.mxu0 0.0
      %3840 = vmatprep.subr.mxu0 0.0
      %3841 = vmatpush1.msra.mxu0 0.0
      %3842 = vmatprep.subr.mxu0 0.0
      %3843 = vmatpush1.msra.mxu0 0.0
      %3844 = vmatprep.subr.mxu0 0.0
      %3845 = vmatpush1.msra.mxu0 0.0
      %3846 = vmatprep.subr.mxu0 0.0
      %3847 = vmatpush1.msra.mxu0 0.0
      %3848 = vmatprep.subr.mxu0 0.0
      %3849 = vmatpush1.msra.mxu0 0.0
      %3850 = vmatprep.subr.mxu0 0.0
      %3851 = vmatpush1.msra.mxu0 0.0
      %3852 = vmatprep.subr.mxu0 0.0
      %3853 = vmatpush1.msra.mxu0 0.0
      %3854 = vmatprep.subr.mxu0 0.0
      %3855 = vmatpush1.msra.mxu0 0.0
      %3856 = vmatprep.subr.mxu0 0.0
      %3857 = vmatpush1.msra.mxu0 0.0
      %3858 = vmatprep.subr.mxu0 0.0
      %3859 = vmatpush1.msra.mxu0 0.0
      %3860 = vmatprep.subr.mxu0 0.0
      %3861 = vmatpush1.msra.mxu0 0.0
      %3862 = vmatprep.subr.mxu0 0.0
      %3863 = vmatpush1.msra.mxu0 0.0
      %3864 = vmatprep.mubr.f32.mxu0 0.0
      %3865 = vmatmul.mubr.f32.gmra.mrb[0].mxu0 %v3798
      %v3866 = vpop.f32.mrb[0].mxu0
      %v3867 = vadd.f32 %v704, %v3866
      %v3868 = vpop.f32.mrb[0].mxu0
      %3869 = vdwg.mxu0
      %v3870 = vmax.f32 %v3867, 0.0
      %v3872 = vrot.slane %v3870, 7
      %v3874 = vsel %vm558, 0.0, %v3872
      %v3875 = vsel %vm571, %v3874, 0.0
      %v3876 = vmul.f32 %v3875, %v3780
      %v3877 = vmul.f32 %v3875, %v3784
      %3878 = vrot.lane.b32.xlu0 %v3870, 32
      %v3879 = vpop.permute.xlu0 %3878
      %v3882 = vrot.slane %v3877, 2
      %3883 = vrot.lane.b32.xlu0 %v3882, 64
      %v3884 = vpop.permute.xlu0 %3883
      %v3886 = vsel %vm410, %v3876, %v3879
      %v3887 = vsel %vm413, %v3886, %v3884
      %v3889 = vsel %vm454, %v3887, 0
      %3891 = vmatprep.subr.mxu0 0.0
      %3892 = vmatpush1.msra.mxu0 %v361
      %3893 = vmatprep.subr.mxu0 0.0
      %3894 = vmatpush1.msra.mxu0 %v362
      %3895 = vmatprep.subr.mxu0 0.0
      %3896 = vmatpush1.msra.mxu0 %v363
      %3897 = vmatprep.subr.mxu0 0.0
      %3898 = vmatpush1.msra.mxu0 %v364
      %3899 = vmatprep.subr.mxu0 0.0
      %3900 = vmatpush1.msra.mxu0 %v365
      %3901 = vmatprep.subr.mxu0 0.0
      %3902 = vmatpush1.msra.mxu0 %v366
      %3903 = vmatprep.subr.mxu0 0.0
      %3904 = vmatpush1.msra.mxu0 %v367
      %3905 = vmatprep.subr.mxu0 0.0
      %3906 = vmatpush1.msra.mxu0 %v368
      %3907 = vmatprep.subr.mxu0 0.0
      %3908 = vmatpush1.msra.mxu0 %v369
      %3909 = vmatprep.subr.mxu0 0.0
      %3910 = vmatpush1.msra.mxu0 %v370
      %3911 = vmatprep.subr.mxu0 0.0
      %3912 = vmatpush1.msra.mxu0 %v371
      %3913 = vmatprep.subr.mxu0 0.0
      %3914 = vmatpush1.msra.mxu0 %v372
      %3915 = vmatprep.subr.mxu0 0.0
      %3916 = vmatpush1.msra.mxu0 0.0
      %3917 = vmatprep.subr.mxu0 0.0
      %3918 = vmatpush1.msra.mxu0 0.0
      %3919 = vmatprep.subr.mxu0 0.0
      %3920 = vmatpush1.msra.mxu0 0.0
      %3921 = vmatprep.subr.mxu0 0.0
      %3922 = vmatpush1.msra.mxu0 0.0
      %3923 = vmatprep.subr.mxu0 0.0
      %3924 = vmatpush1.msra.mxu0 0.0
      %3925 = vmatprep.subr.mxu0 0.0
      %3926 = vmatpush1.msra.mxu0 0.0
      %3927 = vmatprep.subr.mxu0 0.0
      %3928 = vmatpush1.msra.mxu0 0.0
      %3929 = vmatprep.subr.mxu0 0.0
      %3930 = vmatpush1.msra.mxu0 0.0
      %3931 = vmatprep.subr.mxu0 0.0
      %3932 = vmatpush1.msra.mxu0 0.0
      %3933 = vmatprep.subr.mxu0 0.0
      %3934 = vmatpush1.msra.mxu0 0.0
      %3935 = vmatprep.subr.mxu0 0.0
      %3936 = vmatpush1.msra.mxu0 0.0
      %3937 = vmatprep.subr.mxu0 0.0
      %3938 = vmatpush1.msra.mxu0 0.0
      %3939 = vmatprep.subr.mxu0 0.0
      %3940 = vmatpush1.msra.mxu0 0.0
      %3941 = vmatprep.subr.mxu0 0.0
      %3942 = vmatpush1.msra.mxu0 0.0
      %3943 = vmatprep.subr.mxu0 0.0
      %3944 = vmatpush1.msra.mxu0 0.0
      %3945 = vmatprep.subr.mxu0 0.0
      %3946 = vmatpush1.msra.mxu0 0.0
      %3947 = vmatprep.subr.mxu0 0.0
      %3948 = vmatpush1.msra.mxu0 0.0
      %3949 = vmatprep.subr.mxu0 0.0
      %3950 = vmatpush1.msra.mxu0 0.0
      %3951 = vmatprep.subr.mxu0 0.0
      %3952 = vmatpush1.msra.mxu0 0.0
      %3953 = vmatprep.subr.mxu0 0.0
      %3954 = vmatpush1.msra.mxu0 0.0
      %3955 = vmatprep.mubr.f32.mxu0 0.0
      %3956 = vmatmul.mubr.f32.gmra.mrb[0].mxu0 %v3889
      %v3957 = vpop.f32.mrb[0].mxu0
      %v3958 = vadd.f32 %v704, %v3957
      %v3959 = vpop.f32.mrb[0].mxu0
      %3960 = vdwg.mxu0
      %v3961 = vadd.f32 %v3958, %v3770
      %vm3962 = vcmp.lt.s32.totalorder %v973, 2
      %vm3963 = vmand %vm974, %vm3962
      %v3964 = vsel %vm3963, 1, 0
      %v3965 = vcvt.s32.f32 %v3964
      %vm3966 = vmand %vm996, %vm3962
      %v3967 = vsel %vm3966, 1, 0
      %v3968 = vcvt.s32.f32 %v3967
      %vm3969 = vcmp.lt.s32.totalorder %v984, 2
      %vm3970 = vmand %vm985, %vm3969
      %v3971 = vsel %vm3970, 1, 0
      %v3972 = vcvt.s32.f32 %v3971
      %v3973 = vadd.s32 %v995, 1
      %vm3974 = vcmp.eq.s32.totalorder %v972, %v3973
      %vm3975 = vmand %vm3974, %vm3969
      %v3976 = vsel %vm3975, 1, 0
      %v3977 = vcvt.s32.f32 %v3976
      %vm3978 = vcmp.lt.s32.totalorder %v995, 2
      %vm3979 = vmand %vm996, %vm3978
      %v3980 = vsel %vm3979, 1, 0
      %v3981 = vcvt.s32.f32 %v3980
      %v3982 = vadd.s32 %v995, 2
      %vm3983 = vcmp.eq.s32.totalorder %v972, %v3982
      %vm3984 = vmand %vm3983, %vm3978
      %v3985 = vsel %vm3984, 1, 0
      %v3986 = vcvt.s32.f32 %v3985
      %v3988 = vrot.slane %v3968, 7
      %v3991 = vrot.slane %v3972, 6
      %v3994 = vrot.slane %v3977, 5
      %v3997 = vrot.slane %v3981, 4
      %v4000 = vrot.slane %v3986, 3
      %v4002 = vsel %vm558, %v3965, %v3988
      %v4003 = vsel %vm642, %v4002, %v3991
      %v4004 = vsel %vm1026, %v4003, %v3994
      %v4005 = vsel %vm1024, %v4004, %v3997
      %v4006 = vsel %vm571, %v4005, %v4000
      %vm4007 = vcmask 31744
      %v4009 = vsel %vm4007, %v4006, 0
      %v4012 = vsel %vm1024, %v3961, 0
      %4014 = vmatprep.subr.mxu0 0.0
      %4015 = vmatpush1.msra.mxu0 %v4012
      %4016 = vmatprep.subr.mxu0 0.0
      %4017 = vmatpush1.msra.mxu0 0.0
      %4018 = vmatprep.subr.mxu0 0.0
      %4019 = vmatpush1.msra.mxu0 0.0
      %4020 = vmatprep.subr.mxu0 0.0
      %4021 = vmatpush1.msra.mxu0 0.0
      %4022 = vmatprep.subr.mxu0 0.0
      %4023 = vmatpush1.msra.mxu0 0.0
      %4024 = vmatprep.subr.mxu0 0.0
      %4025 = vmatpush1.msra.mxu0 0.0
      %4026 = vmatprep.subr.mxu0 0.0
      %4027 = vmatpush1.msra.mxu0 0.0
      %4028 = vmatprep.subr.mxu0 0.0
      %4029 = vmatpush1.msra.mxu0 0.0
      %4030 = vmatprep.subr.mxu0 0.0
      %4031 = vmatpush1.msra.mxu0 0.0
      %4032 = vmatprep.subr.mxu0 0.0
      %4033 = vmatpush1.msra.mxu0 0.0
      %4034 = vmatprep.subr.mxu0 0.0
      %4035 = vmatpush1.msra.mxu0 0.0
      %4036 = vmatprep.subr.mxu0 0.0
      %4037 = vmatpush1.msra.mxu0 0.0
      %4038 = vmatprep.subr.mxu0 0.0
      %4039 = vmatpush1.msra.mxu0 0.0
      %4040 = vmatprep.subr.mxu0 0.0
      %4041 = vmatpush1.msra.mxu0 0.0
      %4042 = vmatprep.subr.mxu0 0.0
      %4043 = vmatpush1.msra.mxu0 0.0
      %4044 = vmatprep.subr.mxu0 0.0
      %4045 = vmatpush1.msra.mxu0 0.0
      %4046 = vmatprep.subr.mxu0 0.0
      %4047 = vmatpush1.msra.mxu0 0.0
      %4048 = vmatprep.subr.mxu0 0.0
      %4049 = vmatpush1.msra.mxu0 0.0
      %4050 = vmatprep.subr.mxu0 0.0
      %4051 = vmatpush1.msra.mxu0 0.0
      %4052 = vmatprep.subr.mxu0 0.0
      %4053 = vmatpush1.msra.mxu0 0.0
      %4054 = vmatprep.subr.mxu0 0.0
      %4055 = vmatpush1.msra.mxu0 0.0
      %4056 = vmatprep.subr.mxu0 0.0
      %4057 = vmatpush1.msra.mxu0 0.0
      %4058 = vmatprep.subr.mxu0 0.0
      %4059 = vmatpush1.msra.mxu0 0.0
      %4060 = vmatprep.subr.mxu0 0.0
      %4061 = vmatpush1.msra.mxu0 0.0
      %4062 = vmatprep.subr.mxu0 0.0
      %4063 = vmatpush1.msra.mxu0 0.0
      %4064 = vmatprep.subr.mxu0 0.0
      %4065 = vmatpush1.msra.mxu0 0.0
      %4066 = vmatprep.subr.mxu0 0.0
      %4067 = vmatpush1.msra.mxu0 0.0
      %4068 = vmatprep.subr.mxu0 0.0
      %4069 = vmatpush1.msra.mxu0 0.0
      %4070 = vmatprep.subr.mxu0 0.0
      %4071 = vmatpush1.msra.mxu0 0.0
      %4072 = vmatprep.subr.mxu0 0.0
      %4073 = vmatpush1.msra.mxu0 0.0
      %4074 = vmatprep.subr.mxu0 0.0
      %4075 = vmatpush1.msra.mxu0 0.0
      %4076 = vmatprep.subr.mxu0 0.0
      %4077 = vmatpush1.msra.mxu0 0.0
      %4078 = vmatprep.mubr.f32.mxu0 0.0
      %4079 = vmatmul.mubr.f32.gmra.mrb[0].mxu0 %v4009
      %v4080 = vpop.f32.mrb[0].mxu0
      %v4081 = vadd.f32 0.0, %v4080
      %v4082 = vpop.f32.mrb[0].mxu0
      %4083 = vdwg.mxu0
      %v4085 = vrot.slane %v4081, 2
      %v4087 = vmax.f32 %v4081, %v4085
      %v4088 = vrot.slane %v4081, 4
      %v4090 = vmax.f32 %v4087, %v4088
      %v4091 = vmax.f32 %v4090, 0.0
      %v4093 = vsel %vm410, %v4091, 0
      %4095 = vmatprep.subr.mxu0 0.0
      %4096 = vmatpush1.msra.mxu0 %v365
      %4097 = vmatprep.subr.mxu0 0.0
      %4098 = vmatpush1.msra.mxu0 %v366
      %4099 = vmatprep.subr.mxu0 0.0
      %4100 = vmatpush1.msra.mxu0 %v367
      %4101 = vmatprep.subr.mxu0 0.0
      %4102 = vmatpush1.msra.mxu0 %v368
      %4103 = vmatprep.subr.mxu0 0.0
      %4104 = vmatpush1.msra.mxu0 0.0
      %4105 = vmatprep.subr.mxu0 0.0
      %4106 = vmatpush1.msra.mxu0 0.0
      %4107 = vmatprep.subr.mxu0 0.0
      %4108 = vmatpush1.msra.mxu0 0.0
      %4109 = vmatprep.subr.mxu0 0.0
      %4110 = vmatpush1.msra.mxu0 0.0
      %4111 = vmatprep.subr.mxu0 0.0
      %4112 = vmatpush1.msra.mxu0 0.0
      %4113 = vmatprep.subr.mxu0 0.0
      %4114 = vmatpush1.msra.mxu0 0.0
      %4115 = vmatprep.subr.mxu0 0.0
      %4116 = vmatpush1.msra.mxu0 0.0
      %4117 = vmatprep.subr.mxu0 0.0
      %4118 = vmatpush1.msra.mxu0 0.0
      %4119 = vmatprep.subr.mxu0 0.0
      %4120 = vmatpush1.msra.mxu0 0.0
      %4121 = vmatprep.subr.mxu0 0.0
      %4122 = vmatpush1.msra.mxu0 0.0
      %4123 = vmatprep.subr.mxu0 0.0
      %4124 = vmatpush1.msra.mxu0 0.0
      %4125 = vmatprep.subr.mxu0 0.0
      %4126 = vmatpush1.msra.mxu0 0.0
      %4127 = vmatprep.subr.mxu0 0.0
      %4128 = vmatpush1.msra.mxu0 0.0
      %4129 = vmatprep.subr.mxu0 0.0
      %4130 = vmatpush1.msra.mxu0 0.0
      %4131 = vmatprep.subr.mxu0 0.0
      %4132 = vmatpush1.msra.mxu0 0.0
      %4133 = vmatprep.subr.mxu0 0.0
      %4134 = vmatpush1.msra.mxu0 0.0
      %4135 = vmatprep.subr.mxu0 0.0
      %4136 = vmatpush1.msra.mxu0 0.0
      %4137 = vmatprep.subr.mxu0 0.0
      %4138 = vmatpush1.msra.mxu0 0.0
      %4139 = vmatprep.subr.mxu0 0.0
      %4140 = vmatpush1.msra.mxu0 0.0
      %4141 = vmatprep.subr.mxu0 0.0
      %4142 = vmatpush1.msra.mxu0 0.0
      %4143 = vmatprep.subr.mxu0 0.0
      %4144 = vmatpush1.msra.mxu0 0.0
      %4145 = vmatprep.subr.mxu0 0.0
      %4146 = vmatpush1.msra.mxu0 0.0
      %4147 = vmatprep.subr.mxu0 0.0
      %4148 = vmatpush1.msra.mxu0 0.0
      %4149 = vmatprep.subr.mxu0 0.0
      %4150 = vmatpush1.msra.mxu0 0.0
      %4151 = vmatprep.subr.mxu0 0.0
      %4152 = vmatpush1.msra.mxu0 0.0
      %4153 = vmatprep.subr.mxu0 0.0
      %4154 = vmatpush1.msra.mxu0 0.0
      %4155 = vmatprep.subr.mxu0 0.0
      %4156 = vmatpush1.msra.mxu0 0.0
      %4157 = vmatprep.subr.mxu0 0.0
      %4158 = vmatpush1.msra.mxu0 0.0
      %4159 = vmatprep.mubr.f32.mxu0 0.0
      %4160 = vmatmul.mubr.f32.gmra.mrb[0].mxu0 %v4093
      %v4161 = vpop.f32.mrb[0].mxu0
      %v4162 = vadd.f32 %v704, %v4161
      %v4163 = vpop.f32.mrb[0].mxu0
      %4164 = vdwg.mxu0
      %v4165 = vmax.f32 %v4162, 0.0
      %v4167 = vsel %vm410, %v4165, 0
      %4169 = vmatprep.subr.mxu0 0.0
      %4170 = vmatpush1.msra.mxu0 %v365
      %4171 = vmatprep.subr.mxu0 0.0
      %4172 = vmatpush1.msra.mxu0 %v366
      %4173 = vmatprep.subr.mxu0 0.0
      %4174 = vmatpush1.msra.mxu0 %v367
      %4175 = vmatprep.subr.mxu0 0.0
      %4176 = vmatpush1.msra.mxu0 %v368
      %4177 = vmatprep.subr.mxu0 0.0
      %4178 = vmatpush1.msra.mxu0 0.0
      %4179 = vmatprep.subr.mxu0 0.0
      %4180 = vmatpush1.msra.mxu0 0.0
      %4181 = vmatprep.subr.mxu0 0.0
      %4182 = vmatpush1.msra.mxu0 0.0
      %4183 = vmatprep.subr.mxu0 0.0
      %4184 = vmatpush1.msra.mxu0 0.0
      %4185 = vmatprep.subr.mxu0 0.0
      %4186 = vmatpush1.msra.mxu0 0.0
      %4187 = vmatprep.subr.mxu0 0.0
      %4188 = vmatpush1.msra.mxu0 0.0
      %4189 = vmatprep.subr.mxu0 0.0
      %4190 = vmatpush1.msra.mxu0 0.0
      %4191 = vmatprep.subr.mxu0 0.0
      %4192 = vmatpush1.msra.mxu0 0.0
      %4193 = vmatprep.subr.mxu0 0.0
      %4194 = vmatpush1.msra.mxu0 0.0
      %4195 = vmatprep.subr.mxu0 0.0
      %4196 = vmatpush1.msra.mxu0 0.0
      %4197 = vmatprep.subr.mxu0 0.0
      %4198 = vmatpush1.msra.mxu0 0.0
      %4199 = vmatprep.subr.mxu0 0.0
      %4200 = vmatpush1.msra.mxu0 0.0
      %4201 = vmatprep.subr.mxu0 0.0
      %4202 = vmatpush1.msra.mxu0 0.0
      %4203 = vmatprep.subr.mxu0 0.0
      %4204 = vmatpush1.msra.mxu0 0.0
      %4205 = vmatprep.subr.mxu0 0.0
      %4206 = vmatpush1.msra.mxu0 0.0
      %4207 = vmatprep.subr.mxu0 0.0
      %4208 = vmatpush1.msra.mxu0 0.0
      %4209 = vmatprep.subr.mxu0 0.0
      %4210 = vmatpush1.msra.mxu0 0.0
      %4211 = vmatprep.subr.mxu0 0.0
      %4212 = vmatpush1.msra.mxu0 0.0
      %4213 = vmatprep.subr.mxu0 0.0
      %4214 = vmatpush1.msra.mxu0 0.0
      %4215 = vmatprep.subr.mxu0 0.0
      %4216 = vmatpush1.msra.mxu0 0.0
      %4217 = vmatprep.subr.mxu0 0.0
      %4218 = vmatpush1.msra.mxu0 0.0
      %4219 = vmatprep.subr.mxu0 0.0
      %4220 = vmatpush1.msra.mxu0 0.0
      %4221 = vmatprep.subr.mxu0 0.0
      %4222 = vmatpush1.msra.mxu0 0.0
      %4223 = vmatprep.subr.mxu0 0.0
      %4224 = vmatpush1.msra.mxu0 0.0
      %4225 = vmatprep.subr.mxu0 0.0
      %4226 = vmatpush1.msra.mxu0 0.0
      %4227 = vmatprep.subr.mxu0 0.0
      %4228 = vmatpush1.msra.mxu0 0.0
      %4229 = vmatprep.subr.mxu0 0.0
      %4230 = vmatpush1.msra.mxu0 0.0
      %4231 = vmatprep.subr.mxu0 0.0
      %4232 = vmatpush1.msra.mxu0 0.0
      %4233 = vmatprep.mubr.f32.mxu0 0.0
      %4234 = vmatmul.mubr.f32.gmra.mrb[0].mxu0 %v4167
      %v4235 = vpop.f32.mrb[0].mxu0
      %v4236 = vadd.f32 %v704, %v4235
      %v4237 = vpop.f32.mrb[0].mxu0
      %4238 = vdwg.mxu0
      %v4239 = vadd.f32 %v4236, %v4090
      %4241 = vrot.lane.b32.xlu0 %v4239, 32
      %v4242 = vpop.permute.xlu0 %4241
      %v4244 = vsel %vm410, %v2054, %v4242
      %v4245 = vld [vmem:[%s5] sm:$0xff]
      %v4246 = vld [vmem:[%s5 + $0x8] sm:$0xff]
      %v4247 = vld [vmem:[%s5 + $0x10] sm:$0xff]
      %v4248 = vld [vmem:[%s5 + $0x18] sm:$0xff]
      %v4249 = vld [vmem:[%s5 + $0x20] sm:$0xff]
      %v4250 = vld [vmem:[%s5 + $0x28] sm:$0xff]
      %v4251 = vld [vmem:[%s5 + $0x30] sm:$0xff]
      %v4252 = vld [vmem:[%s5 + $0x38] sm:$0xff]
      %v4253 = vld [vmem:[%s6] sm:$0x1]
      %v4255 = vlaneseq
      %v4256 = vshrl.u32 %v4255, 7
      %v4257 = vsub.s32 0, %v4256
      %v4258 = vrot.slane %v4253, %v4257
      %v4261 = vsel %vm413, %v4244, 0
      %4263 = vmatprep.subr.mxu0 0.0
      %4264 = vmatpush1.msra.mxu0 %v4245
      %4265 = vmatprep.subr.mxu0 0.0
      %4266 = vmatpush1.msra.mxu0 %v4246
      %4267 = vmatprep.subr.mxu0 0.0
      %4268 = vmatpush1.msra.mxu0 %v4247
      %4269 = vmatprep.subr.mxu0 0.0
      %4270 = vmatpush1.msra.mxu0 %v4248
      %4271 = vmatprep.subr.mxu0 0.0
      %4272 = vmatpush1.msra.mxu0 %v4249
      %4273 = vmatprep.subr.mxu0 0.0
      %4274 = vmatpush1.msra.mxu0 %v4250
      %4275 = vmatprep.subr.mxu0 0.0
      %4276 = vmatpush1.msra.mxu0 %v4251
      %4277 = vmatprep.subr.mxu0 0.0
      %4278 = vmatpush1.msra.mxu0 %v4252
      %4279 = vmatprep.subr.mxu0 0.0
      %4280 = vmatpush1.msra.mxu0 0.0
      %4281 = vmatprep.subr.mxu0 0.0
      %4282 = vmatpush1.msra.mxu0 0.0
      %4283 = vmatprep.subr.mxu0 0.0
      %4284 = vmatpush1.msra.mxu0 0.0
      %4285 = vmatprep.subr.mxu0 0.0
      %4286 = vmatpush1.msra.mxu0 0.0
      %4287 = vmatprep.subr.mxu0 0.0
      %4288 = vmatpush1.msra.mxu0 0.0
      %4289 = vmatprep.subr.mxu0 0.0
      %4290 = vmatpush1.msra.mxu0 0.0
      %4291 = vmatprep.subr.mxu0 0.0
      %4292 = vmatpush1.msra.mxu0 0.0
      %4293 = vmatprep.subr.mxu0 0.0
      %4294 = vmatpush1.msra.mxu0 0.0
      %4295 = vmatprep.subr.mxu0 0.0
      %4296 = vmatpush1.msra.mxu0 0.0
      %4297 = vmatprep.subr.mxu0 0.0
      %4298 = vmatpush1.msra.mxu0 0.0
      %4299 = vmatprep.subr.mxu0 0.0
      %4300 = vmatpush1.msra.mxu0 0.0
      %4301 = vmatprep.subr.mxu0 0.0
      %4302 = vmatpush1.msra.mxu0 0.0
      %4303 = vmatprep.subr.mxu0 0.0
      %4304 = vmatpush1.msra.mxu0 0.0
      %4305 = vmatprep.subr.mxu0 0.0
      %4306 = vmatpush1.msra.mxu0 0.0
      %4307 = vmatprep.subr.mxu0 0.0
      %4308 = vmatpush1.msra.mxu0 0.0
      %4309 = vmatprep.subr.mxu0 0.0
      %4310 = vmatpush1.msra.mxu0 0.0
      %4311 = vmatprep.subr.mxu0 0.0
      %4312 = vmatpush1.msra.mxu0 0.0
      %4313 = vmatprep.subr.mxu0 0.0
      %4314 = vmatpush1.msra.mxu0 0.0
      %4315 = vmatprep.subr.mxu0 0.0
      %4316 = vmatpush1.msra.mxu0 0.0
      %4317 = vmatprep.subr.mxu0 0.0
      %4318 = vmatpush1.msra.mxu0 0.0
      %4319 = vmatprep.subr.mxu0 0.0
      %4320 = vmatpush1.msra.mxu0 0.0
      %4321 = vmatprep.subr.mxu0 0.0
      %4322 = vmatpush1.msra.mxu0 0.0
      %4323 = vmatprep.subr.mxu0 0.0
      %4324 = vmatpush1.msra.mxu0 0.0
      %4325 = vmatprep.subr.mxu0 0.0
      %4326 = vmatpush1.msra.mxu0 0.0
      %4327 = vmatprep.mubr.f32.mxu0 0.0
      %4328 = vmatmul.mubr.f32.gmra.mrb[0].mxu0 %v4261
      %v4329 = vpop.f32.mrb[0].mxu0
      %v4330 = vadd.f32 %v4258, %v4329
      %v4331 = vpop.f32.mrb[0].mxu0
      %4332 = vdwg.mxu0
      %v4333 = vmax.f32 %v4330, 0.0
      %v4334 = vld [vmem:[%s7] sm:$0xff]
      %v4335 = vld [vmem:[%s7 + $0x8] sm:$0xff]
      %v4336 = vld [vmem:[%s7 + $0x10] sm:$0xff]
      %v4337 = vld [vmem:[%s7 + $0x18] sm:$0xff]
      %v4338 = vld [vmem:[%s8] sm:$0x1]
      %v4340 = vlaneseq
      %v4341 = vshrl.u32 %v4340, 7
      %v4342 = vsub.s32 0, %v4341
      %v4343 = vrot.slane %v4338, %v4342
      %v4346 = vsel %vm410, %v4333, 0
      %4348 = vmatprep.subr.mxu0 0.0
      %4349 = vmatpush1.msra.mxu0 %v4334
      %4350 = vmatprep.subr.mxu0 0.0
      %4351 = vmatpush1.msra.mxu0 %v4335
      %4352 = vmatprep.subr.mxu0 0.0
      %4353 = vmatpush1.msra.mxu0 %v4336
      %4354 = vmatprep.subr.mxu0 0.0
      %4355 = vmatpush1.msra.mxu0 %v4337
      %4356 = vmatprep.subr.mxu0 0.0
      %4357 = vmatpush1.msra.mxu0 0.0
      %4358 = vmatprep.subr.mxu0 0.0
      %4359 = vmatpush1.msra.mxu0 0.0
      %4360 = vmatprep.subr.mxu0 0.0
      %4361 = vmatpush1.msra.mxu0 0.0
      %4362 = vmatprep.subr.mxu0 0.0
      %4363 = vmatpush1.msra.mxu0 0.0
      %4364 = vmatprep.subr.mxu0 0.0
      %4365 = vmatpush1.msra.mxu0 0.0
      %4366 = vmatprep.subr.mxu0 0.0
      %4367 = vmatpush1.msra.mxu0 0.0
      %4368 = vmatprep.subr.mxu0 0.0
      %4369 = vmatpush1.msra.mxu0 0.0
      %4370 = vmatprep.subr.mxu0 0.0
      %4371 = vmatpush1.msra.mxu0 0.0
      %4372 = vmatprep.subr.mxu0 0.0
      %4373 = vmatpush1.msra.mxu0 0.0
      %4374 = vmatprep.subr.mxu0 0.0
      %4375 = vmatpush1.msra.mxu0 0.0
      %4376 = vmatprep.subr.mxu0 0.0
      %4377 = vmatpush1.msra.mxu0 0.0
      %4378 = vmatprep.subr.mxu0 0.0
      %4379 = vmatpush1.msra.mxu0 0.0
      %4380 = vmatprep.subr.mxu0 0.0
      %4381 = vmatpush1.msra.mxu0 0.0
      %4382 = vmatprep.subr.mxu0 0.0
      %4383 = vmatpush1.msra.mxu0 0.0
      %4384 = vmatprep.subr.mxu0 0.0
      %4385 = vmatpush1.msra.mxu0 0.0
      %4386 = vmatprep.subr.mxu0 0.0
      %4387 = vmatpush1.msra.mxu0 0.0
      %4388 = vmatprep.subr.mxu0 0.0
      %4389 = vmatpush1.msra.mxu0 0.0
      %4390 = vmatprep.subr.mxu0 0.0
      %4391 = vmatpush1.msra.mxu0 0.0
      %4392 = vmatprep.subr.mxu0 0.0
      %4393 = vmatpush1.msra.mxu0 0.0
      %4394 = vmatprep.subr.mxu0 0.0
      %4395 = vmatpush1.msra.mxu0 0.0
      %4396 = vmatprep.subr.mxu0 0.0
      %4397 = vmatpush1.msra.mxu0 0.0
      %4398 = vmatprep.subr.mxu0 0.0
      %4399 = vmatpush1.msra.mxu0 0.0
      %4400 = vmatprep.subr.mxu0 0.0
      %4401 = vmatpush1.msra.mxu0 0.0
      %4402 = vmatprep.subr.mxu0 0.0
      %4403 = vmatpush1.msra.mxu0 0.0
      %4404 = vmatprep.subr.mxu0 0.0
      %4405 = vmatpush1.msra.mxu0 0.0
      %4406 = vmatprep.subr.mxu0 0.0
      %4407 = vmatpush1.msra.mxu0 0.0
      %4408 = vmatprep.subr.mxu0 0.0
      %4409 = vmatpush1.msra.mxu0 0.0
      %4410 = vmatprep.subr.mxu0 0.0
      %4411 = vmatpush1.msra.mxu0 0.0
      %4412 = vmatprep.mubr.f32.mxu0 0.0
      %4413 = vmatmul.mubr.f32.gmra.mrb[0].mxu0 %v4346
      %v4414 = vpop.f32.mrb[0].mxu0
      %v4415 = vadd.f32 %v4343, %v4414
      %v4416 = vpop.f32.mrb[0].mxu0
      %4417 = vdwg.mxu0
      %vm4418 = vcmask 517120
      %4419 = vst.msk [vmem:[%s360] sm:$0x3] %vm4418, %v4415
      %p4420 = scmp.lt.s32.totalorder %s20, 1
      %s4421 = scalar_select %p4420, %s20, 1
      %s4422 = smul.addr %s4421, 2
      %s4423 = scalar_lea.vmem %s9, %s4422
      // Predicated region
      $region57: #{common_model_forward.1} parent=55 // pred_check
        %p4424 = pneg %p237
      $region58: #{common_model_forward.1} parent=55 // pred_check_branch
        %4426 = sbr.rel (%p4424) target = $region60
      $region59: #{common_model_forward.1} parent=55 // pred_region
        _
      $region60: #{common_model_forward.1} parent=55 // pred_fallthru
        _
    $region56: #{common_model_forward.1} parent=5 // pred_fallthru
      _
    %p4427 = scmp.le.s32.totalorder 2, %s15
    // Predicated region
    $region61: #{common_model_forward.1} parent=5 // pred_check
      %p4428 = pneg %p4427
    $region62: #{common_model_forward.1} parent=5 // pred_check_branch
      %4430 = sbr.rel (%p4428) target = $region64
    $region63: #{common_model_forward.1} parent=5 // pred_region
      %s4431 = ssub.s32 %s15, 2
      // Predicated region
      $region65: #{common_model_forward.1} parent=63 // pred_check
        %p4432 = pneg %p243
      $region66: #{common_model_forward.1} parent=63 // pred_check_branch
        %4434 = sbr.rel (%p4432) target = $region68
      $region67: #{common_model_forward.1} parent=63 // pred_region
        %p4435 = scmp.lt.s32.totalorder %s21, 1
        %s4436 = scalar_select %p4435, %s21, 1
        %s4437 = smul.addr %s4436, 2
        %s4438 = scalar_lea.vmem %s9, %s4437
      $region68: #{common_model_forward.1} parent=63 // pred_fallthru
        _
    $region64: #{common_model_forward.1} parent=5 // pred_fallthru
      _
  $region6: #{common_model_forward.1} parent=0 // loop_footer
    %s19 = sadd.s32 1, %s15
  $region7: #{common_model_forward.1} parent=0 // loop_footer_branch
    %14 = sbr.rel target = $region3
  $region8: #{common_model_forward.1} parent=0 // loop_exit
    _

</llo_original>
